<compile_context>
chip_gen: v7x
topology: tpu7x:2x2x1
jax: 0.10.0
libtpu: 0.0.40
codegen_flags: <defaults>
</compile_context>

<pallas_src>
import functools

import jax
import jax.numpy as jnp
from jax.experimental import pallas as pl
from jax.experimental.pallas import tpu as pltpu

HIDDEN = (512, 512, 1024, 512)
PAD_OUT = 128  # lane-dense padded width for the last layer of both networks
# Per-layer weight storage kind (must match pack_params / the kernel order).
LAYER_KINDS = ("bf16", "int8", "int8", "int8", "bf16")


def _make_kernel(layer_kinds):
    """Kernel factory: one grid step = one full MLP (0 = critic, 1 = actor)."""
    n_layers = len(layer_kinds)

    def kernel(x_ref, *refs):
        out_ref = refs[-1]
        h = x_ref[...].astype(jnp.bfloat16)
        idx = 0
        for k, kind in enumerate(layer_kinds):
            if kind == "int8":
                w_ref, s_ref, b_ref = refs[idx], refs[idx + 1], refs[idx + 2]
                idx += 3
                # int8 -> f32 -> bf16 (values exact); scale goes on the f32 acc.
                w = w_ref[...].astype(jnp.float32).astype(jnp.bfloat16)
                acc = jnp.dot(h, w, preferred_element_type=jnp.float32)
                acc = acc * s_ref[...] + b_ref[...]
            else:
                w_ref, b_ref = refs[idx], refs[idx + 1]
                idx += 2
                acc = jnp.dot(h, w_ref[...],
                              preferred_element_type=jnp.float32) + b_ref[...]
            if k < n_layers - 1:
                # ReLU in f32 (v5e VPU has no bf16), cast back for the next MXU op.
                h = jnp.maximum(acc, 0.0).astype(jnp.bfloat16)
            else:
                out_ref[...] = acc.astype(out_ref.dtype)

    return kernel


def init_mlp_params(key, n_features, dims_out):
    """torch.nn.Linear-style init: U(-1/sqrt(fan_in), 1/sqrt(fan_in)) for both
    weight and bias; weights pre-transposed to [in, out], biases [1, out]."""
    params = []
    d_in = n_features
    for d_out in dims_out:
        key, kw, kb = jax.random.split(key, 3)
        bound = 1.0 / (d_in ** 0.5)
        w = jax.random.uniform(kw, (d_in, d_out), jnp.float32, -bound, bound)
        b = jax.random.uniform(kb, (1, d_out), jnp.float32, -bound, bound)
        params.append((w, b))
        d_in = d_out
    return params


def _quantize_per_channel(w):
    """Symmetric int8 quantization with one f32 scale per output channel."""
    amax = jnp.max(jnp.abs(w), axis=0, keepdims=True)            # [1, out]
    scale = jnp.maximum(amax, 1e-8) / 127.0
    wq = jnp.clip(jnp.round(w / scale), -127.0, 127.0).astype(jnp.int8)
    return wq, scale.astype(jnp.float32)


def pack_params(critic_params, actor_params):
    """Stack critic/actor layer-k params on a leading [2,...] axis; pad the
    final layer's out-dim to PAD_OUT lanes; int8+scale for the big hidden
    weights, bf16 for the rest, f32 biases."""
    n_layers = len(critic_params)
    packed = []
    for k in range(n_layers):
        cw, cb = critic_params[k]
        aw, ab = actor_params[k]
        if k == n_layers - 1:
            def pad(a):
                return jnp.pad(a, ((0, 0), (0, PAD_OUT - a.shape[1])))
            cw, cb, aw, ab = pad(cw), pad(cb), pad(aw), pad(ab)
        b = jnp.stack([cb, ab]).astype(jnp.float32)               # [2, 1, out]
        if LAYER_KINDS[k] == "int8":
            cq, cs = _quantize_per_channel(cw)
            aq, a_s = _quantize_per_channel(aw)
            packed.append((jnp.stack([cq, aq]),                   # [2, in, out] int8
                           jnp.stack([cs, a_s]),                  # [2, 1, out]  f32
                           b))
        else:
            packed.append((jnp.stack([cw, aw]).astype(jnp.bfloat16), b))
    return packed


@functools.partial(jax.jit, static_argnames=("n_actions", "core_parallel"))
def a2c_forward(x, params, *, n_actions, core_parallel=False):
    n_rows, n_features = x.shape
    dims = [n_features] + list(HIDDEN) + [PAD_OUT]

    flat_inputs = [x]
    in_specs = [pl.BlockSpec((n_rows, n_features), lambda i: (0, 0))]
    for k, layer in enumerate(params):
        d_in, d_out = dims[k], dims[k + 1]
        if LAYER_KINDS[k] == "int8":
            w, s, b = layer
            flat_inputs += [w, s, b]
            in_specs += [
                pl.BlockSpec((None, d_in, d_out), lambda i: (i, 0, 0)),
                pl.BlockSpec((None, 1, d_out), lambda i: (i, 0, 0)),
                pl.BlockSpec((None, 1, d_out), lambda i: (i, 0, 0)),
            ]
        else:
            w, b = layer
            flat_inputs += [w, b]
            in_specs += [
                pl.BlockSpec((None, d_in, d_out), lambda i: (i, 0, 0)),
                pl.BlockSpec((None, 1, d_out), lambda i: (i, 0, 0)),
            ]

    out_spec = pl.BlockSpec((None, n_rows, PAD_OUT), lambda i: (i, 0, 0))
    out_shape = jax.ShapeDtypeStruct((2, n_rows, PAD_OUT), jnp.float32)

    param_bytes = sum(int(a.size) * a.dtype.itemsize
                      for layer in params for a in layer)
    flops = 2 * 2 * n_rows * sum(dims[k] * dims[k + 1]
                                 for k in range(len(dims) - 1))
    cost = pl.CostEstimate(
        flops=flops, transcendentals=0,
        bytes_accessed=(param_bytes + int(x.size) * x.dtype.itemsize
                        + 2 * n_rows * PAD_OUT * 4))

    # grid point 0 = critic, 1 = actor. On v7x CORE_PARALLEL puts one net per
    # TensorCore (each streams only half the weight bytes); elsewhere the two
    # steps run back-to-back with double-buffered weight DMA.
    semantics = (pltpu.CORE_PARALLEL,) if core_parallel else ("arbitrary",)

    out = pl.pallas_call(
        _make_kernel(LAYER_KINDS),
        out_shape=out_shape,
        grid_spec=pltpu.PrefetchScalarGridSpec(
            num_scalar_prefetch=0,
            grid=(2,),
            in_specs=in_specs,
            out_specs=out_spec,
        ),
        compiler_params=pltpu.CompilerParams(dimension_semantics=semantics),
        cost_estimate=cost,
    )(*flat_inputs)

    state_values = out[0, :, 0:1]             # [n_rows, 1]
    action_logits = out[1, :, :n_actions]     # [n_rows, n_actions]
    return state_values, action_logits


def a2c_forward_ref(x, params, n_actions):
    """Plain-JAX reference mimicking the kernel math (bf16 MXU operands, int8
    weights dequantized on the f32 accumulator)."""
    def mlp(h, net):
        n = len(params)
        for k, layer in enumerate(params):
            if LAYER_KINDS[k] == "int8":
                w, s, b = layer
                acc = jnp.dot(h.astype(jnp.bfloat16),
                              w[net].astype(jnp.bfloat16),
                              preferred_element_type=jnp.float32)
                acc = acc * s[net] + b[net]
            else:
                w, b = layer
                acc = jnp.dot(h.astype(jnp.bfloat16), w[net],
                              preferred_element_type=jnp.float32) + b[net]
            h = jnp.maximum(acc, 0.0) if k < n - 1 else acc
        return h
    values = mlp(x, 0)[:, 0:1]
    logits = mlp(x, 1)[:, :n_actions]
    return values, logits


if __name__ == "__main__":
    # n_envs matches the module; batching more rows (e.g. several env steps,
    # M >= 128) amortizes the fixed weight stream further — shapes kept small here.
    n_envs = 16
    n_features = 32
    n_actions = 8

    key = jax.random.PRNGKey(0)
    k_x, k_c, k_a = jax.random.split(key, 3)

    x = jax.random.normal(k_x, (n_envs, n_features), jnp.float32)
    critic_params = init_mlp_params(k_c, n_features, HIDDEN + (1,))
    actor_params = init_mlp_params(k_a, n_features, HIDDEN + (n_actions,))
    params = pack_params(critic_params, actor_params)

    ref_values, ref_logits = a2c_forward_ref(x, params, n_actions)

    def run(core_parallel):
        v, l = a2c_forward(x, params, n_actions=n_actions,
                           core_parallel=core_parallel)
        jax.block_until_ready((v, l))
        ok_v = bool(jnp.allclose(v, ref_values, rtol=2e-3, atol=2e-3))
        ok_l = bool(jnp.allclose(l, ref_logits, rtol=2e-3, atol=2e-3))
        if not (ok_v and ok_l):
            raise RuntimeError(
                "kernel/reference mismatch: "
                f"{float(jnp.max(jnp.abs(v - ref_values)))}, "
                f"{float(jnp.max(jnp.abs(l - ref_logits)))}")
        return v, l

    try:
        # v7x (2 TCs): one net per TensorCore.
        state_values, action_logits = run(core_parallel=True)
    except Exception:
        # Single-TC chips (v5e/v6e) or if CORE_PARALLEL is rejected.
        state_values, action_logits = run(core_parallel=False)

    assert state_values.shape == (n_envs, 1)
    assert action_logits.shape == (n_envs, n_actions)

    print("KERNEL_OK")
</pallas_src>

<mosaic_0001>
module attributes {stable_mosaic.version = 11 : i64} {
  func.func @kernel(%arg0: i32, %arg1: memref<16x32xf32, #tpu.memory_space<vmem>>, %arg2: memref<1x32x512xbf16, #tpu.memory_space<vmem>>, %arg3: memref<1x1x512xf32, #tpu.memory_space<vmem>>, %arg4: memref<1x512x512xi8, #tpu.memory_space<vmem>>, %arg5: memref<1x1x512xf32, #tpu.memory_space<vmem>>, %arg6: memref<1x1x512xf32, #tpu.memory_space<vmem>>, %arg7: memref<1x512x1024xi8, #tpu.memory_space<vmem>>, %arg8: memref<1x1x1024xf32, #tpu.memory_space<vmem>>, %arg9: memref<1x1x1024xf32, #tpu.memory_space<vmem>>, %arg10: memref<1x1024x512xi8, #tpu.memory_space<vmem>>, %arg11: memref<1x1x512xf32, #tpu.memory_space<vmem>>, %arg12: memref<1x1x512xf32, #tpu.memory_space<vmem>>, %arg13: memref<1x512x128xbf16, #tpu.memory_space<vmem>>, %arg14: memref<1x1x128xf32, #tpu.memory_space<vmem>>, %arg15: memref<1x16x128xf32, #tpu.memory_space<vmem>>) attributes {dimension_semantics = [#tpu.dimension_semantics<core_parallel>], iteration_bounds = array<i64: 2>, scalar_prefetch = 0 : i64, scratch_operands = 0 : i64, tpu.core_type = #tpu.core_type<tc>, window_params = [{pipeline_mode = #tpu.pipeline_mode<synchronous>, transform_indices = @transform_0, window_bounds = array<i64: 16, 32>}, {transform_indices = @transform_1, window_bounds = array<i64: 1, 32, 512>}, {transform_indices = @transform_2, window_bounds = array<i64: 1, 1, 512>}, {transform_indices = @transform_3, window_bounds = array<i64: 1, 512, 512>}, {transform_indices = @transform_4, window_bounds = array<i64: 1, 1, 512>}, {transform_indices = @transform_5, window_bounds = array<i64: 1, 1, 512>}, {transform_indices = @transform_6, window_bounds = array<i64: 1, 512, 1024>}, {transform_indices = @transform_7, window_bounds = array<i64: 1, 1, 1024>}, {transform_indices = @transform_8, window_bounds = array<i64: 1, 1, 1024>}, {transform_indices = @transform_9, window_bounds = array<i64: 1, 1024, 512>}, {transform_indices = @transform_10, window_bounds = array<i64: 1, 1, 512>}, {transform_indices = @transform_11, window_bounds = array<i64: 1, 1, 512>}, {transform_indices = @transform_12, window_bounds = array<i64: 1, 512, 128>}, {transform_indices = @transform_13, window_bounds = array<i64: 1, 1, 128>}, {transform_indices = @transform_14, window_bounds = array<i64: 1, 16, 128>}]} {
    %c0 = arith.constant 0 : index
    %c0_0 = arith.constant 0 : index
    %0 = vector.load %arg1[%c0, %c0_0] : memref<16x32xf32, #tpu.memory_space<vmem>>, vector<16x32xf32>
    %1 = arith.truncf %0 : vector<16x32xf32> to vector<16x32xbf16>
    %c0_1 = arith.constant 0 : index
    %c0_2 = arith.constant 0 : index
    %c0_3 = arith.constant 0 : index
    %2 = vector.load %arg2[%c0_1, %c0_2, %c0_3] : memref<1x32x512xbf16, #tpu.memory_space<vmem>>, vector<1x32x512xbf16>
    %3 = vector.shape_cast %2 : vector<1x32x512xbf16> to vector<32x512xbf16>
    %cst = arith.constant dense<0.000000e+00> : vector<16x512xf32>
    %4 = tpu.matmul %1, %3, %cst {dimension_numbers = #tpu.dot_dimension_numbers<[1], [0], [0], [1], [0, 0, 1, 1], [], []>} : vector<16x32xbf16>, vector<32x512xbf16>, vector<16x512xf32> -> vector<16x512xf32>
    %c0_4 = arith.constant 0 : index
    %c0_5 = arith.constant 0 : index
    %c0_6 = arith.constant 0 : index
    %5 = vector.load %arg3[%c0_4, %c0_5, %c0_6] : memref<1x1x512xf32, #tpu.memory_space<vmem>>, vector<1x1x512xf32>
    %6 = vector.shape_cast %5 : vector<1x1x512xf32> to vector<1x512xf32>
    %7 = vector.broadcast %6 : vector<1x512xf32> to vector<16x512xf32>
    %8 = arith.addf %4, %7 : vector<16x512xf32>
    %cst_7 = arith.constant 0.000000e+00 : f32
    %9 = vector.broadcast %cst_7 : f32 to vector<16x512xf32>
    %10 = arith.maximumf %8, %9 : vector<16x512xf32>
    %11 = arith.truncf %10 : vector<16x512xf32> to vector<16x512xbf16>
    %c0_8 = arith.constant 0 : index
    %c0_9 = arith.constant 0 : index
    %c0_10 = arith.constant 0 : index
    %12 = vector.load %arg4[%c0_8, %c0_9, %c0_10] : memref<1x512x512xi8, #tpu.memory_space<vmem>>, vector<1x512x512xi8>
    %13 = vector.shape_cast %12 : vector<1x512x512xi8> to vector<512x512xi8>
    %14 = arith.sitofp %13 : vector<512x512xi8> to vector<512x512xf32>
    %15 = arith.truncf %14 : vector<512x512xf32> to vector<512x512xbf16>
    %cst_11 = arith.constant dense<0.000000e+00> : vector<16x512xf32>
    %16 = tpu.matmul %11, %15, %cst_11 {dimension_numbers = #tpu.dot_dimension_numbers<[1], [0], [0], [1], [0, 0, 1, 1], [], []>} : vector<16x512xbf16>, vector<512x512xbf16>, vector<16x512xf32> -> vector<16x512xf32>
    %c0_12 = arith.constant 0 : index
    %c0_13 = arith.constant 0 : index
    %c0_14 = arith.constant 0 : index
    %17 = vector.load %arg5[%c0_12, %c0_13, %c0_14] : memref<1x1x512xf32, #tpu.memory_space<vmem>>, vector<1x1x512xf32>
    %18 = vector.shape_cast %17 : vector<1x1x512xf32> to vector<1x512xf32>
    %19 = vector.broadcast %18 : vector<1x512xf32> to vector<16x512xf32>
    %20 = arith.mulf %16, %19 : vector<16x512xf32>
    %c0_15 = arith.constant 0 : index
    %c0_16 = arith.constant 0 : index
    %c0_17 = arith.constant 0 : index
    %21 = vector.load %arg6[%c0_15, %c0_16, %c0_17] : memref<1x1x512xf32, #tpu.memory_space<vmem>>, vector<1x1x512xf32>
    %22 = vector.shape_cast %21 : vector<1x1x512xf32> to vector<1x512xf32>
    %23 = vector.broadcast %22 : vector<1x512xf32> to vector<16x512xf32>
    %24 = arith.addf %20, %23 : vector<16x512xf32>
    %cst_18 = arith.constant 0.000000e+00 : f32
    %25 = vector.broadcast %cst_18 : f32 to vector<16x512xf32>
    %26 = arith.maximumf %24, %25 : vector<16x512xf32>
    %27 = arith.truncf %26 : vector<16x512xf32> to vector<16x512xbf16>
    %c0_19 = arith.constant 0 : index
    %c0_20 = arith.constant 0 : index
    %c0_21 = arith.constant 0 : index
    %28 = vector.load %arg7[%c0_19, %c0_20, %c0_21] : memref<1x512x1024xi8, #tpu.memory_space<vmem>>, vector<1x512x1024xi8>
    %29 = vector.shape_cast %28 : vector<1x512x1024xi8> to vector<512x1024xi8>
    %30 = arith.sitofp %29 : vector<512x1024xi8> to vector<512x1024xf32>
    %31 = arith.truncf %30 : vector<512x1024xf32> to vector<512x1024xbf16>
    %cst_22 = arith.constant dense<0.000000e+00> : vector<16x1024xf32>
    %32 = tpu.matmul %27, %31, %cst_22 {dimension_numbers = #tpu.dot_dimension_numbers<[1], [0], [0], [1], [0, 0, 1, 1], [], []>} : vector<16x512xbf16>, vector<512x1024xbf16>, vector<16x1024xf32> -> vector<16x1024xf32>
    %c0_23 = arith.constant 0 : index
    %c0_24 = arith.constant 0 : index
    %c0_25 = arith.constant 0 : index
    %33 = vector.load %arg8[%c0_23, %c0_24, %c0_25] : memref<1x1x1024xf32, #tpu.memory_space<vmem>>, vector<1x1x1024xf32>
    %34 = vector.shape_cast %33 : vector<1x1x1024xf32> to vector<1x1024xf32>
    %35 = vector.broadcast %34 : vector<1x1024xf32> to vector<16x1024xf32>
    %36 = arith.mulf %32, %35 : vector<16x1024xf32>
    %c0_26 = arith.constant 0 : index
    %c0_27 = arith.constant 0 : index
    %c0_28 = arith.constant 0 : index
    %37 = vector.load %arg9[%c0_26, %c0_27, %c0_28] : memref<1x1x1024xf32, #tpu.memory_space<vmem>>, vector<1x1x1024xf32>
    %38 = vector.shape_cast %37 : vector<1x1x1024xf32> to vector<1x1024xf32>
    %39 = vector.broadcast %38 : vector<1x1024xf32> to vector<16x1024xf32>
    %40 = arith.addf %36, %39 : vector<16x1024xf32>
    %cst_29 = arith.constant 0.000000e+00 : f32
    %41 = vector.broadcast %cst_29 : f32 to vector<16x1024xf32>
    %42 = arith.maximumf %40, %41 : vector<16x1024xf32>
    %43 = arith.truncf %42 : vector<16x1024xf32> to vector<16x1024xbf16>
    %c0_30 = arith.constant 0 : index
    %c0_31 = arith.constant 0 : index
    %c0_32 = arith.constant 0 : index
    %44 = vector.load %arg10[%c0_30, %c0_31, %c0_32] : memref<1x1024x512xi8, #tpu.memory_space<vmem>>, vector<1x1024x512xi8>
    %45 = vector.shape_cast %44 : vector<1x1024x512xi8> to vector<1024x512xi8>
    %46 = arith.sitofp %45 : vector<1024x512xi8> to vector<1024x512xf32>
    %47 = arith.truncf %46 : vector<1024x512xf32> to vector<1024x512xbf16>
    %cst_33 = arith.constant dense<0.000000e+00> : vector<16x512xf32>
    %48 = tpu.matmul %43, %47, %cst_33 {dimension_numbers = #tpu.dot_dimension_numbers<[1], [0], [0], [1], [0, 0, 1, 1], [], []>} : vector<16x1024xbf16>, vector<1024x512xbf16>, vector<16x512xf32> -> vector<16x512xf32>
    %c0_34 = arith.constant 0 : index
    %c0_35 = arith.constant 0 : index
    %c0_36 = arith.constant 0 : index
    %49 = vector.load %arg11[%c0_34, %c0_35, %c0_36] : memref<1x1x512xf32, #tpu.memory_space<vmem>>, vector<1x1x512xf32>
    %50 = vector.shape_cast %49 : vector<1x1x512xf32> to vector<1x512xf32>
    %51 = vector.broadcast %50 : vector<1x512xf32> to vector<16x512xf32>
    %52 = arith.mulf %48, %51 : vector<16x512xf32>
    %c0_37 = arith.constant 0 : index
    %c0_38 = arith.constant 0 : index
    %c0_39 = arith.constant 0 : index
    %53 = vector.load %arg12[%c0_37, %c0_38, %c0_39] : memref<1x1x512xf32, #tpu.memory_space<vmem>>, vector<1x1x512xf32>
    %54 = vector.shape_cast %53 : vector<1x1x512xf32> to vector<1x512xf32>
    %55 = vector.broadcast %54 : vector<1x512xf32> to vector<16x512xf32>
    %56 = arith.addf %52, %55 : vector<16x512xf32>
    %cst_40 = arith.constant 0.000000e+00 : f32
    %57 = vector.broadcast %cst_40 : f32 to vector<16x512xf32>
    %58 = arith.maximumf %56, %57 : vector<16x512xf32>
    %59 = arith.truncf %58 : vector<16x512xf32> to vector<16x512xbf16>
    %c0_41 = arith.constant 0 : index
    %c0_42 = arith.constant 0 : index
    %c0_43 = arith.constant 0 : index
    %60 = vector.load %arg13[%c0_41, %c0_42, %c0_43] : memref<1x512x128xbf16, #tpu.memory_space<vmem>>, vector<1x512x128xbf16>
    %61 = vector.shape_cast %60 : vector<1x512x128xbf16> to vector<512x128xbf16>
    %cst_44 = arith.constant dense<0.000000e+00> : vector<16x128xf32>
    %62 = tpu.matmul %59, %61, %cst_44 {dimension_numbers = #tpu.dot_dimension_numbers<[1], [0], [0], [1], [0, 0, 1, 1], [], []>} : vector<16x512xbf16>, vector<512x128xbf16>, vector<16x128xf32> -> vector<16x128xf32>
    %c0_45 = arith.constant 0 : index
    %c0_46 = arith.constant 0 : index
    %c0_47 = arith.constant 0 : index
    %63 = vector.load %arg14[%c0_45, %c0_46, %c0_47] : memref<1x1x128xf32, #tpu.memory_space<vmem>>, vector<1x1x128xf32>
    %64 = vector.shape_cast %63 : vector<1x1x128xf32> to vector<1x128xf32>
    %65 = vector.broadcast %64 : vector<1x128xf32> to vector<16x128xf32>
    %66 = arith.addf %62, %65 : vector<16x128xf32>
    %c0_48 = arith.constant 0 : index
    %c0_49 = arith.constant 0 : index
    %c0_50 = arith.constant 0 : index
    %67 = vector.load %arg15[%c0_48, %c0_49, %c0_50] : memref<1x16x128xf32, #tpu.memory_space<vmem>>, vector<1x16x128xf32>
    %68 = vector.shape_cast %67 : vector<1x16x128xf32> to vector<16x128xf32>
    %69 = vector.shape_cast %66 : vector<16x128xf32> to vector<1x16x128xf32>
    tpu.vector_store %arg15[%c0_48, %c0_49, %c0_50], %69 {strides = array<i32>} : memref<1x16x128xf32, #tpu.memory_space<vmem>>, vector<1x16x128xf32>,
    return
  }
  func.func @transform_0(%arg0: i32) -> (i32, i32) {
    %c0_i32 = arith.constant 0 : i32
    %c0_i32_0 = arith.constant 0 : i32
    %c0_i32_1 = arith.constant 0 : i32
    return %c0_i32, %c0_i32_0 : i32, i32
  }
  func.func @transform_1(%arg0: i32) -> (i32, i32, i32) {
    %c0_i32 = arith.constant 0 : i32
    %c0_i32_0 = arith.constant 0 : i32
    %c0_i32_1 = arith.constant 0 : i32
    return %arg0, %c0_i32, %c0_i32_0 : i32, i32, i32
  }
  func.func @transform_2(%arg0: i32) -> (i32, i32, i32) {
    %c0_i32 = arith.constant 0 : i32
    %c0_i32_0 = arith.constant 0 : i32
    %c0_i32_1 = arith.constant 0 : i32
    return %arg0, %c0_i32, %c0_i32_0 : i32, i32, i32
  }
  func.func @transform_3(%arg0: i32) -> (i32, i32, i32) {
    %c0_i32 = arith.constant 0 : i32
    %c0_i32_0 = arith.constant 0 : i32
    %c0_i32_1 = arith.constant 0 : i32
    return %arg0, %c0_i32, %c0_i32_0 : i32, i32, i32
  }
  func.func @transform_4(%arg0: i32) -> (i32, i32, i32) {
    %c0_i32 = arith.constant 0 : i32
    %c0_i32_0 = arith.constant 0 : i32
    %c0_i32_1 = arith.constant 0 : i32
    return %arg0, %c0_i32, %c0_i32_0 : i32, i32, i32
  }
  func.func @transform_5(%arg0: i32) -> (i32, i32, i32) {
    %c0_i32 = arith.constant 0 : i32
    %c0_i32_0 = arith.constant 0 : i32
    %c0_i32_1 = arith.constant 0 : i32
    return %arg0, %c0_i32, %c0_i32_0 : i32, i32, i32
  }
  func.func @transform_6(%arg0: i32) -> (i32, i32, i32) {
    %c0_i32 = arith.constant 0 : i32
    %c0_i32_0 = arith.constant 0 : i32
    %c0_i32_1 = arith.constant 0 : i32
    return %arg0, %c0_i32, %c0_i32_0 : i32, i32, i32
  }
  func.func @transform_7(%arg0: i32) -> (i32, i32, i32) {
    %c0_i32 = arith.constant 0 : i32
    %c0_i32_0 = arith.constant 0 : i32
    %c0_i32_1 = arith.constant 0 : i32
    return %arg0, %c0_i32, %c0_i32_0 : i32, i32, i32
  }
  func.func @transform_8(%arg0: i32) -> (i32, i32, i32) {
    %c0_i32 = arith.constant 0 : i32
    %c0_i32_0 = arith.constant 0 : i32
    %c0_i32_1 = arith.constant 0 : i32
    return %arg0, %c0_i32, %c0_i32_0 : i32, i32, i32
  }
  func.func @transform_9(%arg0: i32) -> (i32, i32, i32) {
    %c0_i32 = arith.constant 0 : i32
    %c0_i32_0 = arith.constant 0 : i32
    %c0_i32_1 = arith.constant 0 : i32
    return %arg0, %c0_i32, %c0_i32_0 : i32, i32, i32
  }
  func.func @transform_10(%arg0: i32) -> (i32, i32, i32) {
    %c0_i32 = arith.constant 0 : i32
    %c0_i32_0 = arith.constant 0 : i32
    %c0_i32_1 = arith.constant 0 : i32
    return %arg0, %c0_i32, %c0_i32_0 : i32, i32, i32
  }
  func.func @transform_11(%arg0: i32) -> (i32, i32, i32) {
    %c0_i32 = arith.constant 0 : i32
    %c0_i32_0 = arith.constant 0 : i32
    %c0_i32_1 = arith.constant 0 : i32
    return %arg0, %c0_i32, %c0_i32_0 : i32, i32, i32
  }
  func.func @transform_12(%arg0: i32) -> (i32, i32, i32) {
    %c0_i32 = arith.constant 0 : i32
    %c0_i32_0 = arith.constant 0 : i32
    %c0_i32_1 = arith.constant 0 : i32
    return %arg0, %c0_i32, %c0_i32_0 : i32, i32, i32
  }
  func.func @transform_13(%arg0: i32) -> (i32, i32, i32) {
    %c0_i32 = arith.constant 0 : i32
    %c0_i32_0 = arith.constant 0 : i32
    %c0_i32_1 = arith.constant 0 : i32
    return %arg0, %c0_i32, %c0_i32_0 : i32, i32, i32
  }
  func.func @transform_14(%arg0: i32) -> (i32, i32, i32) {
    %c0_i32 = arith.constant 0 : i32
    %c0_i32_0 = arith.constant 0 : i32
    %c0_i32_1 = arith.constant 0 : i32
    return %arg0, %c0_i32, %c0_i32_0 : i32, i32, i32
  }
}

module attributes {stable_mosaic.version = 11 : i64} {
  func.func @kernel(%arg0: i32, %arg1: memref<16x32xf32, #tpu.memory_space<vmem>>, %arg2: memref<1x32x512xbf16, #tpu.memory_space<vmem>>, %arg3: memref<1x1x512xf32, #tpu.memory_space<vmem>>, %arg4: memref<1x512x512xi8, #tpu.memory_space<vmem>>, %arg5: memref<1x1x512xf32, #tpu.memory_space<vmem>>, %arg6: memref<1x1x512xf32, #tpu.memory_space<vmem>>, %arg7: memref<1x512x1024xi8, #tpu.memory_space<vmem>>, %arg8: memref<1x1x1024xf32, #tpu.memory_space<vmem>>, %arg9: memref<1x1x1024xf32, #tpu.memory_space<vmem>>, %arg10: memref<1x1024x512xi8, #tpu.memory_space<vmem>>, %arg11: memref<1x1x512xf32, #tpu.memory_space<vmem>>, %arg12: memref<1x1x512xf32, #tpu.memory_space<vmem>>, %arg13: memref<1x512x128xbf16, #tpu.memory_space<vmem>>, %arg14: memref<1x1x128xf32, #tpu.memory_space<vmem>>, %arg15: memref<1x16x128xf32, #tpu.memory_space<vmem>>) attributes {dimension_semantics = [#tpu.dimension_semantics<arbitrary>], iteration_bounds = array<i64: 2>, scalar_prefetch = 0 : i64, scratch_operands = 0 : i64, tpu.core_type = #tpu.core_type<tc>, window_params = [{pipeline_mode = #tpu.pipeline_mode<synchronous>, transform_indices = @transform_0, window_bounds = array<i64: 16, 32>}, {transform_indices = @transform_1, window_bounds = array<i64: 1, 32, 512>}, {transform_indices = @transform_2, window_bounds = array<i64: 1, 1, 512>}, {transform_indices = @transform_3, window_bounds = array<i64: 1, 512, 512>}, {transform_indices = @transform_4, window_bounds = array<i64: 1, 1, 512>}, {transform_indices = @transform_5, window_bounds = array<i64: 1, 1, 512>}, {transform_indices = @transform_6, window_bounds = array<i64: 1, 512, 1024>}, {transform_indices = @transform_7, window_bounds = array<i64: 1, 1, 1024>}, {transform_indices = @transform_8, window_bounds = array<i64: 1, 1, 1024>}, {transform_indices = @transform_9, window_bounds = array<i64: 1, 1024, 512>}, {transform_indices = @transform_10, window_bounds = array<i64: 1, 1, 512>}, {transform_indices = @transform_11, window_bounds = array<i64: 1, 1, 512>}, {transform_indices = @transform_12, window_bounds = array<i64: 1, 512, 128>}, {transform_indices = @transform_13, window_bounds = array<i64: 1, 1, 128>}, {transform_indices = @transform_14, window_bounds = array<i64: 1, 16, 128>}]} {
    %c0 = arith.constant 0 : index
    %c0_0 = arith.constant 0 : index
    %0 = vector.load %arg1[%c0, %c0_0] : memref<16x32xf32, #tpu.memory_space<vmem>>, vector<16x32xf32>
    %1 = arith.truncf %0 : vector<16x32xf32> to vector<16x32xbf16>
    %c0_1 = arith.constant 0 : index
    %c0_2 = arith.constant 0 : index
    %c0_3 = arith.constant 0 : index
    %2 = vector.load %arg2[%c0_1, %c0_2, %c0_3] : memref<1x32x512xbf16, #tpu.memory_space<vmem>>, vector<1x32x512xbf16>
    %3 = vector.shape_cast %2 : vector<1x32x512xbf16> to vector<32x512xbf16>
    %cst = arith.constant dense<0.000000e+00> : vector<16x512xf32>
    %4 = tpu.matmul %1, %3, %cst {dimension_numbers = #tpu.dot_dimension_numbers<[1], [0], [0], [1], [0, 0, 1, 1], [], []>} : vector<16x32xbf16>, vector<32x512xbf16>, vector<16x512xf32> -> vector<16x512xf32>
    %c0_4 = arith.constant 0 : index
    %c0_5 = arith.constant 0 : index
    %c0_6 = arith.constant 0 : index
    %5 = vector.load %arg3[%c0_4, %c0_5, %c0_6] : memref<1x1x512xf32, #tpu.memory_space<vmem>>, vector<1x1x512xf32>
    %6 = vector.shape_cast %5 : vector<1x1x512xf32> to vector<1x512xf32>
    %7 = vector.broadcast %6 : vector<1x512xf32> to vector<16x512xf32>
    %8 = arith.addf %4, %7 : vector<16x512xf32>
    %cst_7 = arith.constant 0.000000e+00 : f32
    %9 = vector.broadcast %cst_7 : f32 to vector<16x512xf32>
    %10 = arith.maximumf %8, %9 : vector<16x512xf32>
    %11 = arith.truncf %10 : vector<16x512xf32> to vector<16x512xbf16>
    %c0_8 = arith.constant 0 : index
    %c0_9 = arith.constant 0 : index
    %c0_10 = arith.constant 0 : index
    %12 = vector.load %arg4[%c0_8, %c0_9, %c0_10] : memref<1x512x512xi8, #tpu.memory_space<vmem>>, vector<1x512x512xi8>
    %13 = vector.shape_cast %12 : vector<1x512x512xi8> to vector<512x512xi8>
    %14 = arith.sitofp %13 : vector<512x512xi8> to vector<512x512xf32>
    %15 = arith.truncf %14 : vector<512x512xf32> to vector<512x512xbf16>
    %cst_11 = arith.constant dense<0.000000e+00> : vector<16x512xf32>
    %16 = tpu.matmul %11, %15, %cst_11 {dimension_numbers = #tpu.dot_dimension_numbers<[1], [0], [0], [1], [0, 0, 1, 1], [], []>} : vector<16x512xbf16>, vector<512x512xbf16>, vector<16x512xf32> -> vector<16x512xf32>
    %c0_12 = arith.constant 0 : index
    %c0_13 = arith.constant 0 : index
    %c0_14 = arith.constant 0 : index
    %17 = vector.load %arg5[%c0_12, %c0_13, %c0_14] : memref<1x1x512xf32, #tpu.memory_space<vmem>>, vector<1x1x512xf32>
    %18 = vector.shape_cast %17 : vector<1x1x512xf32> to vector<1x512xf32>
    %19 = vector.broadcast %18 : vector<1x512xf32> to vector<16x512xf32>
    %20 = arith.mulf %16, %19 : vector<16x512xf32>
    %c0_15 = arith.constant 0 : index
    %c0_16 = arith.constant 0 : index
    %c0_17 = arith.constant 0 : index
    %21 = vector.load %arg6[%c0_15, %c0_16, %c0_17] : memref<1x1x512xf32, #tpu.memory_space<vmem>>, vector<1x1x512xf32>
    %22 = vector.shape_cast %21 : vector<1x1x512xf32> to vector<1x512xf32>
    %23 = vector.broadcast %22 : vector<1x512xf32> to vector<16x512xf32>
    %24 = arith.addf %20, %23 : vector<16x512xf32>
    %cst_18 = arith.constant 0.000000e+00 : f32
    %25 = vector.broadcast %cst_18 : f32 to vector<16x512xf32>
    %26 = arith.maximumf %24, %25 : vector<16x512xf32>
    %27 = arith.truncf %26 : vector<16x512xf32> to vector<16x512xbf16>
    %c0_19 = arith.constant 0 : index
    %c0_20 = arith.constant 0 : index
    %c0_21 = arith.constant 0 : index
    %28 = vector.load %arg7[%c0_19, %c0_20, %c0_21] : memref<1x512x1024xi8, #tpu.memory_space<vmem>>, vector<1x512x1024xi8>
    %29 = vector.shape_cast %28 : vector<1x512x1024xi8> to vector<512x1024xi8>
    %30 = arith.sitofp %29 : vector<512x1024xi8> to vector<512x1024xf32>
    %31 = arith.truncf %30 : vector<512x1024xf32> to vector<512x1024xbf16>
    %cst_22 = arith.constant dense<0.000000e+00> : vector<16x1024xf32>
    %32 = tpu.matmul %27, %31, %cst_22 {dimension_numbers = #tpu.dot_dimension_numbers<[1], [0], [0], [1], [0, 0, 1, 1], [], []>} : vector<16x512xbf16>, vector<512x1024xbf16>, vector<16x1024xf32> -> vector<16x1024xf32>
    %c0_23 = arith.constant 0 : index
    %c0_24 = arith.constant 0 : index
    %c0_25 = arith.constant 0 : index
    %33 = vector.load %arg8[%c0_23, %c0_24, %c0_25] : memref<1x1x1024xf32, #tpu.memory_space<vmem>>, vector<1x1x1024xf32>
    %34 = vector.shape_cast %33 : vector<1x1x1024xf32> to vector<1x1024xf32>
    %35 = vector.broadcast %34 : vector<1x1024xf32> to vector<16x1024xf32>
    %36 = arith.mulf %32, %35 : vector<16x1024xf32>
    %c0_26 = arith.constant 0 : index
    %c0_27 = arith.constant 0 : index
    %c0_28 = arith.constant 0 : index
    %37 = vector.load %arg9[%c0_26, %c0_27, %c0_28] : memref<1x1x1024xf32, #tpu.memory_space<vmem>>, vector<1x1x1024xf32>
    %38 = vector.shape_cast %37 : vector<1x1x1024xf32> to vector<1x1024xf32>
    %39 = vector.broadcast %38 : vector<1x1024xf32> to vector<16x1024xf32>
    %40 = arith.addf %36, %39 : vector<16x1024xf32>
    %cst_29 = arith.constant 0.000000e+00 : f32
    %41 = vector.broadcast %cst_29 : f32 to vector<16x1024xf32>
    %42 = arith.maximumf %40, %41 : vector<16x1024xf32>
    %43 = arith.truncf %42 : vector<16x1024xf32> to vector<16x1024xbf16>
    %c0_30 = arith.constant 0 : index
    %c0_31 = arith.constant 0 : index
    %c0_32 = arith.constant 0 : index
    %44 = vector.load %arg10[%c0_30, %c0_31, %c0_32] : memref<1x1024x512xi8, #tpu.memory_space<vmem>>, vector<1x1024x512xi8>
    %45 = vector.shape_cast %44 : vector<1x1024x512xi8> to vector<1024x512xi8>
    %46 = arith.sitofp %45 : vector<1024x512xi8> to vector<1024x512xf32>
    %47 = arith.truncf %46 : vector<1024x512xf32> to vector<1024x512xbf16>
    %cst_33 = arith.constant dense<0.000000e+00> : vector<16x512xf32>
    %48 = tpu.matmul %43, %47, %cst_33 {dimension_numbers = #tpu.dot_dimension_numbers<[1], [0], [0], [1], [0, 0, 1, 1], [], []>} : vector<16x1024xbf16>, vector<1024x512xbf16>, vector<16x512xf32> -> vector<16x512xf32>
    %c0_34 = arith.constant 0 : index
    %c0_35 = arith.constant 0 : index
    %c0_36 = arith.constant 0 : index
    %49 = vector.load %arg11[%c0_34, %c0_35, %c0_36] : memref<1x1x512xf32, #tpu.memory_space<vmem>>, vector<1x1x512xf32>
    %50 = vector.shape_cast %49 : vector<1x1x512xf32> to vector<1x512xf32>
    %51 = vector.broadcast %50 : vector<1x512xf32> to vector<16x512xf32>
    %52 = arith.mulf %48, %51 : vector<16x512xf32>
    %c0_37 = arith.constant 0 : index
    %c0_38 = arith.constant 0 : index
    %c0_39 = arith.constant 0 : index
    %53 = vector.load %arg12[%c0_37, %c0_38, %c0_39] : memref<1x1x512xf32, #tpu.memory_space<vmem>>, vector<1x1x512xf32>
    %54 = vector.shape_cast %53 : vector<1x1x512xf32> to vector<1x512xf32>
    %55 = vector.broadcast %54 : vector<1x512xf32> to vector<16x512xf32>
    %56 = arith.addf %52, %55 : vector<16x512xf32>
    %cst_40 = arith.constant 0.000000e+00 : f32
    %57 = vector.broadcast %cst_40 : f32 to vector<16x512xf32>
    %58 = arith.maximumf %56, %57 : vector<16x512xf32>
    %59 = arith.truncf %58 : vector<16x512xf32> to vector<16x512xbf16>
    %c0_41 = arith.constant 0 : index
    %c0_42 = arith.constant 0 : index
    %c0_43 = arith.constant 0 : index
    %60 = vector.load %arg13[%c0_41, %c0_42, %c0_43] : memref<1x512x128xbf16, #tpu.memory_space<vmem>>, vector<1x512x128xbf16>
    %61 = vector.shape_cast %60 : vector<1x512x128xbf16> to vector<512x128xbf16>
    %cst_44 = arith.constant dense<0.000000e+00> : vector<16x128xf32>
    %62 = tpu.matmul %59, %61, %cst_44 {dimension_numbers = #tpu.dot_dimension_numbers<[1], [0], [0], [1], [0, 0, 1, 1], [], []>} : vector<16x512xbf16>, vector<512x128xbf16>, vector<16x128xf32> -> vector<16x128xf32>
    %c0_45 = arith.constant 0 : index
    %c0_46 = arith.constant 0 : index
    %c0_47 = arith.constant 0 : index
    %63 = vector.load %arg14[%c0_45, %c0_46, %c0_47] : memref<1x1x128xf32, #tpu.memory_space<vmem>>, vector<1x1x128xf32>
    %64 = vector.shape_cast %63 : vector<1x1x128xf32> to vector<1x128xf32>
    %65 = vector.broadcast %64 : vector<1x128xf32> to vector<16x128xf32>
    %66 = arith.addf %62, %65 : vector<16x128xf32>
    %c0_48 = arith.constant 0 : index
    %c0_49 = arith.constant 0 : index
    %c0_50 = arith.constant 0 : index
    %67 = vector.load %arg15[%c0_48, %c0_49, %c0_50] : memref<1x16x128xf32, #tpu.memory_space<vmem>>, vector<1x16x128xf32>
    %68 = vector.shape_cast %67 : vector<1x16x128xf32> to vector<16x128xf32>
    %69 = vector.shape_cast %66 : vector<16x128xf32> to vector<1x16x128xf32>
    tpu.vector_store %arg15[%c0_48, %c0_49, %c0_50], %69 {strides = array<i32>} : memref<1x16x128xf32, #tpu.memory_space<vmem>>, vector<1x16x128xf32>,
    return
  }
  func.func @transform_0(%arg0: i32) -> (i32, i32) {
    %c0_i32 = arith.constant 0 : i32
    %c0_i32_0 = arith.constant 0 : i32
    %c0_i32_1 = arith.constant 0 : i32
    return %c0_i32, %c0_i32_0 : i32, i32
  }
  func.func @transform_1(%arg0: i32) -> (i32, i32, i32) {
    %c0_i32 = arith.constant 0 : i32
    %c0_i32_0 = arith.constant 0 : i32
    %c0_i32_1 = arith.constant 0 : i32
    return %arg0, %c0_i32, %c0_i32_0 : i32, i32, i32
  }
  func.func @transform_2(%arg0: i32) -> (i32, i32, i32) {
    %c0_i32 = arith.constant 0 : i32
    %c0_i32_0 = arith.constant 0 : i32
    %c0_i32_1 = arith.constant 0 : i32
    return %arg0, %c0_i32, %c0_i32_0 : i32, i32, i32
  }
  func.func @transform_3(%arg0: i32) -> (i32, i32, i32) {
    %c0_i32 = arith.constant 0 : i32
    %c0_i32_0 = arith.constant 0 : i32
    %c0_i32_1 = arith.constant 0 : i32
    return %arg0, %c0_i32, %c0_i32_0 : i32, i32, i32
  }
  func.func @transform_4(%arg0: i32) -> (i32, i32, i32) {
    %c0_i32 = arith.constant 0 : i32
    %c0_i32_0 = arith.constant 0 : i32
    %c0_i32_1 = arith.constant 0 : i32
    return %arg0, %c0_i32, %c0_i32_0 : i32, i32, i32
  }
  func.func @transform_5(%arg0: i32) -> (i32, i32, i32) {
    %c0_i32 = arith.constant 0 : i32
    %c0_i32_0 = arith.constant 0 : i32
    %c0_i32_1 = arith.constant 0 : i32
    return %arg0, %c0_i32, %c0_i32_0 : i32, i32, i32
  }
  func.func @transform_6(%arg0: i32) -> (i32, i32, i32) {
    %c0_i32 = arith.constant 0 : i32
    %c0_i32_0 = arith.constant 0 : i32
    %c0_i32_1 = arith.constant 0 : i32
    return %arg0, %c0_i32, %c0_i32_0 : i32, i32, i32
  }
  func.func @transform_7(%arg0: i32) -> (i32, i32, i32) {
    %c0_i32 = arith.constant 0 : i32
    %c0_i32_0 = arith.constant 0 : i32
    %c0_i32_1 = arith.constant 0 : i32
    return %arg0, %c0_i32, %c0_i32_0 : i32, i32, i32
  }
  func.func @transform_8(%arg0: i32) -> (i32, i32, i32) {
    %c0_i32 = arith.constant 0 : i32
    %c0_i32_0 = arith.constant 0 : i32
    %c0_i32_1 = arith.constant 0 : i32
    return %arg0, %c0_i32, %c0_i32_0 : i32, i32, i32
  }
  func.func @transform_9(%arg0: i32) -> (i32, i32, i32) {
    %c0_i32 = arith.constant 0 : i32
    %c0_i32_0 = arith.constant 0 : i32
    %c0_i32_1 = arith.constant 0 : i32
    return %arg0, %c0_i32, %c0_i32_0 : i32, i32, i32
  }
  func.func @transform_10(%arg0: i32) -> (i32, i32, i32) {
    %c0_i32 = arith.constant 0 : i32
    %c0_i32_0 = arith.constant 0 : i32
    %c0_i32_1 = arith.constant 0 : i32
    return %arg0, %c0_i32, %c0_i32_0 : i32, i32, i32
  }
  func.func @transform_11(%arg0: i32) -> (i32, i32, i32) {
    %c0_i32 = arith.constant 0 : i32
    %c0_i32_0 = arith.constant 0 : i32
    %c0_i32_1 = arith.constant 0 : i32
    return %arg0, %c0_i32, %c0_i32_0 : i32, i32, i32
  }
  func.func @transform_12(%arg0: i32) -> (i32, i32, i32) {
    %c0_i32 = arith.constant 0 : i32
    %c0_i32_0 = arith.constant 0 : i32
    %c0_i32_1 = arith.constant 0 : i32
    return %arg0, %c0_i32, %c0_i32_0 : i32, i32, i32
  }
  func.func @transform_13(%arg0: i32) -> (i32, i32, i32) {
    %c0_i32 = arith.constant 0 : i32
    %c0_i32_0 = arith.constant 0 : i32
    %c0_i32_1 = arith.constant 0 : i32
    return %arg0, %c0_i32, %c0_i32_0 : i32, i32, i32
  }
  func.func @transform_14(%arg0: i32) -> (i32, i32, i32) {
    %c0_i32 = arith.constant 0 : i32
    %c0_i32_0 = arith.constant 0 : i32
    %c0_i32_1 = arith.constant 0 : i32
    return %arg0, %c0_i32, %c0_i32_0 : i32, i32, i32
  }
}

</mosaic_0001>

<llo_original>
// kernel: a2c_forward.1
$region0: #{a2c_forward.1}
  #allocation0 [shape = 'u32[]', space=smem, size = 0x4, offset = 0x4, fixed_abs, tag = 'smem constant byte address 0x4 - core index']
  #allocation1 [shape = 'u32[144,128]{1,0:T(1,128)}', space=vmem, size = 0x12000, scoped, tag = 'internal scratch']
  %s0 = inlined_call_operand.hbm [shape: f32[16,32], index: 0, kind: input, shape index: {}]
  %s1 = inlined_call_operand.hbm [shape: bf16[2,32,512], index: 1, kind: input, shape index: {}]
  %s2 = inlined_call_operand.hbm [shape: f32[2,1,512], index: 2, kind: input, shape index: {}]
  %s3 = inlined_call_operand.hbm [shape: s8[2,512,512], index: 3, kind: input, shape index: {}]
  %s4 = inlined_call_operand.vmem [shape: f32[2,1,512], index: 4, kind: input, shape index: {}]
  %s5 = inlined_call_operand.hbm [shape: f32[2,1,512], index: 5, kind: input, shape index: {}]
  %s6 = inlined_call_operand.hbm [shape: s8[2,512,1024], index: 6, kind: input, shape index: {}]
  %s7 = inlined_call_operand.vmem [shape: f32[2,1,1024], index: 7, kind: input, shape index: {}]
  %s8 = inlined_call_operand.hbm [shape: f32[2,1,1024], index: 8, kind: input, shape index: {}]
  %s9 = inlined_call_operand.hbm [shape: s8[2,1024,512], index: 9, kind: input, shape index: {}]
  %s10 = inlined_call_operand.vmem [shape: f32[2,1,512], index: 10, kind: input, shape index: {}]
  %s11 = inlined_call_operand.vmem [shape: f32[2,1,512], index: 11, kind: input, shape index: {}]
  %s12 = inlined_call_operand.hbm [shape: bf16[2,512,128], index: 12, kind: input, shape index: {}]
  %s13 = inlined_call_operand.vmem [shape: f32[2,1,128], index: 13, kind: input, shape index: {}]
  %s14 = inlined_call_operand.vmem [shape: f32[2,16,128], index: 14, kind: output, shape index: {}]
  %s15 = sld [smem:[#allocation0]]
  $region125: #{a2c_forward.1} parent=0
    _
  %s17 = ssub.s32 1, %s15
  %s18 = scalar_select 0, %s17, %s15
  $region1: #{a2c_forward.1} parent=0
    #allocation2 [shape = 'u8[8192]{0}', space=vmem, size = 0x2000, scoped, tag = 'input window, operand 0, single buffered']
    #allocation3 [shape = 's32[2]{0}', space=sflag, size = 0x8, scoped, tag = 'scoped memory for a2c_forward.1']
    #allocation4 [shape = 'u8[65536]{0}', space=vmem, size = 0x10000, scoped, tag = 'input window, operand 1']
    #allocation5 [shape = 's32[2]{0}', space=sflag, size = 0x8, scoped, tag = 'scoped memory for a2c_forward.1']
    #allocation6 [shape = 'u8[4096]{0}', space=vmem, size = 0x1000, scoped, tag = 'input window, operand 2']
    #allocation7 [shape = 'u8[524288]{0}', space=vmem, size = 0x80000, scoped, tag = 'input window, operand 3']
    #allocation8 [shape = 's32[2]{0}', space=sflag, size = 0x8, scoped, tag = 'scoped memory for a2c_forward.1']
    #allocation9 [shape = 'u8[4096]{0}', space=vmem, size = 0x1000, scoped, tag = 'input window, operand 5']
    #allocation10 [shape = 'u8[1048576]{0}', space=vmem, size = 0x100000, scoped, tag = 'input window, operand 6']
    #allocation11 [shape = 's32[2]{0}', space=sflag, size = 0x8, scoped, tag = 'scoped memory for a2c_forward.1']
    #allocation12 [shape = 'u8[8192]{0}', space=vmem, size = 0x2000, scoped, tag = 'input window, operand 8']
    #allocation13 [shape = 'u8[1048576]{0}', space=vmem, size = 0x100000, scoped, tag = 'input window, operand 9']
    #allocation14 [shape = 's32[2]{0}', space=sflag, size = 0x8, scoped, tag = 'scoped memory for a2c_forward.1']
    #allocation15 [shape = 'u8[262144]{0}', space=vmem, size = 0x40000, scoped, tag = 'input window, operand 12']
    %19 = vsyncpa [#allocation3], 0
    %20 = vsyncpa [#allocation5], 0
    %s21 = scalar_lea.sflag [#allocation5], 1
    %22 = vsyncpa %s21, 0
    %23 = vsyncpa [#allocation8], 0
    %s24 = scalar_lea.sflag [#allocation8], 1
    %25 = vsyncpa %s24, 0
    %26 = vsyncpa [#allocation11], 0
    %s27 = scalar_lea.sflag [#allocation11], 1
    %28 = vsyncpa %s27, 0
    %29 = vsyncpa [#allocation14], 0
    %s30 = scalar_lea.sflag [#allocation14], 1
    %31 = vsyncpa %s30, 0
    loop: start=0, step=1, limit=4
    $region2: #{a2c_forward.1} parent=1 // loop_pre_header
      _
    $region3: #{a2c_forward.1} parent=1 // loop_header
      %s33 = sphi 0, %s37
      %p34 = scmp.ge.s32.totalorder %s33, 4
      %s41 = sphi 0, %s41
      %s43 = sphi 0, %s41
      %s44 = sphi 0, %s43
      %s58 = sphi 0, %s44
      %s64 = sphi 0, %s66
      %s67 = sphi 0, %s64
      %s68 = sphi 0, %s67
      %s84 = sphi 0, %s68
      %s90 = sphi 0, %s92
      %s93 = sphi 0, %s90
      %s94 = sphi 0, %s93
      %s110 = sphi 0, %s94
      %s116 = sphi 0, %s118
      %s119 = sphi 0, %s116
      %s120 = sphi 0, %s119
      %s136 = sphi 0, %s120
      %s142 = sphi 0, %s144
      %s145 = sphi 0, %s142
      %s146 = sphi 0, %s145
      %s162 = sphi 0, %s146
      %s168 = sphi 0, %s170
      %s171 = sphi 0, %s168
      %s172 = sphi 0, %s171
      %s188 = sphi 0, %s172
      %s194 = sphi 0, %s196
      %s197 = sphi 0, %s194
      %s198 = sphi 0, %s197
      %s214 = sphi 0, %s198
      %s220 = sphi 0, %s222
      %s223 = sphi 0, %s220
      %s224 = sphi 0, %s223
      %s240 = sphi 0, %s224
      %s246 = sphi 0, %s248
      %s249 = sphi 0, %s246
      %s250 = sphi 0, %s249
      %s266 = sphi 0, %s250
      %s272 = sphi 0, %s274
      %s275 = sphi 0, %s272
      %s276 = sphi 0, %s275
      %s292 = sphi 0, %s276
      %s298 = sphi 0, %s300
      %s301 = sphi 0, %s298
      %s302 = sphi 0, %s301
      %s318 = sphi 0, %s302
      %s324 = sphi 0, %s326
      %s327 = sphi 0, %s324
      %s328 = sphi 0, %s327
      %s344 = sphi 0, %s328
      %s350 = sphi 0, %s352
      %s353 = sphi 0, %s350
      %s354 = sphi 0, %s353
      %s370 = sphi 0, %s354
      %s376 = sphi 0, %s378
      %s379 = sphi 0, %s376
      %s380 = sphi 0, %s379
      %s396 = sphi 0, %s380
      %s402 = sphi 0, %s404
      %s405 = sphi 0, %s402
      %s406 = sphi 0, %s405
      %s422 = sphi 0, %s406
    $region4: #{a2c_forward.1} parent=1 // loop_header_branch
      %36 = sbr.rel (%p34) target = $region8
    $region5: #{a2c_forward.1} parent=1 // loop_body
      %s38 = ssub.s32 %s33, 1
      %s39 = ssub.s32 %s33, 2
      %s40 = sadd.s32 %s33, 1
      %s42 = sadd.s32 %s41, 1
      %p45 = scmp.eq.s32.totalorder %s33, 1
      %p46 = scmp.ne.s32.totalorder %s41, %s43
      %p47 = scmp.eq.s32.totalorder %s33, 0
      %p48 = por %p46, %p47
      %p49 = scmp.ne.s32.totalorder %s41, %s43
      %p50 = scmp.eq.s32.totalorder %s38, 1
      %p51 = por %p49, %p50
      %p52 = scmp.ne.s32.totalorder %s43, %s44
      %p53 = scmp.eq.s32.totalorder %s38, 0
      %p54 = por %p52, %p53
      %p55 = scmp.ne.s32.totalorder %s43, %s44
      %p56 = scmp.eq.s32.totalorder %s39, 1
      %p57 = por %p55, %p56
      %p59 = scmp.ne.s32.totalorder %s44, %s58
      %p60 = scmp.eq.s32.totalorder %s39, 0
      %p61 = por %p59, %p60
      %s62 = ssub.s32 %s33, %s40
      %p63 = scmp.eq.s32.totalorder %s62, 0
      %s65 = sadd.s32 %s64, 1
      %s66 = scalar_select %p63, %s64, %s65
      %p69 = pneg %p63
      %p70 = scmp.eq.s32.totalorder %s33, 1
      %p71 = por %p69, %p70
      %p72 = scmp.ne.s32.totalorder %s64, %s67
      %p73 = scmp.eq.s32.totalorder %s33, 0
      %p74 = por %p72, %p73
      %p75 = scmp.ne.s32.totalorder %s64, %s67
      %p76 = scmp.eq.s32.totalorder %s38, 1
      %p77 = por %p75, %p76
      %p78 = scmp.ne.s32.totalorder %s67, %s68
      %p79 = scmp.eq.s32.totalorder %s38, 0
      %p80 = por %p78, %p79
      %p81 = scmp.ne.s32.totalorder %s67, %s68
      %p82 = scmp.eq.s32.totalorder %s39, 1
      %p83 = por %p81, %p82
      %p85 = scmp.ne.s32.totalorder %s68, %s84
      %p86 = scmp.eq.s32.totalorder %s39, 0
      %p87 = por %p85, %p86
      %s88 = ssub.s32 %s33, %s40
      %p89 = scmp.eq.s32.totalorder %s88, 0
      %s91 = sadd.s32 %s90, 1
      %s92 = scalar_select %p89, %s90, %s91
      %p95 = pneg %p89
      %p96 = scmp.eq.s32.totalorder %s33, 1
      %p97 = por %p95, %p96
      %p98 = scmp.ne.s32.totalorder %s90, %s93
      %p99 = scmp.eq.s32.totalorder %s33, 0
      %p100 = por %p98, %p99
      %p101 = scmp.ne.s32.totalorder %s90, %s93
      %p102 = scmp.eq.s32.totalorder %s38, 1
      %p103 = por %p101, %p102
      %p104 = scmp.ne.s32.totalorder %s93, %s94
      %p105 = scmp.eq.s32.totalorder %s38, 0
      %p106 = por %p104, %p105
      %p107 = scmp.ne.s32.totalorder %s93, %s94
      %p108 = scmp.eq.s32.totalorder %s39, 1
      %p109 = por %p107, %p108
      %p111 = scmp.ne.s32.totalorder %s94, %s110
      %p112 = scmp.eq.s32.totalorder %s39, 0
      %p113 = por %p111, %p112
      %s114 = ssub.s32 %s33, %s40
      %p115 = scmp.eq.s32.totalorder %s114, 0
      %s117 = sadd.s32 %s116, 1
      %s118 = scalar_select %p115, %s116, %s117
      %p121 = pneg %p115
      %p122 = scmp.eq.s32.totalorder %s33, 1
      %p123 = por %p121, %p122
      %p124 = scmp.ne.s32.totalorder %s116, %s119
      %p125 = scmp.eq.s32.totalorder %s33, 0
      %p126 = por %p124, %p125
      %p127 = scmp.ne.s32.totalorder %s116, %s119
      %p128 = scmp.eq.s32.totalorder %s38, 1
      %p129 = por %p127, %p128
      %p130 = scmp.ne.s32.totalorder %s119, %s120
      %p131 = scmp.eq.s32.totalorder %s38, 0
      %p132 = por %p130, %p131
      %p133 = scmp.ne.s32.totalorder %s119, %s120
      %p134 = scmp.eq.s32.totalorder %s39, 1
      %p135 = por %p133, %p134
      %p137 = scmp.ne.s32.totalorder %s120, %s136
      %p138 = scmp.eq.s32.totalorder %s39, 0
      %p139 = por %p137, %p138
      %s140 = ssub.s32 %s33, %s40
      %p141 = scmp.eq.s32.totalorder %s140, 0
      %s143 = sadd.s32 %s142, 1
      %s144 = scalar_select %p141, %s142, %s143
      %p147 = pneg %p141
      %p148 = scmp.eq.s32.totalorder %s33, 1
      %p149 = por %p147, %p148
      %p150 = scmp.ne.s32.totalorder %s142, %s145
      %p151 = scmp.eq.s32.totalorder %s33, 0
      %p152 = por %p150, %p151
      %p153 = scmp.ne.s32.totalorder %s142, %s145
      %p154 = scmp.eq.s32.totalorder %s38, 1
      %p155 = por %p153, %p154
      %p156 = scmp.ne.s32.totalorder %s145, %s146
      %p157 = scmp.eq.s32.totalorder %s38, 0
      %p158 = por %p156, %p157
      %p159 = scmp.ne.s32.totalorder %s145, %s146
      %p160 = scmp.eq.s32.totalorder %s39, 1
      %p161 = por %p159, %p160
      %p163 = scmp.ne.s32.totalorder %s146, %s162
      %p164 = scmp.eq.s32.totalorder %s39, 0
      %p165 = por %p163, %p164
      %s166 = ssub.s32 %s33, %s40
      %p167 = scmp.eq.s32.totalorder %s166, 0
      %s169 = sadd.s32 %s168, 1
      %s170 = scalar_select %p167, %s168, %s169
      %p173 = pneg %p167
      %p174 = scmp.eq.s32.totalorder %s33, 1
      %p175 = por %p173, %p174
      %p176 = scmp.ne.s32.totalorder %s168, %s171
      %p177 = scmp.eq.s32.totalorder %s33, 0
      %p178 = por %p176, %p177
      %p179 = scmp.ne.s32.totalorder %s168, %s171
      %p180 = scmp.eq.s32.totalorder %s38, 1
      %p181 = por %p179, %p180
      %p182 = scmp.ne.s32.totalorder %s171, %s172
      %p183 = scmp.eq.s32.totalorder %s38, 0
      %p184 = por %p182, %p183
      %p185 = scmp.ne.s32.totalorder %s171, %s172
      %p186 = scmp.eq.s32.totalorder %s39, 1
      %p187 = por %p185, %p186
      %p189 = scmp.ne.s32.totalorder %s172, %s188
      %p190 = scmp.eq.s32.totalorder %s39, 0
      %p191 = por %p189, %p190
      %s192 = ssub.s32 %s33, %s40
      %p193 = scmp.eq.s32.totalorder %s192, 0
      %s195 = sadd.s32 %s194, 1
      %s196 = scalar_select %p193, %s194, %s195
      %p199 = pneg %p193
      %p200 = scmp.eq.s32.totalorder %s33, 1
      %p201 = por %p199, %p200
      %p202 = scmp.ne.s32.totalorder %s194, %s197
      %p203 = scmp.eq.s32.totalorder %s33, 0
      %p204 = por %p202, %p203
      %p205 = scmp.ne.s32.totalorder %s194, %s197
      %p206 = scmp.eq.s32.totalorder %s38, 1
      %p207 = por %p205, %p206
      %p208 = scmp.ne.s32.totalorder %s197, %s198
      %p209 = scmp.eq.s32.totalorder %s38, 0
      %p210 = por %p208, %p209
      %p211 = scmp.ne.s32.totalorder %s197, %s198
      %p212 = scmp.eq.s32.totalorder %s39, 1
      %p213 = por %p211, %p212
      %p215 = scmp.ne.s32.totalorder %s198, %s214
      %p216 = scmp.eq.s32.totalorder %s39, 0
      %p217 = por %p215, %p216
      %s218 = ssub.s32 %s33, %s40
      %p219 = scmp.eq.s32.totalorder %s218, 0
      %s221 = sadd.s32 %s220, 1
      %s222 = scalar_select %p219, %s220, %s221
      %p225 = pneg %p219
      %p226 = scmp.eq.s32.totalorder %s33, 1
      %p227 = por %p225, %p226
      %p228 = scmp.ne.s32.totalorder %s220, %s223
      %p229 = scmp.eq.s32.totalorder %s33, 0
      %p230 = por %p228, %p229
      %p231 = scmp.ne.s32.totalorder %s220, %s223
      %p232 = scmp.eq.s32.totalorder %s38, 1
      %p233 = por %p231, %p232
      %p234 = scmp.ne.s32.totalorder %s223, %s224
      %p235 = scmp.eq.s32.totalorder %s38, 0
      %p236 = por %p234, %p235
      %p237 = scmp.ne.s32.totalorder %s223, %s224
      %p238 = scmp.eq.s32.totalorder %s39, 1
      %p239 = por %p237, %p238
      %p241 = scmp.ne.s32.totalorder %s224, %s240
      %p242 = scmp.eq.s32.totalorder %s39, 0
      %p243 = por %p241, %p242
      %s244 = ssub.s32 %s33, %s40
      %p245 = scmp.eq.s32.totalorder %s244, 0
      %s247 = sadd.s32 %s246, 1
      %s248 = scalar_select %p245, %s246, %s247
      %p251 = pneg %p245
      %p252 = scmp.eq.s32.totalorder %s33, 1
      %p253 = por %p251, %p252
      %p254 = scmp.ne.s32.totalorder %s246, %s249
      %p255 = scmp.eq.s32.totalorder %s33, 0
      %p256 = por %p254, %p255
      %p257 = scmp.ne.s32.totalorder %s246, %s249
      %p258 = scmp.eq.s32.totalorder %s38, 1
      %p259 = por %p257, %p258
      %p260 = scmp.ne.s32.totalorder %s249, %s250
      %p261 = scmp.eq.s32.totalorder %s38, 0
      %p262 = por %p260, %p261
      %p263 = scmp.ne.s32.totalorder %s249, %s250
      %p264 = scmp.eq.s32.totalorder %s39, 1
      %p265 = por %p263, %p264
      %p267 = scmp.ne.s32.totalorder %s250, %s266
      %p268 = scmp.eq.s32.totalorder %s39, 0
      %p269 = por %p267, %p268
      %s270 = ssub.s32 %s33, %s40
      %p271 = scmp.eq.s32.totalorder %s270, 0
      %s273 = sadd.s32 %s272, 1
      %s274 = scalar_select %p271, %s272, %s273
      %p277 = pneg %p271
      %p278 = scmp.eq.s32.totalorder %s33, 1
      %p279 = por %p277, %p278
      %p280 = scmp.ne.s32.totalorder %s272, %s275
      %p281 = scmp.eq.s32.totalorder %s33, 0
      %p282 = por %p280, %p281
      %p283 = scmp.ne.s32.totalorder %s272, %s275
      %p284 = scmp.eq.s32.totalorder %s38, 1
      %p285 = por %p283, %p284
      %p286 = scmp.ne.s32.totalorder %s275, %s276
      %p287 = scmp.eq.s32.totalorder %s38, 0
      %p288 = por %p286, %p287
      %p289 = scmp.ne.s32.totalorder %s275, %s276
      %p290 = scmp.eq.s32.totalorder %s39, 1
      %p291 = por %p289, %p290
      %p293 = scmp.ne.s32.totalorder %s276, %s292
      %p294 = scmp.eq.s32.totalorder %s39, 0
      %p295 = por %p293, %p294
      %s296 = ssub.s32 %s33, %s40
      %p297 = scmp.eq.s32.totalorder %s296, 0
      %s299 = sadd.s32 %s298, 1
      %s300 = scalar_select %p297, %s298, %s299
      %p303 = pneg %p297
      %p304 = scmp.eq.s32.totalorder %s33, 1
      %p305 = por %p303, %p304
      %p306 = scmp.ne.s32.totalorder %s298, %s301
      %p307 = scmp.eq.s32.totalorder %s33, 0
      %p308 = por %p306, %p307
      %p309 = scmp.ne.s32.totalorder %s298, %s301
      %p310 = scmp.eq.s32.totalorder %s38, 1
      %p311 = por %p309, %p310
      %p312 = scmp.ne.s32.totalorder %s301, %s302
      %p313 = scmp.eq.s32.totalorder %s38, 0
      %p314 = por %p312, %p313
      %p315 = scmp.ne.s32.totalorder %s301, %s302
      %p316 = scmp.eq.s32.totalorder %s39, 1
      %p317 = por %p315, %p316
      %p319 = scmp.ne.s32.totalorder %s302, %s318
      %p320 = scmp.eq.s32.totalorder %s39, 0
      %p321 = por %p319, %p320
      %s322 = ssub.s32 %s33, %s40
      %p323 = scmp.eq.s32.totalorder %s322, 0
      %s325 = sadd.s32 %s324, 1
      %s326 = scalar_select %p323, %s324, %s325
      %p329 = pneg %p323
      %p330 = scmp.eq.s32.totalorder %s33, 1
      %p331 = por %p329, %p330
      %p332 = scmp.ne.s32.totalorder %s324, %s327
      %p333 = scmp.eq.s32.totalorder %s33, 0
      %p334 = por %p332, %p333
      %p335 = scmp.ne.s32.totalorder %s324, %s327
      %p336 = scmp.eq.s32.totalorder %s38, 1
      %p337 = por %p335, %p336
      %p338 = scmp.ne.s32.totalorder %s327, %s328
      %p339 = scmp.eq.s32.totalorder %s38, 0
      %p340 = por %p338, %p339
      %p341 = scmp.ne.s32.totalorder %s327, %s328
      %p342 = scmp.eq.s32.totalorder %s39, 1
      %p343 = por %p341, %p342
      %p345 = scmp.ne.s32.totalorder %s328, %s344
      %p346 = scmp.eq.s32.totalorder %s39, 0
      %p347 = por %p345, %p346
      %s348 = ssub.s32 %s33, %s40
      %p349 = scmp.eq.s32.totalorder %s348, 0
      %s351 = sadd.s32 %s350, 1
      %s352 = scalar_select %p349, %s350, %s351
      %p355 = pneg %p349
      %p356 = scmp.eq.s32.totalorder %s33, 1
      %p357 = por %p355, %p356
      %p358 = scmp.ne.s32.totalorder %s350, %s353
      %p359 = scmp.eq.s32.totalorder %s33, 0
      %p360 = por %p358, %p359
      %p361 = scmp.ne.s32.totalorder %s350, %s353
      %p362 = scmp.eq.s32.totalorder %s38, 1
      %p363 = por %p361, %p362
      %p364 = scmp.ne.s32.totalorder %s353, %s354
      %p365 = scmp.eq.s32.totalorder %s38, 0
      %p366 = por %p364, %p365
      %p367 = scmp.ne.s32.totalorder %s353, %s354
      %p368 = scmp.eq.s32.totalorder %s39, 1
      %p369 = por %p367, %p368
      %p371 = scmp.ne.s32.totalorder %s354, %s370
      %p372 = scmp.eq.s32.totalorder %s39, 0
      %p373 = por %p371, %p372
      %s374 = ssub.s32 %s33, %s40
      %p375 = scmp.eq.s32.totalorder %s374, 0
      %s377 = sadd.s32 %s376, 1
      %s378 = scalar_select %p375, %s376, %s377
      %p381 = pneg %p375
      %p382 = scmp.eq.s32.totalorder %s33, 1
      %p383 = por %p381, %p382
      %p384 = scmp.ne.s32.totalorder %s376, %s379
      %p385 = scmp.eq.s32.totalorder %s33, 0
      %p386 = por %p384, %p385
      %p387 = scmp.ne.s32.totalorder %s376, %s379
      %p388 = scmp.eq.s32.totalorder %s38, 1
      %p389 = por %p387, %p388
      %p390 = scmp.ne.s32.totalorder %s379, %s380
      %p391 = scmp.eq.s32.totalorder %s38, 0
      %p392 = por %p390, %p391
      %p393 = scmp.ne.s32.totalorder %s379, %s380
      %p394 = scmp.eq.s32.totalorder %s39, 1
      %p395 = por %p393, %p394
      %p397 = scmp.ne.s32.totalorder %s380, %s396
      %p398 = scmp.eq.s32.totalorder %s39, 0
      %p399 = por %p397, %p398
      %s400 = ssub.s32 %s33, %s40
      %p401 = scmp.eq.s32.totalorder %s400, 0
      %s403 = sadd.s32 %s402, 1
      %s404 = scalar_select %p401, %s402, %s403
      %p407 = pneg %p401
      %p408 = scmp.eq.s32.totalorder %s33, 1
      %p409 = por %p407, %p408
      %p410 = scmp.ne.s32.totalorder %s402, %s405
      %p411 = scmp.eq.s32.totalorder %s33, 0
      %p412 = por %p410, %p411
      %p413 = scmp.ne.s32.totalorder %s402, %s405
      %p414 = scmp.eq.s32.totalorder %s38, 1
      %p415 = por %p413, %p414
      %p416 = scmp.ne.s32.totalorder %s405, %s406
      %p417 = scmp.eq.s32.totalorder %s38, 0
      %p418 = por %p416, %p417
      %p419 = scmp.ne.s32.totalorder %s405, %s406
      %p420 = scmp.eq.s32.totalorder %s39, 1
      %p421 = por %p419, %p420
      %p423 = scmp.ne.s32.totalorder %s406, %s422
      %p424 = scmp.eq.s32.totalorder %s39, 0
      %p425 = por %p423, %p424
      %p426 = scmp.le.s32.totalorder 1, %s33
      %p427 = scmp.lt.s32.totalorder %s33, 3
      %p428 = pnand %p426, %p427
      %p429 = pneg %p428
      // Predicated region
      $region9: #{a2c_forward.1} parent=5 // pred_check
        _
      $region10: #{a2c_forward.1} parent=5 // pred_check_branch
        %431 = sbr.rel (%p428) target = $region12
      $region11: #{a2c_forward.1} parent=5 // pred_region
        %s432 = ssub.s32 %s33, 1
        // Predicated region
        $region13: #{a2c_forward.1} parent=11 // pred_check
          %p433 = pneg %p54
        $region14: #{a2c_forward.1} parent=11 // pred_check_branch
          %435 = sbr.rel (%p433) target = $region16
        $region15: #{a2c_forward.1} parent=11 // pred_region
          %s437 = ssub.s32 256, 256
          %438 = vsyncadd [#allocation3], %s437
          %s439 = sshll.u32 [#allocation2], 4
          %s440 = int_to_ptr.vmem [resolvable:$true] %s439
          %445 = dma.hbm_to_vmem [thread:$0]  %s0, 256, %s440, [#allocation3], 128, 128, 8
        $region16: #{a2c_forward.1} parent=11 // pred_fallthru
          _
      $region12: #{a2c_forward.1} parent=5 // pred_fallthru
        _
      %p446 = scmp.lt.s32.totalorder %s33, 2
      // Predicated region
      $region17: #{a2c_forward.1} parent=5 // pred_check
        %p447 = pneg %p446
      $region18: #{a2c_forward.1} parent=5 // pred_check_branch
        %449 = sbr.rel (%p447) target = $region20
      $region19: #{a2c_forward.1} parent=5 // pred_region
        // Predicated region
        $region21: #{a2c_forward.1} parent=19 // pred_check
          %p450 = pneg %p74
        $region22: #{a2c_forward.1} parent=19 // pred_check_branch
          %452 = sbr.rel (%p450) target = $region24
        $region23: #{a2c_forward.1} parent=19 // pred_region
          %s453 = sand.u32 %s33, 1
          %s454 = scalar_lea.sflag [#allocation5], %s453
          %s455 = sand.u32 %s64, 1
          %s456 = smul.addr %s455, 64
          %s457 = scalar_lea.vmem [#allocation4], %s456
          %s459 = ssub.s32 1024, 1024
          %460 = vsyncadd %s454, %s459
          %s461 = smul.addr %s33, 16
          %s462 = smul.addr %s461, 64
          %s463 = scalar_lea.hbm %s1, %s462
          %s464 = sshll.u32 %s457, 4
          %s465 = int_to_ptr.vmem [resolvable:$true] %s464
          %470 = dma.hbm_to_vmem [thread:$0]  %s463, 1024, %s465, %s454, 256, 256, 16
        $region24: #{a2c_forward.1} parent=19 // pred_fallthru
          _
        // Predicated region
        $region25: #{a2c_forward.1} parent=19 // pred_check
          %p471 = pneg %p100
        $region26: #{a2c_forward.1} parent=19 // pred_check_branch
          %473 = sbr.rel (%p471) target = $region28
        $region27: #{a2c_forward.1} parent=19 // pred_region
          %s474 = sand.u32 %s33, 1
          %s475 = scalar_lea.sflag [#allocation5], %s474
          %s476 = sand.u32 %s90, 1
          %s477 = smul.addr %s476, 4
          %s478 = scalar_lea.vmem [#allocation6], %s477
          %s480 = ssub.s32 64, 64
          %481 = vsyncadd %s475, %s480
          %s482 = smul.addr %s33, 4
          %s483 = smul.addr %s482, 16
          %s484 = scalar_lea.hbm %s2, %s483
          %s486 = sshll.u32 %s478, 4
          %s487 = int_to_ptr.vmem [resolvable:$true] %s486
          %489 = dma.hbm_to_vmem [thread:$0]  %s484, 64, %s487, %s475
        $region28: #{a2c_forward.1} parent=19 // pred_fallthru
          _
        // Predicated region
        $region29: #{a2c_forward.1} parent=19 // pred_check
          %p490 = pneg %p126
        $region30: #{a2c_forward.1} parent=19 // pred_check_branch
          %492 = sbr.rel (%p490) target = $region32
        $region31: #{a2c_forward.1} parent=19 // pred_region
          %s493 = sand.u32 %s33, 1
          %s494 = scalar_lea.sflag [#allocation8], %s493
          %s495 = sand.u32 %s116, 1
          %s496 = smul.addr %s495, 512
          %s497 = scalar_lea.vmem [#allocation7], %s496
          %s499 = ssub.s32 8192, 8192
          %500 = vsyncadd %s494, %s499
          %s501 = smul.addr %s33, 64
          %s502 = smul.addr %s501, 128
          %s503 = scalar_lea.hbm %s3, %s502
          %s504 = sshll.u32 %s497, 4
          %s505 = int_to_ptr.vmem [resolvable:$true] %s504
          %510 = dma.hbm_to_vmem [thread:$0]  %s503, 8192, %s505, %s494, 512, 512, 32
        $region32: #{a2c_forward.1} parent=19 // pred_fallthru
          _
        // Predicated region
        $region33: #{a2c_forward.1} parent=19 // pred_check
          %p511 = pneg %p152
        $region34: #{a2c_forward.1} parent=19 // pred_check_branch
          %513 = sbr.rel (%p511) target = $region36
        $region35: #{a2c_forward.1} parent=19 // pred_region
          %p514 = scmp.lt.s32.totalorder %s33, 1
          %s515 = scalar_select %p514, %s33, 1
          %s516 = smul.addr %s515, 4
          %s517 = scalar_lea.vmem %s4, %s516
        $region36: #{a2c_forward.1} parent=19 // pred_fallthru
          _
        // Predicated region
        $region37: #{a2c_forward.1} parent=19 // pred_check
          %p518 = pneg %p178
        $region38: #{a2c_forward.1} parent=19 // pred_check_branch
          %520 = sbr.rel (%p518) target = $region40
        $region39: #{a2c_forward.1} parent=19 // pred_region
          %s521 = sand.u32 %s33, 1
          %s522 = scalar_lea.sflag [#allocation8], %s521
          %s523 = sand.u32 %s168, 1
          %s524 = smul.addr %s523, 4
          %s525 = scalar_lea.vmem [#allocation9], %s524
          %s527 = ssub.s32 64, 64
          %528 = vsyncadd %s522, %s527
          %s529 = smul.addr %s33, 4
          %s530 = smul.addr %s529, 16
          %s531 = scalar_lea.hbm %s5, %s530
          %s533 = sshll.u32 %s525, 4
          %s534 = int_to_ptr.vmem [resolvable:$true] %s533
          %536 = dma.hbm_to_vmem [thread:$0]  %s531, 64, %s534, %s522
        $region40: #{a2c_forward.1} parent=19 // pred_fallthru
          _
        // Predicated region
        $region41: #{a2c_forward.1} parent=19 // pred_check
          %p537 = pneg %p204
        $region42: #{a2c_forward.1} parent=19 // pred_check_branch
          %539 = sbr.rel (%p537) target = $region44
        $region43: #{a2c_forward.1} parent=19 // pred_region
          %s540 = sand.u32 %s33, 1
          %s541 = scalar_lea.sflag [#allocation11], %s540
          %s542 = sand.u32 %s194, 1
          %s543 = smul.addr %s542, 1024
          %s544 = scalar_lea.vmem [#allocation10], %s543
          %s546 = ssub.s32 16384, 16384
          %547 = vsyncadd %s541, %s546
          %s548 = smul.addr %s33, 128
          %s549 = smul.addr %s548, 128
          %s550 = scalar_lea.hbm %s6, %s549
          %s551 = sshll.u32 %s544, 4
          %s552 = int_to_ptr.vmem [resolvable:$true] %s551
          %557 = dma.hbm_to_vmem [thread:$0]  %s550, 16384, %s552, %s541, 1024, 1024, 64
        $region44: #{a2c_forward.1} parent=19 // pred_fallthru
          _
        // Predicated region
        $region45: #{a2c_forward.1} parent=19 // pred_check
          %p558 = pneg %p230
        $region46: #{a2c_forward.1} parent=19 // pred_check_branch
          %560 = sbr.rel (%p558) target = $region48
        $region47: #{a2c_forward.1} parent=19 // pred_region
          %p561 = scmp.lt.s32.totalorder %s33, 1
          %s562 = scalar_select %p561, %s33, 1
          %s563 = smul.addr %s562, 8
          %s564 = scalar_lea.vmem %s7, %s563
        $region48: #{a2c_forward.1} parent=19 // pred_fallthru
          _
        // Predicated region
        $region49: #{a2c_forward.1} parent=19 // pred_check
          %p565 = pneg %p256
        $region50: #{a2c_forward.1} parent=19 // pred_check_branch
          %567 = sbr.rel (%p565) target = $region52
        $region51: #{a2c_forward.1} parent=19 // pred_region
          %s568 = sand.u32 %s33, 1
          %s569 = scalar_lea.sflag [#allocation11], %s568
          %s570 = sand.u32 %s246, 1
          %s571 = smul.addr %s570, 8
          %s572 = scalar_lea.vmem [#allocation12], %s571
          %s574 = ssub.s32 128, 128
          %575 = vsyncadd %s569, %s574
          %s576 = smul.addr %s33, 8
          %s577 = smul.addr %s576, 16
          %s578 = scalar_lea.hbm %s8, %s577
          %s580 = sshll.u32 %s572, 4
          %s581 = int_to_ptr.vmem [resolvable:$true] %s580
          %583 = dma.hbm_to_vmem [thread:$0]  %s578, 128, %s581, %s569
        $region52: #{a2c_forward.1} parent=19 // pred_fallthru
          _
        // Predicated region
        $region53: #{a2c_forward.1} parent=19 // pred_check
          %p584 = pneg %p282
        $region54: #{a2c_forward.1} parent=19 // pred_check_branch
          %586 = sbr.rel (%p584) target = $region56
        $region55: #{a2c_forward.1} parent=19 // pred_region
          %s587 = sand.u32 %s33, 1
          %s588 = scalar_lea.sflag [#allocation14], %s587
          %s589 = sand.u32 %s272, 1
          %s590 = smul.addr %s589, 1024
          %s591 = scalar_lea.vmem [#allocation13], %s590
          %s593 = ssub.s32 16384, 16384
          %594 = vsyncadd %s588, %s593
          %s595 = smul.addr %s33, 128
          %s596 = smul.addr %s595, 128
          %s597 = scalar_lea.hbm %s9, %s596
          %s598 = sshll.u32 %s591, 4
          %s599 = int_to_ptr.vmem [resolvable:$true] %s598
          %604 = dma.hbm_to_vmem [thread:$0]  %s597, 16384, %s599, %s588, 512, 512, 32
        $region56: #{a2c_forward.1} parent=19 // pred_fallthru
          _
        // Predicated region
        $region57: #{a2c_forward.1} parent=19 // pred_check
          %p605 = pneg %p308
        $region58: #{a2c_forward.1} parent=19 // pred_check_branch
          %607 = sbr.rel (%p605) target = $region60
        $region59: #{a2c_forward.1} parent=19 // pred_region
          %p608 = scmp.lt.s32.totalorder %s33, 1
          %s609 = scalar_select %p608, %s33, 1
          %s610 = smul.addr %s609, 4
          %s611 = scalar_lea.vmem %s10, %s610
        $region60: #{a2c_forward.1} parent=19 // pred_fallthru
          _
        // Predicated region
        $region61: #{a2c_forward.1} parent=19 // pred_check
          %p612 = pneg %p334
        $region62: #{a2c_forward.1} parent=19 // pred_check_branch
          %614 = sbr.rel (%p612) target = $region64
        $region63: #{a2c_forward.1} parent=19 // pred_region
          %p615 = scmp.lt.s32.totalorder %s33, 1
          %s616 = scalar_select %p615, %s33, 1
          %s617 = smul.addr %s616, 4
          %s618 = scalar_lea.vmem %s11, %s617
        $region64: #{a2c_forward.1} parent=19 // pred_fallthru
          _
        // Predicated region
        $region65: #{a2c_forward.1} parent=19 // pred_check
          %p619 = pneg %p360
        $region66: #{a2c_forward.1} parent=19 // pred_check_branch
          %621 = sbr.rel (%p619) target = $region68
        $region67: #{a2c_forward.1} parent=19 // pred_region
          %s622 = sand.u32 %s33, 1
          %s623 = scalar_lea.sflag [#allocation14], %s622
          %s624 = sand.u32 %s350, 1
          %s625 = smul.addr %s624, 256
          %s626 = scalar_lea.vmem [#allocation15], %s625
          %s628 = ssub.s32 4096, 4096
          %629 = vsyncadd %s623, %s628
          %s630 = smul.addr %s33, 64
          %s631 = smul.addr %s630, 64
          %s632 = scalar_lea.hbm %s12, %s631
          %s633 = sshll.u32 %s626, 4
          %s634 = int_to_ptr.vmem [resolvable:$true] %s633
          %639 = dma.hbm_to_vmem [thread:$0]  %s632, 4096, %s634, %s623, 64, 64, 4
        $region68: #{a2c_forward.1} parent=19 // pred_fallthru
          _
        // Predicated region
        $region69: #{a2c_forward.1} parent=19 // pred_check
          %p640 = pneg %p386
        $region70: #{a2c_forward.1} parent=19 // pred_check_branch
          %642 = sbr.rel (%p640) target = $region72
        $region71: #{a2c_forward.1} parent=19 // pred_region
          %p643 = scmp.lt.s32.totalorder %s33, 1
          %s644 = scalar_select %p643, %s33, 1
          %s645 = scalar_lea.vmem %s13, %s644
        $region72: #{a2c_forward.1} parent=19 // pred_fallthru
          _
      $region20: #{a2c_forward.1} parent=5 // pred_fallthru
        _
      %p646 = scmp.le.s32.totalorder 1, %s33
      %p647 = scmp.lt.s32.totalorder %s33, 3
      %p648 = pnand %p646, %p647
      %p649 = pneg %p648
      // Predicated region
      $region73: #{a2c_forward.1} parent=5 // pred_check
        _
      $region74: #{a2c_forward.1} parent=5 // pred_check_branch
        %651 = sbr.rel (%p648) target = $region76
      $region75: #{a2c_forward.1} parent=5 // pred_region
        %s652 = ssub.s32 %s33, 1
        // Predicated region
        $region77: #{a2c_forward.1} parent=75 // pred_check
          %p653 = pneg %p54
        $region78: #{a2c_forward.1} parent=75 // pred_check_branch
          %655 = sbr.rel (%p653) target = $region80
        $region79: #{a2c_forward.1} parent=75 // pred_region
          %656 = dma.done [#allocation3], 256
        $region80: #{a2c_forward.1} parent=75 // pred_fallthru
          _
        %s657 = sand.u32 %s38, 1
        %s658 = scalar_lea.sflag [#allocation5], %s657
        %s659 = sand.u32 %s67, 1
        %s660 = smul.addr %s659, 64
        %s661 = scalar_lea.vmem [#allocation4], %s660
        // Predicated region
        $region81: #{a2c_forward.1} parent=75 // pred_check
          %p662 = pneg %p80
        $region82: #{a2c_forward.1} parent=75 // pred_check_branch
          %664 = sbr.rel (%p662) target = $region84
        $region83: #{a2c_forward.1} parent=75 // pred_region
          %665 = dma.done %s658, 1024
        $region84: #{a2c_forward.1} parent=75 // pred_fallthru
          _
        %s666 = sand.u32 %s38, 1
        %s667 = scalar_lea.sflag [#allocation5], %s666
        %s668 = sand.u32 %s93, 1
        %s669 = smul.addr %s668, 4
        %s670 = scalar_lea.vmem [#allocation6], %s669
        // Predicated region
        $region85: #{a2c_forward.1} parent=75 // pred_check
          %p671 = pneg %p106
        $region86: #{a2c_forward.1} parent=75 // pred_check_branch
          %673 = sbr.rel (%p671) target = $region88
        $region87: #{a2c_forward.1} parent=75 // pred_region
          %674 = dma.done %s667, 64
        $region88: #{a2c_forward.1} parent=75 // pred_fallthru
          _
        %s675 = sand.u32 %s38, 1
        %s676 = scalar_lea.sflag [#allocation8], %s675
        %s677 = sand.u32 %s119, 1
        %s678 = smul.addr %s677, 512
        %s679 = scalar_lea.vmem [#allocation7], %s678
        // Predicated region
        $region89: #{a2c_forward.1} parent=75 // pred_check
          %p680 = pneg %p132
        $region90: #{a2c_forward.1} parent=75 // pred_check_branch
          %682 = sbr.rel (%p680) target = $region92
        $region91: #{a2c_forward.1} parent=75 // pred_region
          %683 = dma.done %s676, 8192
        $region92: #{a2c_forward.1} parent=75 // pred_fallthru
          _
        %s684 = sand.u32 %s38, 1
        %s685 = scalar_lea.sflag [#allocation8], %s684
        %s686 = sand.u32 %s171, 1
        %s687 = smul.addr %s686, 4
        %s688 = scalar_lea.vmem [#allocation9], %s687
        // Predicated region
        $region93: #{a2c_forward.1} parent=75 // pred_check
          %p689 = pneg %p184
        $region94: #{a2c_forward.1} parent=75 // pred_check_branch
          %691 = sbr.rel (%p689) target = $region96
        $region95: #{a2c_forward.1} parent=75 // pred_region
          %692 = dma.done %s685, 64
        $region96: #{a2c_forward.1} parent=75 // pred_fallthru
          _
        %s693 = sand.u32 %s38, 1
        %s694 = scalar_lea.sflag [#allocation11], %s693
        %s695 = sand.u32 %s197, 1
        %s696 = smul.addr %s695, 1024
        %s697 = scalar_lea.vmem [#allocation10], %s696
        // Predicated region
        $region97: #{a2c_forward.1} parent=75 // pred_check
          %p698 = pneg %p210
        $region98: #{a2c_forward.1} parent=75 // pred_check_branch
          %700 = sbr.rel (%p698) target = $region100
        $region99: #{a2c_forward.1} parent=75 // pred_region
          %701 = dma.done %s694, 16384
        $region100: #{a2c_forward.1} parent=75 // pred_fallthru
          _
        %s702 = sand.u32 %s38, 1
        %s703 = scalar_lea.sflag [#allocation11], %s702
        %s704 = sand.u32 %s249, 1
        %s705 = smul.addr %s704, 8
        %s706 = scalar_lea.vmem [#allocation12], %s705
        // Predicated region
        $region101: #{a2c_forward.1} parent=75 // pred_check
          %p707 = pneg %p262
        $region102: #{a2c_forward.1} parent=75 // pred_check_branch
          %709 = sbr.rel (%p707) target = $region104
        $region103: #{a2c_forward.1} parent=75 // pred_region
          %710 = dma.done %s703, 128
        $region104: #{a2c_forward.1} parent=75 // pred_fallthru
          _
        %s711 = sand.u32 %s38, 1
        %s712 = scalar_lea.sflag [#allocation14], %s711
        %s713 = sand.u32 %s275, 1
        %s714 = smul.addr %s713, 1024
        %s715 = scalar_lea.vmem [#allocation13], %s714
        // Predicated region
        $region105: #{a2c_forward.1} parent=75 // pred_check
          %p716 = pneg %p288
        $region106: #{a2c_forward.1} parent=75 // pred_check_branch
          %718 = sbr.rel (%p716) target = $region108
        $region107: #{a2c_forward.1} parent=75 // pred_region
          %719 = dma.done %s712, 16384
        $region108: #{a2c_forward.1} parent=75 // pred_fallthru
          _
        %s720 = sand.u32 %s38, 1
        %s721 = scalar_lea.sflag [#allocation14], %s720
        %s722 = sand.u32 %s353, 1
        %s723 = smul.addr %s722, 256
        %s724 = scalar_lea.vmem [#allocation15], %s723
        // Predicated region
        $region109: #{a2c_forward.1} parent=75 // pred_check
          %p725 = pneg %p366
        $region110: #{a2c_forward.1} parent=75 // pred_check_branch
          %727 = sbr.rel (%p725) target = $region112
        $region111: #{a2c_forward.1} parent=75 // pred_region
          %728 = dma.done %s721, 4096
        $region112: #{a2c_forward.1} parent=75 // pred_fallthru
          _
        %p729 = pneg %p54
        %p730 = pneg %p51
        %s731 = sand.u32 %s38, 1
        %s732 = scalar_lea.sflag [#allocation5], %s731
        %s733 = sand.u32 %s67, 1
        %s734 = smul.addr %s733, 64
        %s735 = scalar_lea.vmem [#allocation4], %s734
        %p736 = pneg %p80
        %p737 = pneg %p77
        %s738 = sand.u32 %s38, 1
        %s739 = scalar_lea.sflag [#allocation5], %s738
        %s740 = sand.u32 %s93, 1
        %s741 = smul.addr %s740, 4
        %s742 = scalar_lea.vmem [#allocation6], %s741
        %p743 = pneg %p106
        %p744 = pneg %p103
        %s745 = sand.u32 %s38, 1
        %s746 = scalar_lea.sflag [#allocation8], %s745
        %s747 = sand.u32 %s119, 1
        %s748 = smul.addr %s747, 512
        %s749 = scalar_lea.vmem [#allocation7], %s748
        %p750 = pneg %p132
        %p751 = pneg %p129
        %p752 = scmp.lt.s32.totalorder %s38, 1
        %s753 = scalar_select %p752, %s38, 1
        %s754 = smul.addr %s753, 4
        %s755 = scalar_lea.vmem %s4, %s754
        %p756 = pneg %p158
        %p757 = pneg %p155
        %s758 = sand.u32 %s38, 1
        %s759 = scalar_lea.sflag [#allocation8], %s758
        %s760 = sand.u32 %s171, 1
        %s761 = smul.addr %s760, 4
        %s762 = scalar_lea.vmem [#allocation9], %s761
        %p763 = pneg %p184
        %p764 = pneg %p181
        %s765 = sand.u32 %s38, 1
        %s766 = scalar_lea.sflag [#allocation11], %s765
        %s767 = sand.u32 %s197, 1
        %s768 = smul.addr %s767, 1024
        %s769 = scalar_lea.vmem [#allocation10], %s768
        %p770 = pneg %p210
        %p771 = pneg %p207
        %p772 = scmp.lt.s32.totalorder %s38, 1
        %s773 = scalar_select %p772, %s38, 1
        %s774 = smul.addr %s773, 8
        %s775 = scalar_lea.vmem %s7, %s774
        %p776 = pneg %p236
        %p777 = pneg %p233
        %s778 = sand.u32 %s38, 1
        %s779 = scalar_lea.sflag [#allocation11], %s778
        %s780 = sand.u32 %s249, 1
        %s781 = smul.addr %s780, 8
        %s782 = scalar_lea.vmem [#allocation12], %s781
        %p783 = pneg %p262
        %p784 = pneg %p259
        %s785 = sand.u32 %s38, 1
        %s786 = scalar_lea.sflag [#allocation14], %s785
        %s787 = sand.u32 %s275, 1
        %s788 = smul.addr %s787, 1024
        %s789 = scalar_lea.vmem [#allocation13], %s788
        %p790 = pneg %p288
        %p791 = pneg %p285
        %p792 = scmp.lt.s32.totalorder %s38, 1
        %s793 = scalar_select %p792, %s38, 1
        %s794 = smul.addr %s793, 4
        %s795 = scalar_lea.vmem %s10, %s794
        %p796 = pneg %p314
        %p797 = pneg %p311
        %p798 = scmp.lt.s32.totalorder %s38, 1
        %s799 = scalar_select %p798, %s38, 1
        %s800 = smul.addr %s799, 4
        %s801 = scalar_lea.vmem %s11, %s800
        %p802 = pneg %p340
        %p803 = pneg %p337
        %s804 = sand.u32 %s38, 1
        %s805 = scalar_lea.sflag [#allocation14], %s804
        %s806 = sand.u32 %s353, 1
        %s807 = smul.addr %s806, 256
        %s808 = scalar_lea.vmem [#allocation15], %s807
        %p809 = pneg %p366
        %p810 = pneg %p363
        %p811 = scmp.lt.s32.totalorder %s38, 1
        %s812 = scalar_select %p811, %s38, 1
        %s813 = scalar_lea.vmem %s13, %s812
        %p814 = pneg %p392
        %p815 = pneg %p389
        %p816 = pneg %p418
        %p817 = pneg %p415
        %p818 = scmp.lt.s32.totalorder %s38, 1
        %s819 = scalar_select %p818, %s38, 1
        %s820 = smul.addr %s819, 2
        %s821 = smul.addr %s820, 8
        %s822 = scalar_lea.vmem %s14, %s821
        %p823 = scmp.lt.s32.totalorder %s38, 1
        %s824 = scalar_select %p823, %s38, 1
        %s825 = smul.addr %s824, 4
        %s826 = scalar_lea.vmem %s4, %s825
        %p827 = scmp.lt.s32.totalorder %s38, 1
        %s828 = scalar_select %p827, %s38, 1
        %s829 = smul.addr %s828, 8
        %s830 = scalar_lea.vmem %s7, %s829
        %p831 = scmp.lt.s32.totalorder %s38, 1
        %s832 = scalar_select %p831, %s38, 1
        %s833 = smul.addr %s832, 4
        %s834 = scalar_lea.vmem %s10, %s833
        %p835 = scmp.lt.s32.totalorder %s38, 1
        %s836 = scalar_select %p835, %s38, 1
        %s837 = smul.addr %s836, 4
        %s838 = scalar_lea.vmem %s11, %s837
        %p839 = scmp.lt.s32.totalorder %s38, 1
        %s840 = scalar_select %p839, %s38, 1
        %s841 = scalar_lea.vmem %s13, %s840
        %p842 = scmp.lt.s32.totalorder %s38, 1
        %s843 = scalar_select %p842, %s38, 1
        %s844 = smul.addr %s843, 2
        %s845 = smul.addr %s844, 8
        %s846 = scalar_lea.vmem %s14, %s845
        %v848 = vld [vmem:[#allocation2] sm:$0xff]
        %v849 = vld [vmem:[#allocation2 + $0x8] sm:$0xff]
        %v850 = vpack.c.bf16 %v849, %v848
        %v851 = vld [vmem:[%s661] sm:$0xff]
        %v852 = vld [vmem:[%s661 + $0x8] sm:$0xff]
        %v853 = vld [vmem:[%s661 + $0x10] sm:$0xff]
        %v854 = vld [vmem:[%s661 + $0x18] sm:$0xff]
        %v855 = vld [vmem:[%s661 + $0x20] sm:$0xff]
        %v856 = vld [vmem:[%s661 + $0x28] sm:$0xff]
        %v857 = vld [vmem:[%s661 + $0x30] sm:$0xff]
        %v858 = vld [vmem:[%s661 + $0x38] sm:$0xff]
        %v859 = vld [vmem:[%s670] sm:$0xf]
        %v861 = vlaneseq
        %v862 = vshrl.u32 %v861, 7
        %v863 = vsub.s32 0, %v862
        %v864 = vrot.slane %v859, %v863
        %v865 = vlaneseq
        %v866 = vshrl.u32 %v865, 7
        %v867 = vsub.s32 1, %v866
        %v868 = vrot.slane %v859, %v867
        %v869 = vlaneseq
        %v870 = vshrl.u32 %v869, 7
        %v871 = vsub.s32 2, %v870
        %v872 = vrot.slane %v859, %v871
        %v873 = vlaneseq
        %v874 = vshrl.u32 %v873, 7
        %v875 = vsub.s32 3, %v874
        %v876 = vrot.slane %v859, %v875
        %v889 = vunpack.c.l.b16 %v851
        %v890 = vunpack.c.h.b16 %v851
        %v891 = vunpack.c.l.b16 %v852
        %v892 = vunpack.c.h.b16 %v852
        %v893 = vunpack.c.l.b16 %v853
        %v894 = vunpack.c.h.b16 %v853
        %v895 = vunpack.c.l.b16 %v854
        %v896 = vunpack.c.h.b16 %v854
        %v897 = vunpack.c.l.b16 %v855
        %v898 = vunpack.c.h.b16 %v855
        %v899 = vunpack.c.l.b16 %v856
        %v900 = vunpack.c.h.b16 %v856
        %v901 = vunpack.c.l.b16 %v857
        %v902 = vunpack.c.h.b16 %v857
        %v903 = vunpack.c.l.b16 %v858
        %v904 = vunpack.c.h.b16 %v858
        %v905 = vpack.c.b16 %v893, %v889
        %v906 = vpack.c.b16 %v894, %v890
        %v907 = vpack.c.b16 %v895, %v891
        %v908 = vpack.c.b16 %v896, %v892
        %v909 = vpack.c.b16 %v901, %v897
        %v910 = vpack.c.b16 %v902, %v898
        %v911 = vpack.c.b16 %v903, %v899
        %v912 = vpack.c.b16 %v904, %v900
        %vm921 = vcmask 261120
        %v923 = vsel %vm921, %v850, 0
        %925 = vmatprep.subr.bf16.mxu0 %v906
        %926 = vmatpush1.bf16.msra.mxu0 %v905
        %927 = vmatprep.subr.bf16.mxu0 %v910
        %928 = vmatpush1.bf16.msra.mxu0 %v909
        %929 = vmatprep.subr.bf16.mxu0 0
        %930 = vmatpush1.bf16.msra.mxu0 0
        %931 = vmatprep.subr.bf16.mxu0 0
        %932 = vmatpush1.bf16.msra.mxu0 0
        %933 = vmatprep.subr.bf16.mxu0 0
        %934 = vmatpush1.bf16.msra.mxu0 0
        %935 = vmatprep.subr.bf16.mxu0 0
        %936 = vmatpush1.bf16.msra.mxu0 0
        %937 = vmatprep.subr.bf16.mxu0 0
        %938 = vmatpush1.bf16.msra.mxu0 0
        %939 = vmatprep.subr.bf16.mxu0 0
        %940 = vmatpush1.bf16.msra.mxu0 0
        %941 = vmatprep.subr.bf16.mxu0 0
        %942 = vmatpush1.bf16.msra.mxu0 0
        %943 = vmatprep.subr.bf16.mxu0 0
        %944 = vmatpush1.bf16.msra.mxu0 0
        %945 = vmatprep.subr.bf16.mxu0 0
        %946 = vmatpush1.bf16.msra.mxu0 0
        %947 = vmatprep.subr.bf16.mxu0 0
        %948 = vmatpush1.bf16.msra.mxu0 0
        %949 = vmatprep.subr.bf16.mxu0 0
        %950 = vmatpush1.bf16.msra.mxu0 0
        %951 = vmatprep.subr.bf16.mxu0 0
        %952 = vmatpush1.bf16.msra.mxu0 0
        %953 = vmatprep.subr.bf16.mxu0 0
        %954 = vmatpush1.bf16.msra.mxu0 0
        %955 = vmatprep.subr.bf16.mxu0 0
        %956 = vmatpush1.bf16.msra.mxu0 0
        %957 = vmatprep.mubr.bf16.mxu0 0
        %958 = vmatmul.mubr.bf16.gmra.mrb[0].mxu0 %v923
        %v959 = vpop.f32.mrb[0].mxu0
        %v960 = vadd.f32 %v864, %v959
        %v961 = vpop.f32.mrb[0].mxu0
        %v962 = vadd.f32 %v868, %v961
        %v963 = vpop.f32.mrb[0].mxu0
        %v964 = vadd.f32 %v864, %v963
        %v965 = vpop.f32.mrb[0].mxu0
        %v966 = vadd.f32 %v868, %v965
        %967 = vdwg.mxu0
        %968 = vmatprep.subr.bf16.mxu0 %v908
        %969 = vmatpush1.bf16.msra.mxu0 %v907
        %970 = vmatprep.subr.bf16.mxu0 %v912
        %971 = vmatpush1.bf16.msra.mxu0 %v911
        %972 = vmatprep.subr.bf16.mxu0 0
        %973 = vmatpush1.bf16.msra.mxu0 0
        %974 = vmatprep.subr.bf16.mxu0 0
        %975 = vmatpush1.bf16.msra.mxu0 0
        %976 = vmatprep.subr.bf16.mxu0 0
        %977 = vmatpush1.bf16.msra.mxu0 0
        %978 = vmatprep.subr.bf16.mxu0 0
        %979 = vmatpush1.bf16.msra.mxu0 0
        %980 = vmatprep.subr.bf16.mxu0 0
        %981 = vmatpush1.bf16.msra.mxu0 0
        %982 = vmatprep.subr.bf16.mxu0 0
        %983 = vmatpush1.bf16.msra.mxu0 0
        %984 = vmatprep.subr.bf16.mxu0 0
        %985 = vmatpush1.bf16.msra.mxu0 0
        %986 = vmatprep.subr.bf16.mxu0 0
        %987 = vmatpush1.bf16.msra.mxu0 0
        %988 = vmatprep.subr.bf16.mxu0 0
        %989 = vmatpush1.bf16.msra.mxu0 0
        %990 = vmatprep.subr.bf16.mxu0 0
        %991 = vmatpush1.bf16.msra.mxu0 0
        %992 = vmatprep.subr.bf16.mxu0 0
        %993 = vmatpush1.bf16.msra.mxu0 0
        %994 = vmatprep.subr.bf16.mxu0 0
        %995 = vmatpush1.bf16.msra.mxu0 0
        %996 = vmatprep.subr.bf16.mxu0 0
        %997 = vmatpush1.bf16.msra.mxu0 0
        %998 = vmatprep.subr.bf16.mxu0 0
        %999 = vmatpush1.bf16.msra.mxu0 0
        %1000 = vmatprep.mubr.bf16.mxu0 0
        %1001 = vmatmul.mubr.bf16.gmra.mrb[0].mxu0 %v923
        %v1002 = vpop.f32.mrb[0].mxu0
        %v1003 = vadd.f32 %v872, %v1002
        %v1004 = vpop.f32.mrb[0].mxu0
        %v1005 = vadd.f32 %v876, %v1004
        %v1006 = vpop.f32.mrb[0].mxu0
        %v1007 = vadd.f32 %v872, %v1006
        %v1008 = vpop.f32.mrb[0].mxu0
        %v1009 = vadd.f32 %v876, %v1008
        %1010 = vdwg.mxu0
        %v1011 = vmax.f32 %v960, 0.0
        %v1012 = vmax.f32 %v962, 0.0
        %v1013 = vmax.f32 %v1003, 0.0
        %v1014 = vmax.f32 %v1005, 0.0
        %v1015 = vmax.f32 %v964, 0.0
        %v1016 = vmax.f32 %v966, 0.0
        %v1017 = vmax.f32 %v1007, 0.0
        %v1018 = vmax.f32 %v1009, 0.0
        %v1019 = vpack.c.bf16 %v1015, %v1011
        %v1020 = vpack.c.bf16 %v1016, %v1012
        %v1021 = vpack.c.bf16 %v1017, %v1013
        %v1022 = vpack.c.bf16 %v1018, %v1014
        %v1023 = vld [vmem:[%s679] sm:$0xff]
        %v1024 = vld [vmem:[%s679 + $0x8] sm:$0xff]
        %v1025 = vld [vmem:[%s679 + $0x10] sm:$0xff]
        %v1026 = vld [vmem:[%s679 + $0x18] sm:$0xff]
        %v1027 = vld [vmem:[%s679 + $0x20] sm:$0xff]
        %v1028 = vld [vmem:[%s679 + $0x28] sm:$0xff]
        %v1029 = vld [vmem:[%s679 + $0x30] sm:$0xff]
        %v1030 = vld [vmem:[%s679 + $0x38] sm:$0xff]
        %v1031 = vld [vmem:[%s679 + $0x40] sm:$0xff]
        %v1032 = vld [vmem:[%s679 + $0x48] sm:$0xff]
        %v1033 = vld [vmem:[%s679 + $0x50] sm:$0xff]
        %v1034 = vld [vmem:[%s679 + $0x58] sm:$0xff]
        %v1035 = vld [vmem:[%s679 + $0x60] sm:$0xff]
        %v1036 = vld [vmem:[%s679 + $0x68] sm:$0xff]
        %v1037 = vld [vmem:[%s679 + $0x70] sm:$0xff]
        %v1038 = vld [vmem:[%s679 + $0x78] sm:$0xff]
        %v1039 = vld [vmem:[%s679 + $0x80] sm:$0xff]
        %v1040 = vld [vmem:[%s679 + $0x88] sm:$0xff]
        %v1041 = vld [vmem:[%s679 + $0x90] sm:$0xff]
        %v1042 = vld [vmem:[%s679 + $0x98] sm:$0xff]
        %v1043 = vld [vmem:[%s679 + $0xa0] sm:$0xff]
        %v1044 = vld [vmem:[%s679 + $0xa8] sm:$0xff]
        %v1045 = vld [vmem:[%s679 + $0xb0] sm:$0xff]
        %v1046 = vld [vmem:[%s679 + $0xb8] sm:$0xff]
        %v1047 = vld [vmem:[%s679 + $0xc0] sm:$0xff]
        %v1048 = vld [vmem:[%s679 + $0xc8] sm:$0xff]
        %v1049 = vld [vmem:[%s679 + $0xd0] sm:$0xff]
        %v1050 = vld [vmem:[%s679 + $0xd8] sm:$0xff]
        %v1051 = vld [vmem:[%s679 + $0xe0] sm:$0xff]
        %v1052 = vld [vmem:[%s679 + $0xe8] sm:$0xff]
        %v1053 = vld [vmem:[%s679 + $0xf0] sm:$0xff]
        %v1054 = vld [vmem:[%s679 + $0xf8] sm:$0xff]
        %v1055 = vld [vmem:[%s679 + $0x100] sm:$0xff]
        %v1056 = vld [vmem:[%s679 + $0x108] sm:$0xff]
        %v1057 = vld [vmem:[%s679 + $0x110] sm:$0xff]
        %v1058 = vld [vmem:[%s679 + $0x118] sm:$0xff]
        %v1059 = vld [vmem:[%s679 + $0x120] sm:$0xff]
        %v1060 = vld [vmem:[%s679 + $0x128] sm:$0xff]
        %v1061 = vld [vmem:[%s679 + $0x130] sm:$0xff]
        %v1062 = vld [vmem:[%s679 + $0x138] sm:$0xff]
        %v1063 = vld [vmem:[%s679 + $0x140] sm:$0xff]
        %v1064 = vld [vmem:[%s679 + $0x148] sm:$0xff]
        %v1065 = vld [vmem:[%s679 + $0x150] sm:$0xff]
        %v1066 = vld [vmem:[%s679 + $0x158] sm:$0xff]
        %v1067 = vld [vmem:[%s679 + $0x160] sm:$0xff]
        %v1068 = vld [vmem:[%s679 + $0x168] sm:$0xff]
        %v1069 = vld [vmem:[%s679 + $0x170] sm:$0xff]
        %v1070 = vld [vmem:[%s679 + $0x178] sm:$0xff]
        %v1071 = vld [vmem:[%s679 + $0x180] sm:$0xff]
        %v1072 = vld [vmem:[%s679 + $0x188] sm:$0xff]
        %v1073 = vld [vmem:[%s679 + $0x190] sm:$0xff]
        %v1074 = vld [vmem:[%s679 + $0x198] sm:$0xff]
        %v1075 = vld [vmem:[%s679 + $0x1a0] sm:$0xff]
        %v1076 = vld [vmem:[%s679 + $0x1a8] sm:$0xff]
        %v1077 = vld [vmem:[%s679 + $0x1b0] sm:$0xff]
        %v1078 = vld [vmem:[%s679 + $0x1b8] sm:$0xff]
        %v1079 = vld [vmem:[%s679 + $0x1c0] sm:$0xff]
        %v1080 = vld [vmem:[%s679 + $0x1c8] sm:$0xff]
        %v1081 = vld [vmem:[%s679 + $0x1d0] sm:$0xff]
        %v1082 = vld [vmem:[%s679 + $0x1d8] sm:$0xff]
        %v1083 = vld [vmem:[%s679 + $0x1e0] sm:$0xff]
        %v1084 = vld [vmem:[%s679 + $0x1e8] sm:$0xff]
        %v1085 = vld [vmem:[%s679 + $0x1f0] sm:$0xff]
        %v1086 = vld [vmem:[%s679 + $0x1f8] sm:$0xff]
        %v1087 = vunpack.c.l.s8.bf16 %v1023
        %v1088 = vunpack.c.l.s8.bf16 %v1024
        %v1089 = vunpack.c.l.s8.bf16 %v1025
        %v1090 = vunpack.c.l.s8.bf16 %v1026
        %v1091 = vunpack.c.h.s8.bf16 %v1023
        %v1092 = vunpack.c.h.s8.bf16 %v1024
        %v1093 = vunpack.c.h.s8.bf16 %v1025
        %v1094 = vunpack.c.h.s8.bf16 %v1026
        %v1095 = vunpack.c.l.s8.bf16 %v1027
        %v1096 = vunpack.c.l.s8.bf16 %v1028
        %v1097 = vunpack.c.l.s8.bf16 %v1029
        %v1098 = vunpack.c.l.s8.bf16 %v1030
        %v1099 = vunpack.c.h.s8.bf16 %v1027
        %v1100 = vunpack.c.h.s8.bf16 %v1028
        %v1101 = vunpack.c.h.s8.bf16 %v1029
        %v1102 = vunpack.c.h.s8.bf16 %v1030
        %v1103 = vunpack.c.l.s8.bf16 %v1031
        %v1104 = vunpack.c.l.s8.bf16 %v1032
        %v1105 = vunpack.c.l.s8.bf16 %v1033
        %v1106 = vunpack.c.l.s8.bf16 %v1034
        %v1107 = vunpack.c.h.s8.bf16 %v1031
        %v1108 = vunpack.c.h.s8.bf16 %v1032
        %v1109 = vunpack.c.h.s8.bf16 %v1033
        %v1110 = vunpack.c.h.s8.bf16 %v1034
        %v1111 = vunpack.c.l.s8.bf16 %v1035
        %v1112 = vunpack.c.l.s8.bf16 %v1036
        %v1113 = vunpack.c.l.s8.bf16 %v1037
        %v1114 = vunpack.c.l.s8.bf16 %v1038
        %v1115 = vunpack.c.h.s8.bf16 %v1035
        %v1116 = vunpack.c.h.s8.bf16 %v1036
        %v1117 = vunpack.c.h.s8.bf16 %v1037
        %v1118 = vunpack.c.h.s8.bf16 %v1038
        %v1119 = vunpack.c.l.s8.bf16 %v1039
        %v1120 = vunpack.c.l.s8.bf16 %v1040
        %v1121 = vunpack.c.l.s8.bf16 %v1041
        %v1122 = vunpack.c.l.s8.bf16 %v1042
        %v1123 = vunpack.c.h.s8.bf16 %v1039
        %v1124 = vunpack.c.h.s8.bf16 %v1040
        %v1125 = vunpack.c.h.s8.bf16 %v1041
        %v1126 = vunpack.c.h.s8.bf16 %v1042
        %v1127 = vunpack.c.l.s8.bf16 %v1043
        %v1128 = vunpack.c.l.s8.bf16 %v1044
        %v1129 = vunpack.c.l.s8.bf16 %v1045
        %v1130 = vunpack.c.l.s8.bf16 %v1046
        %v1131 = vunpack.c.h.s8.bf16 %v1043
        %v1132 = vunpack.c.h.s8.bf16 %v1044
        %v1133 = vunpack.c.h.s8.bf16 %v1045
        %v1134 = vunpack.c.h.s8.bf16 %v1046
        %v1135 = vunpack.c.l.s8.bf16 %v1047
        %v1136 = vunpack.c.l.s8.bf16 %v1048
        %v1137 = vunpack.c.l.s8.bf16 %v1049
        %v1138 = vunpack.c.l.s8.bf16 %v1050
        %v1139 = vunpack.c.h.s8.bf16 %v1047
        %v1140 = vunpack.c.h.s8.bf16 %v1048
        %v1141 = vunpack.c.h.s8.bf16 %v1049
        %v1142 = vunpack.c.h.s8.bf16 %v1050
        %v1143 = vunpack.c.l.s8.bf16 %v1051
        %v1144 = vunpack.c.l.s8.bf16 %v1052
        %v1145 = vunpack.c.l.s8.bf16 %v1053
        %v1146 = vunpack.c.l.s8.bf16 %v1054
        %v1147 = vunpack.c.h.s8.bf16 %v1051
        %v1148 = vunpack.c.h.s8.bf16 %v1052
        %v1149 = vunpack.c.h.s8.bf16 %v1053
        %v1150 = vunpack.c.h.s8.bf16 %v1054
        %v1151 = vunpack.c.l.s8.bf16 %v1055
        %v1152 = vunpack.c.l.s8.bf16 %v1056
        %v1153 = vunpack.c.l.s8.bf16 %v1057
        %v1154 = vunpack.c.l.s8.bf16 %v1058
        %v1155 = vunpack.c.h.s8.bf16 %v1055
        %v1156 = vunpack.c.h.s8.bf16 %v1056
        %v1157 = vunpack.c.h.s8.bf16 %v1057
        %v1158 = vunpack.c.h.s8.bf16 %v1058
        %v1159 = vunpack.c.l.s8.bf16 %v1059
        %v1160 = vunpack.c.l.s8.bf16 %v1060
        %v1161 = vunpack.c.l.s8.bf16 %v1061
        %v1162 = vunpack.c.l.s8.bf16 %v1062
        %v1163 = vunpack.c.h.s8.bf16 %v1059
        %v1164 = vunpack.c.h.s8.bf16 %v1060
        %v1165 = vunpack.c.h.s8.bf16 %v1061
        %v1166 = vunpack.c.h.s8.bf16 %v1062
        %v1167 = vunpack.c.l.s8.bf16 %v1063
        %v1168 = vunpack.c.l.s8.bf16 %v1064
        %v1169 = vunpack.c.l.s8.bf16 %v1065
        %v1170 = vunpack.c.l.s8.bf16 %v1066
        %v1171 = vunpack.c.h.s8.bf16 %v1063
        %v1172 = vunpack.c.h.s8.bf16 %v1064
        %v1173 = vunpack.c.h.s8.bf16 %v1065
        %v1174 = vunpack.c.h.s8.bf16 %v1066
        %v1175 = vunpack.c.l.s8.bf16 %v1067
        %v1176 = vunpack.c.l.s8.bf16 %v1068
        %v1177 = vunpack.c.l.s8.bf16 %v1069
        %v1178 = vunpack.c.l.s8.bf16 %v1070
        %v1179 = vunpack.c.h.s8.bf16 %v1067
        %v1180 = vunpack.c.h.s8.bf16 %v1068
        %v1181 = vunpack.c.h.s8.bf16 %v1069
        %v1182 = vunpack.c.h.s8.bf16 %v1070
        %v1183 = vunpack.c.l.s8.bf16 %v1071
        %v1184 = vunpack.c.l.s8.bf16 %v1072
        %v1185 = vunpack.c.l.s8.bf16 %v1073
        %v1186 = vunpack.c.l.s8.bf16 %v1074
        %v1187 = vunpack.c.h.s8.bf16 %v1071
        %v1188 = vunpack.c.h.s8.bf16 %v1072
        %v1189 = vunpack.c.h.s8.bf16 %v1073
        %v1190 = vunpack.c.h.s8.bf16 %v1074
        %v1191 = vunpack.c.l.s8.bf16 %v1075
        %v1192 = vunpack.c.l.s8.bf16 %v1076
        %v1193 = vunpack.c.l.s8.bf16 %v1077
        %v1194 = vunpack.c.l.s8.bf16 %v1078
        %v1195 = vunpack.c.h.s8.bf16 %v1075
        %v1196 = vunpack.c.h.s8.bf16 %v1076
        %v1197 = vunpack.c.h.s8.bf16 %v1077
        %v1198 = vunpack.c.h.s8.bf16 %v1078
        %v1199 = vunpack.c.l.s8.bf16 %v1079
        %v1200 = vunpack.c.l.s8.bf16 %v1080
        %v1201 = vunpack.c.l.s8.bf16 %v1081
        %v1202 = vunpack.c.l.s8.bf16 %v1082
        %v1203 = vunpack.c.h.s8.bf16 %v1079
        %v1204 = vunpack.c.h.s8.bf16 %v1080
        %v1205 = vunpack.c.h.s8.bf16 %v1081
        %v1206 = vunpack.c.h.s8.bf16 %v1082
        %v1207 = vunpack.c.l.s8.bf16 %v1083
        %v1208 = vunpack.c.l.s8.bf16 %v1084
        %v1209 = vunpack.c.l.s8.bf16 %v1085
        %v1210 = vunpack.c.l.s8.bf16 %v1086
        %v1211 = vunpack.c.h.s8.bf16 %v1083
        %v1212 = vunpack.c.h.s8.bf16 %v1084
        %v1213 = vunpack.c.h.s8.bf16 %v1085
        %v1214 = vunpack.c.h.s8.bf16 %v1086
        %1215 = vmatprep.subr.bf16.mxu0 %v1088
        %1216 = vmatpush1.bf16.msra.mxu0 %v1087
        %1217 = vmatprep.subr.bf16.mxu0 %v1092
        %1218 = vmatpush1.bf16.msra.mxu0 %v1091
        %1219 = vmatprep.subr.bf16.mxu0 %v1096
        %1220 = vmatpush1.bf16.msra.mxu0 %v1095
        %1221 = vmatprep.subr.bf16.mxu0 %v1100
        %1222 = vmatpush1.bf16.msra.mxu0 %v1099
        %1223 = vmatprep.subr.bf16.mxu0 %v1104
        %1224 = vmatpush1.bf16.msra.mxu0 %v1103
        %1225 = vmatprep.subr.bf16.mxu0 %v1108
        %1226 = vmatpush1.bf16.msra.mxu0 %v1107
        %1227 = vmatprep.subr.bf16.mxu0 %v1112
        %1228 = vmatpush1.bf16.msra.mxu0 %v1111
        %1229 = vmatprep.subr.bf16.mxu0 %v1116
        %1230 = vmatpush1.bf16.msra.mxu0 %v1115
        %1231 = vmatprep.subr.bf16.mxu0 %v1120
        %1232 = vmatpush1.bf16.msra.mxu0 %v1119
        %1233 = vmatprep.subr.bf16.mxu0 %v1124
        %1234 = vmatpush1.bf16.msra.mxu0 %v1123
        %1235 = vmatprep.subr.bf16.mxu0 %v1128
        %1236 = vmatpush1.bf16.msra.mxu0 %v1127
        %1237 = vmatprep.subr.bf16.mxu0 %v1132
        %1238 = vmatpush1.bf16.msra.mxu0 %v1131
        %1239 = vmatprep.subr.bf16.mxu0 %v1136
        %1240 = vmatpush1.bf16.msra.mxu0 %v1135
        %1241 = vmatprep.subr.bf16.mxu0 %v1140
        %1242 = vmatpush1.bf16.msra.mxu0 %v1139
        %1243 = vmatprep.subr.bf16.mxu0 %v1144
        %1244 = vmatpush1.bf16.msra.mxu0 %v1143
        %1245 = vmatprep.subr.bf16.mxu0 %v1148
        %1246 = vmatpush1.bf16.msra.mxu0 %v1147
        %1247 = vmatprep.mubr.bf16.mxu0 %v1020
        %1248 = vmatmul.mubr.bf16.gmra.mrb[0].mxu0 %v1019
        %v1249 = vpop.f32.mrb[0].mxu0
        %v1250 = vadd.f32 0.0, %v1249
        %v1251 = vpop.f32.mrb[0].mxu0
        %v1252 = vadd.f32 0.0, %v1251
        %v1253 = vpop.f32.mrb[0].mxu0
        %v1254 = vadd.f32 0.0, %v1253
        %v1255 = vpop.f32.mrb[0].mxu0
        %v1256 = vadd.f32 0.0, %v1255
        %1257 = vdwg.mxu0
        %1258 = vmatprep.subr.bf16.mxu0 %v1152
        %1259 = vmatpush1.bf16.msra.mxu0 %v1151
        %1260 = vmatprep.subr.bf16.mxu0 %v1156
        %1261 = vmatpush1.bf16.msra.mxu0 %v1155
        %1262 = vmatprep.subr.bf16.mxu0 %v1160
        %1263 = vmatpush1.bf16.msra.mxu0 %v1159
        %1264 = vmatprep.subr.bf16.mxu0 %v1164
        %1265 = vmatpush1.bf16.msra.mxu0 %v1163
        %1266 = vmatprep.subr.bf16.mxu0 %v1168
        %1267 = vmatpush1.bf16.msra.mxu0 %v1167
        %1268 = vmatprep.subr.bf16.mxu0 %v1172
        %1269 = vmatpush1.bf16.msra.mxu0 %v1171
        %1270 = vmatprep.subr.bf16.mxu0 %v1176
        %1271 = vmatpush1.bf16.msra.mxu0 %v1175
        %1272 = vmatprep.subr.bf16.mxu0 %v1180
        %1273 = vmatpush1.bf16.msra.mxu0 %v1179
        %1274 = vmatprep.subr.bf16.mxu0 %v1184
        %1275 = vmatpush1.bf16.msra.mxu0 %v1183
        %1276 = vmatprep.subr.bf16.mxu0 %v1188
        %1277 = vmatpush1.bf16.msra.mxu0 %v1187
        %1278 = vmatprep.subr.bf16.mxu0 %v1192
        %1279 = vmatpush1.bf16.msra.mxu0 %v1191
        %1280 = vmatprep.subr.bf16.mxu0 %v1196
        %1281 = vmatpush1.bf16.msra.mxu0 %v1195
        %1282 = vmatprep.subr.bf16.mxu0 %v1200
        %1283 = vmatpush1.bf16.msra.mxu0 %v1199
        %1284 = vmatprep.subr.bf16.mxu0 %v1204
        %1285 = vmatpush1.bf16.msra.mxu0 %v1203
        %1286 = vmatprep.subr.bf16.mxu0 %v1208
        %1287 = vmatpush1.bf16.msra.mxu0 %v1207
        %1288 = vmatprep.subr.bf16.mxu0 %v1212
        %1289 = vmatpush1.bf16.msra.mxu0 %v1211
        %1290 = vmatprep.mubr.bf16.mxu0 %v1022
        %1291 = vmatmul.mubr.bf16.gmra.mrb[0].mxu0 %v1021
        %v1292 = vpop.f32.mrb[0].mxu0
        %v1293 = vadd.f32 %v1250, %v1292
        %v1294 = vpop.f32.mrb[0].mxu0
        %v1295 = vadd.f32 %v1252, %v1294
        %v1296 = vpop.f32.mrb[0].mxu0
        %v1297 = vadd.f32 %v1254, %v1296
        %v1298 = vpop.f32.mrb[0].mxu0
        %v1299 = vadd.f32 %v1256, %v1298
        %1300 = vdwg.mxu0
        %1301 = vmatprep.subr.bf16.mxu0 %v1090
        %1302 = vmatpush1.bf16.msra.mxu0 %v1089
        %1303 = vmatprep.subr.bf16.mxu0 %v1094
        %1304 = vmatpush1.bf16.msra.mxu0 %v1093
        %1305 = vmatprep.subr.bf16.mxu0 %v1098
        %1306 = vmatpush1.bf16.msra.mxu0 %v1097
        %1307 = vmatprep.subr.bf16.mxu0 %v1102
        %1308 = vmatpush1.bf16.msra.mxu0 %v1101
        %1309 = vmatprep.subr.bf16.mxu0 %v1106
        %1310 = vmatpush1.bf16.msra.mxu0 %v1105
        %1311 = vmatprep.subr.bf16.mxu0 %v1110
        %1312 = vmatpush1.bf16.msra.mxu0 %v1109
        %1313 = vmatprep.subr.bf16.mxu0 %v1114
        %1314 = vmatpush1.bf16.msra.mxu0 %v1113
        %1315 = vmatprep.subr.bf16.mxu0 %v1118
        %1316 = vmatpush1.bf16.msra.mxu0 %v1117
        %1317 = vmatprep.subr.bf16.mxu0 %v1122
        %1318 = vmatpush1.bf16.msra.mxu0 %v1121
        %1319 = vmatprep.subr.bf16.mxu0 %v1126
        %1320 = vmatpush1.bf16.msra.mxu0 %v1125
        %1321 = vmatprep.subr.bf16.mxu0 %v1130
        %1322 = vmatpush1.bf16.msra.mxu0 %v1129
        %1323 = vmatprep.subr.bf16.mxu0 %v1134
        %1324 = vmatpush1.bf16.msra.mxu0 %v1133
        %1325 = vmatprep.subr.bf16.mxu0 %v1138
        %1326 = vmatpush1.bf16.msra.mxu0 %v1137
        %1327 = vmatprep.subr.bf16.mxu0 %v1142
        %1328 = vmatpush1.bf16.msra.mxu0 %v1141
        %1329 = vmatprep.subr.bf16.mxu0 %v1146
        %1330 = vmatpush1.bf16.msra.mxu0 %v1145
        %1331 = vmatprep.subr.bf16.mxu0 %v1150
        %1332 = vmatpush1.bf16.msra.mxu0 %v1149
        %1333 = vmatprep.mubr.bf16.mxu0 %v1020
        %1334 = vmatmul.mubr.bf16.gmra.mrb[0].mxu0 %v1019
        %v1335 = vpop.f32.mrb[0].mxu0
        %v1336 = vadd.f32 0.0, %v1335
        %v1337 = vpop.f32.mrb[0].mxu0
        %v1338 = vadd.f32 0.0, %v1337
        %v1339 = vpop.f32.mrb[0].mxu0
        %v1340 = vadd.f32 0.0, %v1339
        %v1341 = vpop.f32.mrb[0].mxu0
        %v1342 = vadd.f32 0.0, %v1341
        %1343 = vdwg.mxu0
        %1344 = vmatprep.subr.bf16.mxu0 %v1154
        %1345 = vmatpush1.bf16.msra.mxu0 %v1153
        %1346 = vmatprep.subr.bf16.mxu0 %v1158
        %1347 = vmatpush1.bf16.msra.mxu0 %v1157
        %1348 = vmatprep.subr.bf16.mxu0 %v1162
        %1349 = vmatpush1.bf16.msra.mxu0 %v1161
        %1350 = vmatprep.subr.bf16.mxu0 %v1166
        %1351 = vmatpush1.bf16.msra.mxu0 %v1165
        %1352 = vmatprep.subr.bf16.mxu0 %v1170
        %1353 = vmatpush1.bf16.msra.mxu0 %v1169
        %1354 = vmatprep.subr.bf16.mxu0 %v1174
        %1355 = vmatpush1.bf16.msra.mxu0 %v1173
        %1356 = vmatprep.subr.bf16.mxu0 %v1178
        %1357 = vmatpush1.bf16.msra.mxu0 %v1177
        %1358 = vmatprep.subr.bf16.mxu0 %v1182
        %1359 = vmatpush1.bf16.msra.mxu0 %v1181
        %1360 = vmatprep.subr.bf16.mxu0 %v1186
        %1361 = vmatpush1.bf16.msra.mxu0 %v1185
        %1362 = vmatprep.subr.bf16.mxu0 %v1190
        %1363 = vmatpush1.bf16.msra.mxu0 %v1189
        %1364 = vmatprep.subr.bf16.mxu0 %v1194
        %1365 = vmatpush1.bf16.msra.mxu0 %v1193
        %1366 = vmatprep.subr.bf16.mxu0 %v1198
        %1367 = vmatpush1.bf16.msra.mxu0 %v1197
        %1368 = vmatprep.subr.bf16.mxu0 %v1202
        %1369 = vmatpush1.bf16.msra.mxu0 %v1201
        %1370 = vmatprep.subr.bf16.mxu0 %v1206
        %1371 = vmatpush1.bf16.msra.mxu0 %v1205
        %1372 = vmatprep.subr.bf16.mxu0 %v1210
        %1373 = vmatpush1.bf16.msra.mxu0 %v1209
        %1374 = vmatprep.subr.bf16.mxu0 %v1214
        %1375 = vmatpush1.bf16.msra.mxu0 %v1213
        %1376 = vmatprep.mubr.bf16.mxu0 %v1022
        %1377 = vmatmul.mubr.bf16.gmra.mrb[0].mxu0 %v1021
        %v1378 = vpop.f32.mrb[0].mxu0
        %v1379 = vadd.f32 %v1336, %v1378
        %v1380 = vpop.f32.mrb[0].mxu0
        %v1381 = vadd.f32 %v1338, %v1380
        %v1382 = vpop.f32.mrb[0].mxu0
        %v1383 = vadd.f32 %v1340, %v1382
        %v1384 = vpop.f32.mrb[0].mxu0
        %v1385 = vadd.f32 %v1342, %v1384
        %1386 = vdwg.mxu0
        %v1387 = vld [vmem:[%s826] sm:$0xf]
        %v1389 = vlaneseq
        %v1390 = vshrl.u32 %v1389, 7
        %v1391 = vsub.s32 0, %v1390
        %v1392 = vrot.slane %v1387, %v1391
        %v1393 = vlaneseq
        %v1394 = vshrl.u32 %v1393, 7
        %v1395 = vsub.s32 1, %v1394
        %v1396 = vrot.slane %v1387, %v1395
        %v1397 = vlaneseq
        %v1398 = vshrl.u32 %v1397, 7
        %v1399 = vsub.s32 2, %v1398
        %v1400 = vrot.slane %v1387, %v1399
        %v1401 = vlaneseq
        %v1402 = vshrl.u32 %v1401, 7
        %v1403 = vsub.s32 3, %v1402
        %v1404 = vrot.slane %v1387, %v1403
        %v1409 = vmul.f32 %v1293, %v1392
        %v1410 = vmul.f32 %v1295, %v1396
        %v1411 = vmul.f32 %v1379, %v1400
        %v1412 = vmul.f32 %v1381, %v1404
        %v1413 = vmul.f32 %v1297, %v1392
        %v1414 = vmul.f32 %v1299, %v1396
        %v1415 = vmul.f32 %v1383, %v1400
        %v1416 = vmul.f32 %v1385, %v1404
        %v1417 = vld [vmem:[%s688] sm:$0xf]
        %v1419 = vlaneseq
        %v1420 = vshrl.u32 %v1419, 7
        %v1421 = vsub.s32 0, %v1420
        %v1422 = vrot.slane %v1417, %v1421
        %v1423 = vlaneseq
        %v1424 = vshrl.u32 %v1423, 7
        %v1425 = vsub.s32 1, %v1424
        %v1426 = vrot.slane %v1417, %v1425
        %v1427 = vlaneseq
        %v1428 = vshrl.u32 %v1427, 7
        %v1429 = vsub.s32 2, %v1428
        %v1430 = vrot.slane %v1417, %v1429
        %v1431 = vlaneseq
        %v1432 = vshrl.u32 %v1431, 7
        %v1433 = vsub.s32 3, %v1432
        %v1434 = vrot.slane %v1417, %v1433
        %v1439 = vadd.f32 %v1409, %v1422
        %v1440 = vadd.f32 %v1410, %v1426
        %v1441 = vadd.f32 %v1411, %v1430
        %v1442 = vadd.f32 %v1412, %v1434
        %v1443 = vadd.f32 %v1413, %v1422
        %v1444 = vadd.f32 %v1414, %v1426
        %v1445 = vadd.f32 %v1415, %v1430
        %v1446 = vadd.f32 %v1416, %v1434
        %v1447 = vmax.f32 %v1439, 0.0
        %v1448 = vmax.f32 %v1440, 0.0
        %v1449 = vmax.f32 %v1441, 0.0
        %v1450 = vmax.f32 %v1442, 0.0
        %v1451 = vmax.f32 %v1443, 0.0
        %v1452 = vmax.f32 %v1444, 0.0
        %v1453 = vmax.f32 %v1445, 0.0
        %v1454 = vmax.f32 %v1446, 0.0
        %v1455 = vpack.c.bf16 %v1451, %v1447
        %v1456 = vpack.c.bf16 %v1452, %v1448
        %v1457 = vpack.c.bf16 %v1453, %v1449
        %v1458 = vpack.c.bf16 %v1454, %v1450
        %v1459 = vld [vmem:[%s697] sm:$0xff]
        %v1460 = vld [vmem:[%s697 + $0x8] sm:$0xff]
        %v1461 = vld [vmem:[%s697 + $0x10] sm:$0xff]
        %v1462 = vld [vmem:[%s697 + $0x18] sm:$0xff]
        %v1463 = vld [vmem:[%s697 + $0x20] sm:$0xff]
        %v1464 = vld [vmem:[%s697 + $0x28] sm:$0xff]
        %v1465 = vld [vmem:[%s697 + $0x30] sm:$0xff]
        %v1466 = vld [vmem:[%s697 + $0x38] sm:$0xff]
        %v1467 = vld [vmem:[%s697 + $0x40] sm:$0xff]
        %v1468 = vld [vmem:[%s697 + $0x48] sm:$0xff]
        %v1469 = vld [vmem:[%s697 + $0x50] sm:$0xff]
        %v1470 = vld [vmem:[%s697 + $0x58] sm:$0xff]
        %v1471 = vld [vmem:[%s697 + $0x60] sm:$0xff]
        %v1472 = vld [vmem:[%s697 + $0x68] sm:$0xff]
        %v1473 = vld [vmem:[%s697 + $0x70] sm:$0xff]
        %v1474 = vld [vmem:[%s697 + $0x78] sm:$0xff]
        %v1475 = vld [vmem:[%s697 + $0x80] sm:$0xff]
        %v1476 = vld [vmem:[%s697 + $0x88] sm:$0xff]
        %v1477 = vld [vmem:[%s697 + $0x90] sm:$0xff]
        %v1478 = vld [vmem:[%s697 + $0x98] sm:$0xff]
        %v1479 = vld [vmem:[%s697 + $0xa0] sm:$0xff]
        %v1480 = vld [vmem:[%s697 + $0xa8] sm:$0xff]
        %v1481 = vld [vmem:[%s697 + $0xb0] sm:$0xff]
        %v1482 = vld [vmem:[%s697 + $0xb8] sm:$0xff]
        %v1483 = vld [vmem:[%s697 + $0xc0] sm:$0xff]
        %v1484 = vld [vmem:[%s697 + $0xc8] sm:$0xff]
        %v1485 = vld [vmem:[%s697 + $0xd0] sm:$0xff]
        %v1486 = vld [vmem:[%s697 + $0xd8] sm:$0xff]
        %v1487 = vld [vmem:[%s697 + $0xe0] sm:$0xff]
        %v1488 = vld [vmem:[%s697 + $0xe8] sm:$0xff]
        %v1489 = vld [vmem:[%s697 + $0xf0] sm:$0xff]
        %v1490 = vld [vmem:[%s697 + $0xf8] sm:$0xff]
        %v1491 = vld [vmem:[%s697 + $0x100] sm:$0xff]
        %v1492 = vld [vmem:[%s697 + $0x108] sm:$0xff]
        %v1493 = vld [vmem:[%s697 + $0x110] sm:$0xff]
        %v1494 = vld [vmem:[%s697 + $0x118] sm:$0xff]
        %v1495 = vld [vmem:[%s697 + $0x120] sm:$0xff]
        %v1496 = vld [vmem:[%s697 + $0x128] sm:$0xff]
        %v1497 = vld [vmem:[%s697 + $0x130] sm:$0xff]
        %v1498 = vld [vmem:[%s697 + $0x138] sm:$0xff]
        %v1499 = vld [vmem:[%s697 + $0x140] sm:$0xff]
        %v1500 = vld [vmem:[%s697 + $0x148] sm:$0xff]
        %v1501 = vld [vmem:[%s697 + $0x150] sm:$0xff]
        %v1502 = vld [vmem:[%s697 + $0x158] sm:$0xff]
        %v1503 = vld [vmem:[%s697 + $0x160] sm:$0xff]
        %v1504 = vld [vmem:[%s697 + $0x168] sm:$0xff]
        %v1505 = vld [vmem:[%s697 + $0x170] sm:$0xff]
        %v1506 = vld [vmem:[%s697 + $0x178] sm:$0xff]
        %v1507 = vld [vmem:[%s697 + $0x180] sm:$0xff]
        %v1508 = vld [vmem:[%s697 + $0x188] sm:$0xff]
        %v1509 = vld [vmem:[%s697 + $0x190] sm:$0xff]
        %v1510 = vld [vmem:[%s697 + $0x198] sm:$0xff]
        %v1511 = vld [vmem:[%s697 + $0x1a0] sm:$0xff]
        %v1512 = vld [vmem:[%s697 + $0x1a8] sm:$0xff]
        %v1513 = vld [vmem:[%s697 + $0x1b0] sm:$0xff]
        %v1514 = vld [vmem:[%s697 + $0x1b8] sm:$0xff]
        %v1515 = vld [vmem:[%s697 + $0x1c0] sm:$0xff]
        %v1516 = vld [vmem:[%s697 + $0x1c8] sm:$0xff]
        %v1517 = vld [vmem:[%s697 + $0x1d0] sm:$0xff]
        %v1518 = vld [vmem:[%s697 + $0x1d8] sm:$0xff]
        %v1519 = vld [vmem:[%s697 + $0x1e0] sm:$0xff]
        %v1520 = vld [vmem:[%s697 + $0x1e8] sm:$0xff]
        %v1521 = vld [vmem:[%s697 + $0x1f0] sm:$0xff]
        %v1522 = vld [vmem:[%s697 + $0x1f8] sm:$0xff]
        %v1523 = vld [vmem:[%s697 + $0x200] sm:$0xff]
        %v1524 = vld [vmem:[%s697 + $0x208] sm:$0xff]
        %v1525 = vld [vmem:[%s697 + $0x210] sm:$0xff]
        %v1526 = vld [vmem:[%s697 + $0x218] sm:$0xff]
        %v1527 = vld [vmem:[%s697 + $0x220] sm:$0xff]
        %v1528 = vld [vmem:[%s697 + $0x228] sm:$0xff]
        %v1529 = vld [vmem:[%s697 + $0x230] sm:$0xff]
        %v1530 = vld [vmem:[%s697 + $0x238] sm:$0xff]
        %v1531 = vld [vmem:[%s697 + $0x240] sm:$0xff]
        %v1532 = vld [vmem:[%s697 + $0x248] sm:$0xff]
        %v1533 = vld [vmem:[%s697 + $0x250] sm:$0xff]
        %v1534 = vld [vmem:[%s697 + $0x258] sm:$0xff]
        %v1535 = vld [vmem:[%s697 + $0x260] sm:$0xff]
        %v1536 = vld [vmem:[%s697 + $0x268] sm:$0xff]
        %v1537 = vld [vmem:[%s697 + $0x270] sm:$0xff]
        %v1538 = vld [vmem:[%s697 + $0x278] sm:$0xff]
        %v1539 = vld [vmem:[%s697 + $0x280] sm:$0xff]
        %v1540 = vld [vmem:[%s697 + $0x288] sm:$0xff]
        %v1541 = vld [vmem:[%s697 + $0x290] sm:$0xff]
        %v1542 = vld [vmem:[%s697 + $0x298] sm:$0xff]
        %v1543 = vld [vmem:[%s697 + $0x2a0] sm:$0xff]
        %v1544 = vld [vmem:[%s697 + $0x2a8] sm:$0xff]
        %v1545 = vld [vmem:[%s697 + $0x2b0] sm:$0xff]
        %v1546 = vld [vmem:[%s697 + $0x2b8] sm:$0xff]
        %v1547 = vld [vmem:[%s697 + $0x2c0] sm:$0xff]
        %v1548 = vld [vmem:[%s697 + $0x2c8] sm:$0xff]
        %v1549 = vld [vmem:[%s697 + $0x2d0] sm:$0xff]
        %v1550 = vld [vmem:[%s697 + $0x2d8] sm:$0xff]
        %v1551 = vld [vmem:[%s697 + $0x2e0] sm:$0xff]
        %v1552 = vld [vmem:[%s697 + $0x2e8] sm:$0xff]
        %v1553 = vld [vmem:[%s697 + $0x2f0] sm:$0xff]
        %v1554 = vld [vmem:[%s697 + $0x2f8] sm:$0xff]
        %v1555 = vld [vmem:[%s697 + $0x300] sm:$0xff]
        %v1556 = vld [vmem:[%s697 + $0x308] sm:$0xff]
        %v1557 = vld [vmem:[%s697 + $0x310] sm:$0xff]
        %v1558 = vld [vmem:[%s697 + $0x318] sm:$0xff]
        %v1559 = vld [vmem:[%s697 + $0x320] sm:$0xff]
        %v1560 = vld [vmem:[%s697 + $0x328] sm:$0xff]
        %v1561 = vld [vmem:[%s697 + $0x330] sm:$0xff]
        %v1562 = vld [vmem:[%s697 + $0x338] sm:$0xff]
        %v1563 = vld [vmem:[%s697 + $0x340] sm:$0xff]
        %v1564 = vld [vmem:[%s697 + $0x348] sm:$0xff]
        %v1565 = vld [vmem:[%s697 + $0x350] sm:$0xff]
        %v1566 = vld [vmem:[%s697 + $0x358] sm:$0xff]
        %v1567 = vld [vmem:[%s697 + $0x360] sm:$0xff]
        %v1568 = vld [vmem:[%s697 + $0x368] sm:$0xff]
        %v1569 = vld [vmem:[%s697 + $0x370] sm:$0xff]
        %v1570 = vld [vmem:[%s697 + $0x378] sm:$0xff]
        %v1571 = vld [vmem:[%s697 + $0x380] sm:$0xff]
        %v1572 = vld [vmem:[%s697 + $0x388] sm:$0xff]
        %v1573 = vld [vmem:[%s697 + $0x390] sm:$0xff]
        %v1574 = vld [vmem:[%s697 + $0x398] sm:$0xff]
        %v1575 = vld [vmem:[%s697 + $0x3a0] sm:$0xff]
        %v1576 = vld [vmem:[%s697 + $0x3a8] sm:$0xff]
        %v1577 = vld [vmem:[%s697 + $0x3b0] sm:$0xff]
        %v1578 = vld [vmem:[%s697 + $0x3b8] sm:$0xff]
        %v1579 = vld [vmem:[%s697 + $0x3c0] sm:$0xff]
        %v1580 = vld [vmem:[%s697 + $0x3c8] sm:$0xff]
        %v1581 = vld [vmem:[%s697 + $0x3d0] sm:$0xff]
        %v1582 = vld [vmem:[%s697 + $0x3d8] sm:$0xff]
        %v1583 = vld [vmem:[%s697 + $0x3e0] sm:$0xff]
        %v1584 = vld [vmem:[%s697 + $0x3e8] sm:$0xff]
        %v1585 = vld [vmem:[%s697 + $0x3f0] sm:$0xff]
        %v1586 = vld [vmem:[%s697 + $0x3f8] sm:$0xff]
        %v1587 = vunpack.c.l.s8.bf16 %v1459
        %v1588 = vunpack.c.l.s8.bf16 %v1460
        %v1589 = vunpack.c.l.s8.bf16 %v1461
        %v1590 = vunpack.c.l.s8.bf16 %v1462
        %v1591 = vunpack.c.l.s8.bf16 %v1463
        %v1592 = vunpack.c.l.s8.bf16 %v1464
        %v1593 = vunpack.c.l.s8.bf16 %v1465
        %v1594 = vunpack.c.l.s8.bf16 %v1466
        %v1595 = vunpack.c.h.s8.bf16 %v1459
        %v1596 = vunpack.c.h.s8.bf16 %v1460
        %v1597 = vunpack.c.h.s8.bf16 %v1461
        %v1598 = vunpack.c.h.s8.bf16 %v1462
        %v1599 = vunpack.c.h.s8.bf16 %v1463
        %v1600 = vunpack.c.h.s8.bf16 %v1464
        %v1601 = vunpack.c.h.s8.bf16 %v1465
        %v1602 = vunpack.c.h.s8.bf16 %v1466
        %v1603 = vunpack.c.l.s8.bf16 %v1467
        %v1604 = vunpack.c.l.s8.bf16 %v1468
        %v1605 = vunpack.c.l.s8.bf16 %v1469
        %v1606 = vunpack.c.l.s8.bf16 %v1470
        %v1607 = vunpack.c.l.s8.bf16 %v1471
        %v1608 = vunpack.c.l.s8.bf16 %v1472
        %v1609 = vunpack.c.l.s8.bf16 %v1473
        %v1610 = vunpack.c.l.s8.bf16 %v1474
        %v1611 = vunpack.c.h.s8.bf16 %v1467
        %v1612 = vunpack.c.h.s8.bf16 %v1468
        %v1613 = vunpack.c.h.s8.bf16 %v1469
        %v1614 = vunpack.c.h.s8.bf16 %v1470
        %v1615 = vunpack.c.h.s8.bf16 %v1471
        %v1616 = vunpack.c.h.s8.bf16 %v1472
        %v1617 = vunpack.c.h.s8.bf16 %v1473
        %v1618 = vunpack.c.h.s8.bf16 %v1474
        %v1619 = vunpack.c.l.s8.bf16 %v1475
        %v1620 = vunpack.c.l.s8.bf16 %v1476
        %v1621 = vunpack.c.l.s8.bf16 %v1477
        %v1622 = vunpack.c.l.s8.bf16 %v1478
        %v1623 = vunpack.c.l.s8.bf16 %v1479
        %v1624 = vunpack.c.l.s8.bf16 %v1480
        %v1625 = vunpack.c.l.s8.bf16 %v1481
        %v1626 = vunpack.c.l.s8.bf16 %v1482
        %v1627 = vunpack.c.h.s8.bf16 %v1475
        %v1628 = vunpack.c.h.s8.bf16 %v1476
        %v1629 = vunpack.c.h.s8.bf16 %v1477
        %v1630 = vunpack.c.h.s8.bf16 %v1478
        %v1631 = vunpack.c.h.s8.bf16 %v1479
        %v1632 = vunpack.c.h.s8.bf16 %v1480
        %v1633 = vunpack.c.h.s8.bf16 %v1481
        %v1634 = vunpack.c.h.s8.bf16 %v1482
        %v1635 = vunpack.c.l.s8.bf16 %v1483
        %v1636 = vunpack.c.l.s8.bf16 %v1484
        %v1637 = vunpack.c.l.s8.bf16 %v1485
        %v1638 = vunpack.c.l.s8.bf16 %v1486
        %v1639 = vunpack.c.l.s8.bf16 %v1487
        %v1640 = vunpack.c.l.s8.bf16 %v1488
        %v1641 = vunpack.c.l.s8.bf16 %v1489
        %v1642 = vunpack.c.l.s8.bf16 %v1490
        %v1643 = vunpack.c.h.s8.bf16 %v1483
        %v1644 = vunpack.c.h.s8.bf16 %v1484
        %v1645 = vunpack.c.h.s8.bf16 %v1485
        %v1646 = vunpack.c.h.s8.bf16 %v1486
        %v1647 = vunpack.c.h.s8.bf16 %v1487
        %v1648 = vunpack.c.h.s8.bf16 %v1488
        %v1649 = vunpack.c.h.s8.bf16 %v1489
        %v1650 = vunpack.c.h.s8.bf16 %v1490
        %v1651 = vunpack.c.l.s8.bf16 %v1491
        %v1652 = vunpack.c.l.s8.bf16 %v1492
        %v1653 = vunpack.c.l.s8.bf16 %v1493
        %v1654 = vunpack.c.l.s8.bf16 %v1494
        %v1655 = vunpack.c.l.s8.bf16 %v1495
        %v1656 = vunpack.c.l.s8.bf16 %v1496
        %v1657 = vunpack.c.l.s8.bf16 %v1497
        %v1658 = vunpack.c.l.s8.bf16 %v1498
        %v1659 = vunpack.c.h.s8.bf16 %v1491
        %v1660 = vunpack.c.h.s8.bf16 %v1492
        %v1661 = vunpack.c.h.s8.bf16 %v1493
        %v1662 = vunpack.c.h.s8.bf16 %v1494
        %v1663 = vunpack.c.h.s8.bf16 %v1495
        %v1664 = vunpack.c.h.s8.bf16 %v1496
        %v1665 = vunpack.c.h.s8.bf16 %v1497
        %v1666 = vunpack.c.h.s8.bf16 %v1498
        %v1667 = vunpack.c.l.s8.bf16 %v1499
        %v1668 = vunpack.c.l.s8.bf16 %v1500
        %v1669 = vunpack.c.l.s8.bf16 %v1501
        %v1670 = vunpack.c.l.s8.bf16 %v1502
        %v1671 = vunpack.c.l.s8.bf16 %v1503
        %v1672 = vunpack.c.l.s8.bf16 %v1504
        %v1673 = vunpack.c.l.s8.bf16 %v1505
        %v1674 = vunpack.c.l.s8.bf16 %v1506
        %v1675 = vunpack.c.h.s8.bf16 %v1499
        %v1676 = vunpack.c.h.s8.bf16 %v1500
        %v1677 = vunpack.c.h.s8.bf16 %v1501
        %v1678 = vunpack.c.h.s8.bf16 %v1502
        %v1679 = vunpack.c.h.s8.bf16 %v1503
        %v1680 = vunpack.c.h.s8.bf16 %v1504
        %v1681 = vunpack.c.h.s8.bf16 %v1505
        %v1682 = vunpack.c.h.s8.bf16 %v1506
        %v1683 = vunpack.c.l.s8.bf16 %v1507
        %v1684 = vunpack.c.l.s8.bf16 %v1508
        %v1685 = vunpack.c.l.s8.bf16 %v1509
        %v1686 = vunpack.c.l.s8.bf16 %v1510
        %v1687 = vunpack.c.l.s8.bf16 %v1511
        %v1688 = vunpack.c.l.s8.bf16 %v1512
        %v1689 = vunpack.c.l.s8.bf16 %v1513
        %v1690 = vunpack.c.l.s8.bf16 %v1514
        %v1691 = vunpack.c.h.s8.bf16 %v1507
        %v1692 = vunpack.c.h.s8.bf16 %v1508
        %v1693 = vunpack.c.h.s8.bf16 %v1509
        %v1694 = vunpack.c.h.s8.bf16 %v1510
        %v1695 = vunpack.c.h.s8.bf16 %v1511
        %v1696 = vunpack.c.h.s8.bf16 %v1512
        %v1697 = vunpack.c.h.s8.bf16 %v1513
        %v1698 = vunpack.c.h.s8.bf16 %v1514
        %v1699 = vunpack.c.l.s8.bf16 %v1515
        %v1700 = vunpack.c.l.s8.bf16 %v1516
        %v1701 = vunpack.c.l.s8.bf16 %v1517
        %v1702 = vunpack.c.l.s8.bf16 %v1518
        %v1703 = vunpack.c.l.s8.bf16 %v1519
        %v1704 = vunpack.c.l.s8.bf16 %v1520
        %v1705 = vunpack.c.l.s8.bf16 %v1521
        %v1706 = vunpack.c.l.s8.bf16 %v1522
        %v1707 = vunpack.c.h.s8.bf16 %v1515
        %v1708 = vunpack.c.h.s8.bf16 %v1516
        %v1709 = vunpack.c.h.s8.bf16 %v1517
        %v1710 = vunpack.c.h.s8.bf16 %v1518
        %v1711 = vunpack.c.h.s8.bf16 %v1519
        %v1712 = vunpack.c.h.s8.bf16 %v1520
        %v1713 = vunpack.c.h.s8.bf16 %v1521
        %v1714 = vunpack.c.h.s8.bf16 %v1522
        %v1715 = vunpack.c.l.s8.bf16 %v1523
        %v1716 = vunpack.c.l.s8.bf16 %v1524
        %v1717 = vunpack.c.l.s8.bf16 %v1525
        %v1718 = vunpack.c.l.s8.bf16 %v1526
        %v1719 = vunpack.c.l.s8.bf16 %v1527
        %v1720 = vunpack.c.l.s8.bf16 %v1528
        %v1721 = vunpack.c.l.s8.bf16 %v1529
        %v1722 = vunpack.c.l.s8.bf16 %v1530
        %v1723 = vunpack.c.h.s8.bf16 %v1523
        %v1724 = vunpack.c.h.s8.bf16 %v1524
        %v1725 = vunpack.c.h.s8.bf16 %v1525
        %v1726 = vunpack.c.h.s8.bf16 %v1526
        %v1727 = vunpack.c.h.s8.bf16 %v1527
        %v1728 = vunpack.c.h.s8.bf16 %v1528
        %v1729 = vunpack.c.h.s8.bf16 %v1529
        %v1730 = vunpack.c.h.s8.bf16 %v1530
        %v1731 = vunpack.c.l.s8.bf16 %v1531
        %v1732 = vunpack.c.l.s8.bf16 %v1532
        %v1733 = vunpack.c.l.s8.bf16 %v1533
        %v1734 = vunpack.c.l.s8.bf16 %v1534
        %v1735 = vunpack.c.l.s8.bf16 %v1535
        %v1736 = vunpack.c.l.s8.bf16 %v1536
        %v1737 = vunpack.c.l.s8.bf16 %v1537
        %v1738 = vunpack.c.l.s8.bf16 %v1538
        %v1739 = vunpack.c.h.s8.bf16 %v1531
        %v1740 = vunpack.c.h.s8.bf16 %v1532
        %v1741 = vunpack.c.h.s8.bf16 %v1533
        %v1742 = vunpack.c.h.s8.bf16 %v1534
        %v1743 = vunpack.c.h.s8.bf16 %v1535
        %v1744 = vunpack.c.h.s8.bf16 %v1536
        %v1745 = vunpack.c.h.s8.bf16 %v1537
        %v1746 = vunpack.c.h.s8.bf16 %v1538
        %v1747 = vunpack.c.l.s8.bf16 %v1539
        %v1748 = vunpack.c.l.s8.bf16 %v1540
        %v1749 = vunpack.c.l.s8.bf16 %v1541
        %v1750 = vunpack.c.l.s8.bf16 %v1542
        %v1751 = vunpack.c.l.s8.bf16 %v1543
        %v1752 = vunpack.c.l.s8.bf16 %v1544
        %v1753 = vunpack.c.l.s8.bf16 %v1545
        %v1754 = vunpack.c.l.s8.bf16 %v1546
        %v1755 = vunpack.c.h.s8.bf16 %v1539
        %v1756 = vunpack.c.h.s8.bf16 %v1540
        %v1757 = vunpack.c.h.s8.bf16 %v1541
        %v1758 = vunpack.c.h.s8.bf16 %v1542
        %v1759 = vunpack.c.h.s8.bf16 %v1543
        %v1760 = vunpack.c.h.s8.bf16 %v1544
        %v1761 = vunpack.c.h.s8.bf16 %v1545
        %v1762 = vunpack.c.h.s8.bf16 %v1546
        %v1763 = vunpack.c.l.s8.bf16 %v1547
        %v1764 = vunpack.c.l.s8.bf16 %v1548
        %v1765 = vunpack.c.l.s8.bf16 %v1549
        %v1766 = vunpack.c.l.s8.bf16 %v1550
        %v1767 = vunpack.c.l.s8.bf16 %v1551
        %v1768 = vunpack.c.l.s8.bf16 %v1552
        %v1769 = vunpack.c.l.s8.bf16 %v1553
        %v1770 = vunpack.c.l.s8.bf16 %v1554
        %v1771 = vunpack.c.h.s8.bf16 %v1547
        %v1772 = vunpack.c.h.s8.bf16 %v1548
        %v1773 = vunpack.c.h.s8.bf16 %v1549
        %v1774 = vunpack.c.h.s8.bf16 %v1550
        %v1775 = vunpack.c.h.s8.bf16 %v1551
        %v1776 = vunpack.c.h.s8.bf16 %v1552
        %v1777 = vunpack.c.h.s8.bf16 %v1553
        %v1778 = vunpack.c.h.s8.bf16 %v1554
        %v1779 = vunpack.c.l.s8.bf16 %v1555
        %v1780 = vunpack.c.l.s8.bf16 %v1556
        %v1781 = vunpack.c.l.s8.bf16 %v1557
        %v1782 = vunpack.c.l.s8.bf16 %v1558
        %v1783 = vunpack.c.l.s8.bf16 %v1559
        %v1784 = vunpack.c.l.s8.bf16 %v1560
        %v1785 = vunpack.c.l.s8.bf16 %v1561
        %v1786 = vunpack.c.l.s8.bf16 %v1562
        %v1787 = vunpack.c.h.s8.bf16 %v1555
        %v1788 = vunpack.c.h.s8.bf16 %v1556
        %v1789 = vunpack.c.h.s8.bf16 %v1557
        %v1790 = vunpack.c.h.s8.bf16 %v1558
        %v1791 = vunpack.c.h.s8.bf16 %v1559
        %v1792 = vunpack.c.h.s8.bf16 %v1560
        %v1793 = vunpack.c.h.s8.bf16 %v1561
        %v1794 = vunpack.c.h.s8.bf16 %v1562
        %v1795 = vunpack.c.l.s8.bf16 %v1563
        %v1796 = vunpack.c.l.s8.bf16 %v1564
        %v1797 = vunpack.c.l.s8.bf16 %v1565
        %v1798 = vunpack.c.l.s8.bf16 %v1566
        %v1799 = vunpack.c.l.s8.bf16 %v1567
        %v1800 = vunpack.c.l.s8.bf16 %v1568
        %v1801 = vunpack.c.l.s8.bf16 %v1569
        %v1802 = vunpack.c.l.s8.bf16 %v1570
        %v1803 = vunpack.c.h.s8.bf16 %v1563
        %v1804 = vunpack.c.h.s8.bf16 %v1564
        %v1805 = vunpack.c.h.s8.bf16 %v1565
        %v1806 = vunpack.c.h.s8.bf16 %v1566
        %v1807 = vunpack.c.h.s8.bf16 %v1567
        %v1808 = vunpack.c.h.s8.bf16 %v1568
        %v1809 = vunpack.c.h.s8.bf16 %v1569
        %v1810 = vunpack.c.h.s8.bf16 %v1570
        %v1811 = vunpack.c.l.s8.bf16 %v1571
        %v1812 = vunpack.c.l.s8.bf16 %v1572
        %v1813 = vunpack.c.l.s8.bf16 %v1573
        %v1814 = vunpack.c.l.s8.bf16 %v1574
        %v1815 = vunpack.c.l.s8.bf16 %v1575
        %v1816 = vunpack.c.l.s8.bf16 %v1576
        %v1817 = vunpack.c.l.s8.bf16 %v1577
        %v1818 = vunpack.c.l.s8.bf16 %v1578
        %v1819 = vunpack.c.h.s8.bf16 %v1571
        %v1820 = vunpack.c.h.s8.bf16 %v1572
        %v1821 = vunpack.c.h.s8.bf16 %v1573
        %v1822 = vunpack.c.h.s8.bf16 %v1574
        %v1823 = vunpack.c.h.s8.bf16 %v1575
        %v1824 = vunpack.c.h.s8.bf16 %v1576
        %v1825 = vunpack.c.h.s8.bf16 %v1577
        %v1826 = vunpack.c.h.s8.bf16 %v1578
        %v1827 = vunpack.c.l.s8.bf16 %v1579
        %v1828 = vunpack.c.l.s8.bf16 %v1580
        %v1829 = vunpack.c.l.s8.bf16 %v1581
        %v1830 = vunpack.c.l.s8.bf16 %v1582
        %v1831 = vunpack.c.l.s8.bf16 %v1583
        %v1832 = vunpack.c.l.s8.bf16 %v1584
        %v1833 = vunpack.c.l.s8.bf16 %v1585
        %v1834 = vunpack.c.l.s8.bf16 %v1586
        %v1835 = vunpack.c.h.s8.bf16 %v1579
        %v1836 = vunpack.c.h.s8.bf16 %v1580
        %v1837 = vunpack.c.h.s8.bf16 %v1581
        %v1838 = vunpack.c.h.s8.bf16 %v1582
        %v1839 = vunpack.c.h.s8.bf16 %v1583
        %v1840 = vunpack.c.h.s8.bf16 %v1584
        %v1841 = vunpack.c.h.s8.bf16 %v1585
        %v1842 = vunpack.c.h.s8.bf16 %v1586
        %1843 = vmatprep.subr.bf16.mxu0 %v1588
        %1844 = vmatpush1.bf16.msra.mxu0 %v1587
        %1845 = vmatprep.subr.bf16.mxu0 %v1596
        %1846 = vmatpush1.bf16.msra.mxu0 %v1595
        %1847 = vmatprep.subr.bf16.mxu0 %v1604
        %1848 = vmatpush1.bf16.msra.mxu0 %v1603
        %1849 = vmatprep.subr.bf16.mxu0 %v1612
        %1850 = vmatpush1.bf16.msra.mxu0 %v1611
        %1851 = vmatprep.subr.bf16.mxu0 %v1620
        %1852 = vmatpush1.bf16.msra.mxu0 %v1619
        %1853 = vmatprep.subr.bf16.mxu0 %v1628
        %1854 = vmatpush1.bf16.msra.mxu0 %v1627
        %1855 = vmatprep.subr.bf16.mxu0 %v1636
        %1856 = vmatpush1.bf16.msra.mxu0 %v1635
        %1857 = vmatprep.subr.bf16.mxu0 %v1644
        %1858 = vmatpush1.bf16.msra.mxu0 %v1643
        %1859 = vmatprep.subr.bf16.mxu0 %v1652
        %1860 = vmatpush1.bf16.msra.mxu0 %v1651
        %1861 = vmatprep.subr.bf16.mxu0 %v1660
        %1862 = vmatpush1.bf16.msra.mxu0 %v1659
        %1863 = vmatprep.subr.bf16.mxu0 %v1668
        %1864 = vmatpush1.bf16.msra.mxu0 %v1667
        %1865 = vmatprep.subr.bf16.mxu0 %v1676
        %1866 = vmatpush1.bf16.msra.mxu0 %v1675
        %1867 = vmatprep.subr.bf16.mxu0 %v1684
        %1868 = vmatpush1.bf16.msra.mxu0 %v1683
        %1869 = vmatprep.subr.bf16.mxu0 %v1692
        %1870 = vmatpush1.bf16.msra.mxu0 %v1691
        %1871 = vmatprep.subr.bf16.mxu0 %v1700
        %1872 = vmatpush1.bf16.msra.mxu0 %v1699
        %1873 = vmatprep.subr.bf16.mxu0 %v1708
        %1874 = vmatpush1.bf16.msra.mxu0 %v1707
        %1875 = vmatprep.mubr.bf16.mxu0 %v1456
        %1876 = vmatmul.mubr.bf16.gmra.mrb[0].mxu0 %v1455
        %v1877 = vpop.f32.mrb[0].mxu0
        %v1878 = vadd.f32 0.0, %v1877
        %v1879 = vpop.f32.mrb[0].mxu0
        %v1880 = vadd.f32 0.0, %v1879
        %v1881 = vpop.f32.mrb[0].mxu0
        %v1882 = vadd.f32 0.0, %v1881
        %v1883 = vpop.f32.mrb[0].mxu0
        %v1884 = vadd.f32 0.0, %v1883
        %1885 = vdwg.mxu0
        %1886 = vmatprep.subr.bf16.mxu0 %v1716
        %1887 = vmatpush1.bf16.msra.mxu0 %v1715
        %1888 = vmatprep.subr.bf16.mxu0 %v1724
        %1889 = vmatpush1.bf16.msra.mxu0 %v1723
        %1890 = vmatprep.subr.bf16.mxu0 %v1732
        %1891 = vmatpush1.bf16.msra.mxu0 %v1731
        %1892 = vmatprep.subr.bf16.mxu0 %v1740
        %1893 = vmatpush1.bf16.msra.mxu0 %v1739
        %1894 = vmatprep.subr.bf16.mxu0 %v1748
        %1895 = vmatpush1.bf16.msra.mxu0 %v1747
        %1896 = vmatprep.subr.bf16.mxu0 %v1756
        %1897 = vmatpush1.bf16.msra.mxu0 %v1755
        %1898 = vmatprep.subr.bf16.mxu0 %v1764
        %1899 = vmatpush1.bf16.msra.mxu0 %v1763
        %1900 = vmatprep.subr.bf16.mxu0 %v1772
        %1901 = vmatpush1.bf16.msra.mxu0 %v1771
        %1902 = vmatprep.subr.bf16.mxu0 %v1780
        %1903 = vmatpush1.bf16.msra.mxu0 %v1779
        %1904 = vmatprep.subr.bf16.mxu0 %v1788
        %1905 = vmatpush1.bf16.msra.mxu0 %v1787
        %1906 = vmatprep.subr.bf16.mxu0 %v1796
        %1907 = vmatpush1.bf16.msra.mxu0 %v1795
        %1908 = vmatprep.subr.bf16.mxu0 %v1804
        %1909 = vmatpush1.bf16.msra.mxu0 %v1803
        %1910 = vmatprep.subr.bf16.mxu0 %v1812
        %1911 = vmatpush1.bf16.msra.mxu0 %v1811
        %1912 = vmatprep.subr.bf16.mxu0 %v1820
        %1913 = vmatpush1.bf16.msra.mxu0 %v1819
        %1914 = vmatprep.subr.bf16.mxu0 %v1828
        %1915 = vmatpush1.bf16.msra.mxu0 %v1827
        %1916 = vmatprep.subr.bf16.mxu0 %v1836
        %1917 = vmatpush1.bf16.msra.mxu0 %v1835
        %1918 = vmatprep.mubr.bf16.mxu0 %v1458
        %1919 = vmatmul.mubr.bf16.gmra.mrb[0].mxu0 %v1457
        %v1920 = vpop.f32.mrb[0].mxu0
        %v1921 = vadd.f32 %v1878, %v1920
        %v1922 = vpop.f32.mrb[0].mxu0
        %v1923 = vadd.f32 %v1880, %v1922
        %v1924 = vpop.f32.mrb[0].mxu0
        %v1925 = vadd.f32 %v1882, %v1924
        %v1926 = vpop.f32.mrb[0].mxu0
        %v1927 = vadd.f32 %v1884, %v1926
        %1928 = vdwg.mxu0
        %1929 = vmatprep.subr.bf16.mxu0 %v1590
        %1930 = vmatpush1.bf16.msra.mxu0 %v1589
        %1931 = vmatprep.subr.bf16.mxu0 %v1598
        %1932 = vmatpush1.bf16.msra.mxu0 %v1597
        %1933 = vmatprep.subr.bf16.mxu0 %v1606
        %1934 = vmatpush1.bf16.msra.mxu0 %v1605
        %1935 = vmatprep.subr.bf16.mxu0 %v1614
        %1936 = vmatpush1.bf16.msra.mxu0 %v1613
        %1937 = vmatprep.subr.bf16.mxu0 %v1622
        %1938 = vmatpush1.bf16.msra.mxu0 %v1621
        %1939 = vmatprep.subr.bf16.mxu0 %v1630
        %1940 = vmatpush1.bf16.msra.mxu0 %v1629
        %1941 = vmatprep.subr.bf16.mxu0 %v1638
        %1942 = vmatpush1.bf16.msra.mxu0 %v1637
        %1943 = vmatprep.subr.bf16.mxu0 %v1646
        %1944 = vmatpush1.bf16.msra.mxu0 %v1645
        %1945 = vmatprep.subr.bf16.mxu0 %v1654
        %1946 = vmatpush1.bf16.msra.mxu0 %v1653
        %1947 = vmatprep.subr.bf16.mxu0 %v1662
        %1948 = vmatpush1.bf16.msra.mxu0 %v1661
        %1949 = vmatprep.subr.bf16.mxu0 %v1670
        %1950 = vmatpush1.bf16.msra.mxu0 %v1669
        %1951 = vmatprep.subr.bf16.mxu0 %v1678
        %1952 = vmatpush1.bf16.msra.mxu0 %v1677
        %1953 = vmatprep.subr.bf16.mxu0 %v1686
        %1954 = vmatpush1.bf16.msra.mxu0 %v1685
        %1955 = vmatprep.subr.bf16.mxu0 %v1694
        %1956 = vmatpush1.bf16.msra.mxu0 %v1693
        %1957 = vmatprep.subr.bf16.mxu0 %v1702
        %1958 = vmatpush1.bf16.msra.mxu0 %v1701
        %1959 = vmatprep.subr.bf16.mxu0 %v1710
        %1960 = vmatpush1.bf16.msra.mxu0 %v1709
        %1961 = vmatprep.mubr.bf16.mxu0 %v1456
        %1962 = vmatmul.mubr.bf16.gmra.mrb[0].mxu0 %v1455
        %v1963 = vpop.f32.mrb[0].mxu0
        %v1964 = vadd.f32 0.0, %v1963
        %v1965 = vpop.f32.mrb[0].mxu0
        %v1966 = vadd.f32 0.0, %v1965
        %v1967 = vpop.f32.mrb[0].mxu0
        %v1968 = vadd.f32 0.0, %v1967
        %v1969 = vpop.f32.mrb[0].mxu0
        %v1970 = vadd.f32 0.0, %v1969
        %1971 = vdwg.mxu0
        %1972 = vmatprep.subr.bf16.mxu0 %v1718
        %1973 = vmatpush1.bf16.msra.mxu0 %v1717
        %1974 = vmatprep.subr.bf16.mxu0 %v1726
        %1975 = vmatpush1.bf16.msra.mxu0 %v1725
        %1976 = vmatprep.subr.bf16.mxu0 %v1734
        %1977 = vmatpush1.bf16.msra.mxu0 %v1733
        %1978 = vmatprep.subr.bf16.mxu0 %v1742
        %1979 = vmatpush1.bf16.msra.mxu0 %v1741
        %1980 = vmatprep.subr.bf16.mxu0 %v1750
        %1981 = vmatpush1.bf16.msra.mxu0 %v1749
        %1982 = vmatprep.subr.bf16.mxu0 %v1758
        %1983 = vmatpush1.bf16.msra.mxu0 %v1757
        %1984 = vmatprep.subr.bf16.mxu0 %v1766
        %1985 = vmatpush1.bf16.msra.mxu0 %v1765
        %1986 = vmatprep.subr.bf16.mxu0 %v1774
        %1987 = vmatpush1.bf16.msra.mxu0 %v1773
        %1988 = vmatprep.subr.bf16.mxu0 %v1782
        %1989 = vmatpush1.bf16.msra.mxu0 %v1781
        %1990 = vmatprep.subr.bf16.mxu0 %v1790
        %1991 = vmatpush1.bf16.msra.mxu0 %v1789
        %1992 = vmatprep.subr.bf16.mxu0 %v1798
        %1993 = vmatpush1.bf16.msra.mxu0 %v1797
        %1994 = vmatprep.subr.bf16.mxu0 %v1806
        %1995 = vmatpush1.bf16.msra.mxu0 %v1805
        %1996 = vmatprep.subr.bf16.mxu0 %v1814
        %1997 = vmatpush1.bf16.msra.mxu0 %v1813
        %1998 = vmatprep.subr.bf16.mxu0 %v1822
        %1999 = vmatpush1.bf16.msra.mxu0 %v1821
        %2000 = vmatprep.subr.bf16.mxu0 %v1830
        %2001 = vmatpush1.bf16.msra.mxu0 %v1829
        %2002 = vmatprep.subr.bf16.mxu0 %v1838
        %2003 = vmatpush1.bf16.msra.mxu0 %v1837
        %2004 = vmatprep.mubr.bf16.mxu0 %v1458
        %2005 = vmatmul.mubr.bf16.gmra.mrb[0].mxu0 %v1457
        %v2006 = vpop.f32.mrb[0].mxu0
        %v2007 = vadd.f32 %v1964, %v2006
        %v2008 = vpop.f32.mrb[0].mxu0
        %v2009 = vadd.f32 %v1966, %v2008
        %v2010 = vpop.f32.mrb[0].mxu0
        %v2011 = vadd.f32 %v1968, %v2010
        %v2012 = vpop.f32.mrb[0].mxu0
        %v2013 = vadd.f32 %v1970, %v2012
        %2014 = vdwg.mxu0
        %2015 = vmatprep.subr.bf16.mxu0 %v1592
        %2016 = vmatpush1.bf16.msra.mxu0 %v1591
        %2017 = vmatprep.subr.bf16.mxu0 %v1600
        %2018 = vmatpush1.bf16.msra.mxu0 %v1599
        %2019 = vmatprep.subr.bf16.mxu0 %v1608
        %2020 = vmatpush1.bf16.msra.mxu0 %v1607
        %2021 = vmatprep.subr.bf16.mxu0 %v1616
        %2022 = vmatpush1.bf16.msra.mxu0 %v1615
        %2023 = vmatprep.subr.bf16.mxu0 %v1624
        %2024 = vmatpush1.bf16.msra.mxu0 %v1623
        %2025 = vmatprep.subr.bf16.mxu0 %v1632
        %2026 = vmatpush1.bf16.msra.mxu0 %v1631
        %2027 = vmatprep.subr.bf16.mxu0 %v1640
        %2028 = vmatpush1.bf16.msra.mxu0 %v1639
        %2029 = vmatprep.subr.bf16.mxu0 %v1648
        %2030 = vmatpush1.bf16.msra.mxu0 %v1647
        %2031 = vmatprep.subr.bf16.mxu0 %v1656
        %2032 = vmatpush1.bf16.msra.mxu0 %v1655
        %2033 = vmatprep.subr.bf16.mxu0 %v1664
        %2034 = vmatpush1.bf16.msra.mxu0 %v1663
        %2035 = vmatprep.subr.bf16.mxu0 %v1672
        %2036 = vmatpush1.bf16.msra.mxu0 %v1671
        %2037 = vmatprep.subr.bf16.mxu0 %v1680
        %2038 = vmatpush1.bf16.msra.mxu0 %v1679
        %2039 = vmatprep.subr.bf16.mxu0 %v1688
        %2040 = vmatpush1.bf16.msra.mxu0 %v1687
        %2041 = vmatprep.subr.bf16.mxu0 %v1696
        %2042 = vmatpush1.bf16.msra.mxu0 %v1695
        %2043 = vmatprep.subr.bf16.mxu0 %v1704
        %2044 = vmatpush1.bf16.msra.mxu0 %v1703
        %2045 = vmatprep.subr.bf16.mxu0 %v1712
        %2046 = vmatpush1.bf16.msra.mxu0 %v1711
        %2047 = vmatprep.mubr.bf16.mxu0 %v1456
        %2048 = vmatmul.mubr.bf16.gmra.mrb[0].mxu0 %v1455
        %v2049 = vpop.f32.mrb[0].mxu0
        %v2050 = vadd.f32 0.0, %v2049
        %v2051 = vpop.f32.mrb[0].mxu0
        %v2052 = vadd.f32 0.0, %v2051
        %v2053 = vpop.f32.mrb[0].mxu0
        %v2054 = vadd.f32 0.0, %v2053
        %v2055 = vpop.f32.mrb[0].mxu0
        %v2056 = vadd.f32 0.0, %v2055
        %2057 = vdwg.mxu0
        %2058 = vmatprep.subr.bf16.mxu0 %v1720
        %2059 = vmatpush1.bf16.msra.mxu0 %v1719
        %2060 = vmatprep.subr.bf16.mxu0 %v1728
        %2061 = vmatpush1.bf16.msra.mxu0 %v1727
        %2062 = vmatprep.subr.bf16.mxu0 %v1736
        %2063 = vmatpush1.bf16.msra.mxu0 %v1735
        %2064 = vmatprep.subr.bf16.mxu0 %v1744
        %2065 = vmatpush1.bf16.msra.mxu0 %v1743
        %2066 = vmatprep.subr.bf16.mxu0 %v1752
        %2067 = vmatpush1.bf16.msra.mxu0 %v1751
        %2068 = vmatprep.subr.bf16.mxu0 %v1760
        %2069 = vmatpush1.bf16.msra.mxu0 %v1759
        %2070 = vmatprep.subr.bf16.mxu0 %v1768
        %2071 = vmatpush1.bf16.msra.mxu0 %v1767
        %2072 = vmatprep.subr.bf16.mxu0 %v1776
        %2073 = vmatpush1.bf16.msra.mxu0 %v1775
        %2074 = vmatprep.subr.bf16.mxu0 %v1784
        %2075 = vmatpush1.bf16.msra.mxu0 %v1783
        %2076 = vmatprep.subr.bf16.mxu0 %v1792
        %2077 = vmatpush1.bf16.msra.mxu0 %v1791
        %2078 = vmatprep.subr.bf16.mxu0 %v1800
        %2079 = vmatpush1.bf16.msra.mxu0 %v1799
        %2080 = vmatprep.subr.bf16.mxu0 %v1808
        %2081 = vmatpush1.bf16.msra.mxu0 %v1807
        %2082 = vmatprep.subr.bf16.mxu0 %v1816
        %2083 = vmatpush1.bf16.msra.mxu0 %v1815
        %2084 = vmatprep.subr.bf16.mxu0 %v1824
        %2085 = vmatpush1.bf16.msra.mxu0 %v1823
        %2086 = vmatprep.subr.bf16.mxu0 %v1832
        %2087 = vmatpush1.bf16.msra.mxu0 %v1831
        %2088 = vmatprep.subr.bf16.mxu0 %v1840
        %2089 = vmatpush1.bf16.msra.mxu0 %v1839
        %2090 = vmatprep.mubr.bf16.mxu0 %v1458
        %2091 = vmatmul.mubr.bf16.gmra.mrb[0].mxu0 %v1457
        %v2092 = vpop.f32.mrb[0].mxu0
        %v2093 = vadd.f32 %v2050, %v2092
        %v2094 = vpop.f32.mrb[0].mxu0
        %v2095 = vadd.f32 %v2052, %v2094
        %v2096 = vpop.f32.mrb[0].mxu0
        %v2097 = vadd.f32 %v2054, %v2096
        %v2098 = vpop.f32.mrb[0].mxu0
        %v2099 = vadd.f32 %v2056, %v2098
        %2100 = vdwg.mxu0
        %2101 = vmatprep.subr.bf16.mxu0 %v1594
        %2102 = vmatpush1.bf16.msra.mxu0 %v1593
        %2103 = vmatprep.subr.bf16.mxu0 %v1602
        %2104 = vmatpush1.bf16.msra.mxu0 %v1601
        %2105 = vmatprep.subr.bf16.mxu0 %v1610
        %2106 = vmatpush1.bf16.msra.mxu0 %v1609
        %2107 = vmatprep.subr.bf16.mxu0 %v1618
        %2108 = vmatpush1.bf16.msra.mxu0 %v1617
        %2109 = vmatprep.subr.bf16.mxu0 %v1626
        %2110 = vmatpush1.bf16.msra.mxu0 %v1625
        %2111 = vmatprep.subr.bf16.mxu0 %v1634
        %2112 = vmatpush1.bf16.msra.mxu0 %v1633
        %2113 = vmatprep.subr.bf16.mxu0 %v1642
        %2114 = vmatpush1.bf16.msra.mxu0 %v1641
        %2115 = vmatprep.subr.bf16.mxu0 %v1650
        %2116 = vmatpush1.bf16.msra.mxu0 %v1649
        %2117 = vmatprep.subr.bf16.mxu0 %v1658
        %2118 = vmatpush1.bf16.msra.mxu0 %v1657
        %2119 = vmatprep.subr.bf16.mxu0 %v1666
        %2120 = vmatpush1.bf16.msra.mxu0 %v1665
        %2121 = vmatprep.subr.bf16.mxu0 %v1674
        %2122 = vmatpush1.bf16.msra.mxu0 %v1673
        %2123 = vmatprep.subr.bf16.mxu0 %v1682
        %2124 = vmatpush1.bf16.msra.mxu0 %v1681
        %2125 = vmatprep.subr.bf16.mxu0 %v1690
        %2126 = vmatpush1.bf16.msra.mxu0 %v1689
        %2127 = vmatprep.subr.bf16.mxu0 %v1698
        %2128 = vmatpush1.bf16.msra.mxu0 %v1697
        %2129 = vmatprep.subr.bf16.mxu0 %v1706
        %2130 = vmatpush1.bf16.msra.mxu0 %v1705
        %2131 = vmatprep.subr.bf16.mxu0 %v1714
        %2132 = vmatpush1.bf16.msra.mxu0 %v1713
        %2133 = vmatprep.mubr.bf16.mxu0 %v1456
        %2134 = vmatmul.mubr.bf16.gmra.mrb[0].mxu0 %v1455
        %v2135 = vpop.f32.mrb[0].mxu0
        %v2136 = vadd.f32 0.0, %v2135
        %v2137 = vpop.f32.mrb[0].mxu0
        %v2138 = vadd.f32 0.0, %v2137
        %v2139 = vpop.f32.mrb[0].mxu0
        %v2140 = vadd.f32 0.0, %v2139
        %v2141 = vpop.f32.mrb[0].mxu0
        %v2142 = vadd.f32 0.0, %v2141
        %2143 = vdwg.mxu0
        %2144 = vmatprep.subr.bf16.mxu0 %v1722
        %2145 = vmatpush1.bf16.msra.mxu0 %v1721
        %2146 = vmatprep.subr.bf16.mxu0 %v1730
        %2147 = vmatpush1.bf16.msra.mxu0 %v1729
        %2148 = vmatprep.subr.bf16.mxu0 %v1738
        %2149 = vmatpush1.bf16.msra.mxu0 %v1737
        %2150 = vmatprep.subr.bf16.mxu0 %v1746
        %2151 = vmatpush1.bf16.msra.mxu0 %v1745
        %2152 = vmatprep.subr.bf16.mxu0 %v1754
        %2153 = vmatpush1.bf16.msra.mxu0 %v1753
        %2154 = vmatprep.subr.bf16.mxu0 %v1762
        %2155 = vmatpush1.bf16.msra.mxu0 %v1761
        %2156 = vmatprep.subr.bf16.mxu0 %v1770
        %2157 = vmatpush1.bf16.msra.mxu0 %v1769
        %2158 = vmatprep.subr.bf16.mxu0 %v1778
        %2159 = vmatpush1.bf16.msra.mxu0 %v1777
        %2160 = vmatprep.subr.bf16.mxu0 %v1786
        %2161 = vmatpush1.bf16.msra.mxu0 %v1785
        %2162 = vmatprep.subr.bf16.mxu0 %v1794
        %2163 = vmatpush1.bf16.msra.mxu0 %v1793
        %2164 = vmatprep.subr.bf16.mxu0 %v1802
        %2165 = vmatpush1.bf16.msra.mxu0 %v1801
        %2166 = vmatprep.subr.bf16.mxu0 %v1810
        %2167 = vmatpush1.bf16.msra.mxu0 %v1809
        %2168 = vmatprep.subr.bf16.mxu0 %v1818
        %2169 = vmatpush1.bf16.msra.mxu0 %v1817
        %2170 = vmatprep.subr.bf16.mxu0 %v1826
        %2171 = vmatpush1.bf16.msra.mxu0 %v1825
        %2172 = vmatprep.subr.bf16.mxu0 %v1834
        %2173 = vmatpush1.bf16.msra.mxu0 %v1833
        %2174 = vmatprep.subr.bf16.mxu0 %v1842
        %2175 = vmatpush1.bf16.msra.mxu0 %v1841
        %2176 = vmatprep.mubr.bf16.mxu0 %v1458
        %2177 = vmatmul.mubr.bf16.gmra.mrb[0].mxu0 %v1457
        %v2178 = vpop.f32.mrb[0].mxu0
        %v2179 = vadd.f32 %v2136, %v2178
        %v2180 = vpop.f32.mrb[0].mxu0
        %v2181 = vadd.f32 %v2138, %v2180
        %v2182 = vpop.f32.mrb[0].mxu0
        %v2183 = vadd.f32 %v2140, %v2182
        %v2184 = vpop.f32.mrb[0].mxu0
        %v2185 = vadd.f32 %v2142, %v2184
        %2186 = vdwg.mxu0
        %v2187 = vld [vmem:[%s830] sm:$0xff]
        %v2189 = vlaneseq
        %v2190 = vshrl.u32 %v2189, 7
        %v2191 = vsub.s32 0, %v2190
        %v2192 = vrot.slane %v2187, %v2191
        %v2193 = vlaneseq
        %v2194 = vshrl.u32 %v2193, 7
        %v2195 = vsub.s32 1, %v2194
        %v2196 = vrot.slane %v2187, %v2195
        %v2197 = vlaneseq
        %v2198 = vshrl.u32 %v2197, 7
        %v2199 = vsub.s32 2, %v2198
        %v2200 = vrot.slane %v2187, %v2199
        %v2201 = vlaneseq
        %v2202 = vshrl.u32 %v2201, 7
        %v2203 = vsub.s32 3, %v2202
        %v2204 = vrot.slane %v2187, %v2203
        %v2205 = vlaneseq
        %v2206 = vshrl.u32 %v2205, 7
        %v2207 = vsub.s32 4, %v2206
        %v2208 = vrot.slane %v2187, %v2207
        %v2209 = vlaneseq
        %v2210 = vshrl.u32 %v2209, 7
        %v2211 = vsub.s32 5, %v2210
        %v2212 = vrot.slane %v2187, %v2211
        %v2213 = vlaneseq
        %v2214 = vshrl.u32 %v2213, 7
        %v2215 = vsub.s32 6, %v2214
        %v2216 = vrot.slane %v2187, %v2215
        %v2217 = vlaneseq
        %v2218 = vshrl.u32 %v2217, 7
        %v2219 = vsub.s32 7, %v2218
        %v2220 = vrot.slane %v2187, %v2219
        %v2229 = vmul.f32 %v1921, %v2192
        %v2230 = vmul.f32 %v1923, %v2196
        %v2231 = vmul.f32 %v2007, %v2200
        %v2232 = vmul.f32 %v2009, %v2204
        %v2233 = vmul.f32 %v2093, %v2208
        %v2234 = vmul.f32 %v2095, %v2212
        %v2235 = vmul.f32 %v2179, %v2216
        %v2236 = vmul.f32 %v2181, %v2220
        %v2237 = vmul.f32 %v1925, %v2192
        %v2238 = vmul.f32 %v1927, %v2196
        %v2239 = vmul.f32 %v2011, %v2200
        %v2240 = vmul.f32 %v2013, %v2204
        %v2241 = vmul.f32 %v2097, %v2208
        %v2242 = vmul.f32 %v2099, %v2212
        %v2243 = vmul.f32 %v2183, %v2216
        %v2244 = vmul.f32 %v2185, %v2220
        %v2245 = vld [vmem:[%s706] sm:$0xff]
        %v2247 = vlaneseq
        %v2248 = vshrl.u32 %v2247, 7
        %v2249 = vsub.s32 0, %v2248
        %v2250 = vrot.slane %v2245, %v2249
        %v2251 = vlaneseq
        %v2252 = vshrl.u32 %v2251, 7
        %v2253 = vsub.s32 1, %v2252
        %v2254 = vrot.slane %v2245, %v2253
        %v2255 = vlaneseq
        %v2256 = vshrl.u32 %v2255, 7
        %v2257 = vsub.s32 2, %v2256
        %v2258 = vrot.slane %v2245, %v2257
        %v2259 = vlaneseq
        %v2260 = vshrl.u32 %v2259, 7
        %v2261 = vsub.s32 3, %v2260
        %v2262 = vrot.slane %v2245, %v2261
        %v2263 = vlaneseq
        %v2264 = vshrl.u32 %v2263, 7
        %v2265 = vsub.s32 4, %v2264
        %v2266 = vrot.slane %v2245, %v2265
        %v2267 = vlaneseq
        %v2268 = vshrl.u32 %v2267, 7
        %v2269 = vsub.s32 5, %v2268
        %v2270 = vrot.slane %v2245, %v2269
        %v2271 = vlaneseq
        %v2272 = vshrl.u32 %v2271, 7
        %v2273 = vsub.s32 6, %v2272
        %v2274 = vrot.slane %v2245, %v2273
        %v2275 = vlaneseq
        %v2276 = vshrl.u32 %v2275, 7
        %v2277 = vsub.s32 7, %v2276
        %v2278 = vrot.slane %v2245, %v2277
        %v2287 = vadd.f32 %v2229, %v2250
        %v2288 = vadd.f32 %v2230, %v2254
        %v2289 = vadd.f32 %v2231, %v2258
        %v2290 = vadd.f32 %v2232, %v2262
        %v2291 = vadd.f32 %v2233, %v2266
        %v2292 = vadd.f32 %v2234, %v2270
        %v2293 = vadd.f32 %v2235, %v2274
        %v2294 = vadd.f32 %v2236, %v2278
        %v2295 = vadd.f32 %v2237, %v2250
        %v2296 = vadd.f32 %v2238, %v2254
        %v2297 = vadd.f32 %v2239, %v2258
        %v2298 = vadd.f32 %v2240, %v2262
        %v2299 = vadd.f32 %v2241, %v2266
        %v2300 = vadd.f32 %v2242, %v2270
        %v2301 = vadd.f32 %v2243, %v2274
        %v2302 = vadd.f32 %v2244, %v2278
        %v2303 = vmax.f32 %v2287, 0.0
        %v2304 = vmax.f32 %v2288, 0.0
        %v2305 = vmax.f32 %v2289, 0.0
        %v2306 = vmax.f32 %v2290, 0.0
        %v2307 = vmax.f32 %v2291, 0.0
        %v2308 = vmax.f32 %v2292, 0.0
        %v2309 = vmax.f32 %v2293, 0.0
        %v2310 = vmax.f32 %v2294, 0.0
        %v2311 = vmax.f32 %v2295, 0.0
        %v2312 = vmax.f32 %v2296, 0.0
        %v2313 = vmax.f32 %v2297, 0.0
        %v2314 = vmax.f32 %v2298, 0.0
        %v2315 = vmax.f32 %v2299, 0.0
        %v2316 = vmax.f32 %v2300, 0.0
        %v2317 = vmax.f32 %v2301, 0.0
        %v2318 = vmax.f32 %v2302, 0.0
        %v2319 = vpack.c.bf16 %v2311, %v2303
        %v2320 = vpack.c.bf16 %v2312, %v2304
        %v2321 = vpack.c.bf16 %v2313, %v2305
        %v2322 = vpack.c.bf16 %v2314, %v2306
        %v2323 = vpack.c.bf16 %v2315, %v2307
        %v2324 = vpack.c.bf16 %v2316, %v2308
        %v2325 = vpack.c.bf16 %v2317, %v2309
        %v2326 = vpack.c.bf16 %v2318, %v2310
        %v2327 = vld [vmem:[%s715] sm:$0xff]
        %v2328 = vld [vmem:[%s715 + $0x8] sm:$0xff]
        %v2329 = vld [vmem:[%s715 + $0x10] sm:$0xff]
        %v2330 = vld [vmem:[%s715 + $0x18] sm:$0xff]
        %v2331 = vld [vmem:[%s715 + $0x20] sm:$0xff]
        %v2332 = vld [vmem:[%s715 + $0x28] sm:$0xff]
        %v2333 = vld [vmem:[%s715 + $0x30] sm:$0xff]
        %v2334 = vld [vmem:[%s715 + $0x38] sm:$0xff]
        %v2335 = vld [vmem:[%s715 + $0x40] sm:$0xff]
        %v2336 = vld [vmem:[%s715 + $0x48] sm:$0xff]
        %v2337 = vld [vmem:[%s715 + $0x50] sm:$0xff]
        %v2338 = vld [vmem:[%s715 + $0x58] sm:$0xff]
        %v2339 = vld [vmem:[%s715 + $0x60] sm:$0xff]
        %v2340 = vld [vmem:[%s715 + $0x68] sm:$0xff]
        %v2341 = vld [vmem:[%s715 + $0x70] sm:$0xff]
        %v2342 = vld [vmem:[%s715 + $0x78] sm:$0xff]
        %v2343 = vld [vmem:[%s715 + $0x80] sm:$0xff]
        %v2344 = vld [vmem:[%s715 + $0x88] sm:$0xff]
        %v2345 = vld [vmem:[%s715 + $0x90] sm:$0xff]
        %v2346 = vld [vmem:[%s715 + $0x98] sm:$0xff]
        %v2347 = vld [vmem:[%s715 + $0xa0] sm:$0xff]
        %v2348 = vld [vmem:[%s715 + $0xa8] sm:$0xff]
        %v2349 = vld [vmem:[%s715 + $0xb0] sm:$0xff]
        %v2350 = vld [vmem:[%s715 + $0xb8] sm:$0xff]
        %v2351 = vld [vmem:[%s715 + $0xc0] sm:$0xff]
        %v2352 = vld [vmem:[%s715 + $0xc8] sm:$0xff]
        %v2353 = vld [vmem:[%s715 + $0xd0] sm:$0xff]
        %v2354 = vld [vmem:[%s715 + $0xd8] sm:$0xff]
        %v2355 = vld [vmem:[%s715 + $0xe0] sm:$0xff]
        %v2356 = vld [vmem:[%s715 + $0xe8] sm:$0xff]
        %v2357 = vld [vmem:[%s715 + $0xf0] sm:$0xff]
        %v2358 = vld [vmem:[%s715 + $0xf8] sm:$0xff]
        %v2359 = vld [vmem:[%s715 + $0x100] sm:$0xff]
        %v2360 = vld [vmem:[%s715 + $0x108] sm:$0xff]
        %v2361 = vld [vmem:[%s715 + $0x110] sm:$0xff]
        %v2362 = vld [vmem:[%s715 + $0x118] sm:$0xff]
        %v2363 = vld [vmem:[%s715 + $0x120] sm:$0xff]
        %v2364 = vld [vmem:[%s715 + $0x128] sm:$0xff]
        %v2365 = vld [vmem:[%s715 + $0x130] sm:$0xff]
        %v2366 = vld [vmem:[%s715 + $0x138] sm:$0xff]
        %v2367 = vld [vmem:[%s715 + $0x140] sm:$0xff]
        %v2368 = vld [vmem:[%s715 + $0x148] sm:$0xff]
        %v2369 = vld [vmem:[%s715 + $0x150] sm:$0xff]
        %v2370 = vld [vmem:[%s715 + $0x158] sm:$0xff]
        %v2371 = vld [vmem:[%s715 + $0x160] sm:$0xff]
        %v2372 = vld [vmem:[%s715 + $0x168] sm:$0xff]
        %v2373 = vld [vmem:[%s715 + $0x170] sm:$0xff]
        %v2374 = vld [vmem:[%s715 + $0x178] sm:$0xff]
        %v2375 = vld [vmem:[%s715 + $0x180] sm:$0xff]
        %v2376 = vld [vmem:[%s715 + $0x188] sm:$0xff]
        %v2377 = vld [vmem:[%s715 + $0x190] sm:$0xff]
        %v2378 = vld [vmem:[%s715 + $0x198] sm:$0xff]
        %v2379 = vld [vmem:[%s715 + $0x1a0] sm:$0xff]
        %v2380 = vld [vmem:[%s715 + $0x1a8] sm:$0xff]
        %v2381 = vld [vmem:[%s715 + $0x1b0] sm:$0xff]
        %v2382 = vld [vmem:[%s715 + $0x1b8] sm:$0xff]
        %v2383 = vld [vmem:[%s715 + $0x1c0] sm:$0xff]
        %v2384 = vld [vmem:[%s715 + $0x1c8] sm:$0xff]
        %v2385 = vld [vmem:[%s715 + $0x1d0] sm:$0xff]
        %v2386 = vld [vmem:[%s715 + $0x1d8] sm:$0xff]
        %v2387 = vld [vmem:[%s715 + $0x1e0] sm:$0xff]
        %v2388 = vld [vmem:[%s715 + $0x1e8] sm:$0xff]
        %v2389 = vld [vmem:[%s715 + $0x1f0] sm:$0xff]
        %v2390 = vld [vmem:[%s715 + $0x1f8] sm:$0xff]
        %v2391 = vld [vmem:[%s715 + $0x200] sm:$0xff]
        %v2392 = vld [vmem:[%s715 + $0x208] sm:$0xff]
        %v2393 = vld [vmem:[%s715 + $0x210] sm:$0xff]
        %v2394 = vld [vmem:[%s715 + $0x218] sm:$0xff]
        %v2395 = vld [vmem:[%s715 + $0x220] sm:$0xff]
        %v2396 = vld [vmem:[%s715 + $0x228] sm:$0xff]
        %v2397 = vld [vmem:[%s715 + $0x230] sm:$0xff]
        %v2398 = vld [vmem:[%s715 + $0x238] sm:$0xff]
        %v2399 = vld [vmem:[%s715 + $0x240] sm:$0xff]
        %v2400 = vld [vmem:[%s715 + $0x248] sm:$0xff]
        %v2401 = vld [vmem:[%s715 + $0x250] sm:$0xff]
        %v2402 = vld [vmem:[%s715 + $0x258] sm:$0xff]
        %v2403 = vld [vmem:[%s715 + $0x260] sm:$0xff]
        %v2404 = vld [vmem:[%s715 + $0x268] sm:$0xff]
        %v2405 = vld [vmem:[%s715 + $0x270] sm:$0xff]
        %v2406 = vld [vmem:[%s715 + $0x278] sm:$0xff]
        %v2407 = vld [vmem:[%s715 + $0x280] sm:$0xff]
        %v2408 = vld [vmem:[%s715 + $0x288] sm:$0xff]
        %v2409 = vld [vmem:[%s715 + $0x290] sm:$0xff]
        %v2410 = vld [vmem:[%s715 + $0x298] sm:$0xff]
        %v2411 = vld [vmem:[%s715 + $0x2a0] sm:$0xff]
        %v2412 = vld [vmem:[%s715 + $0x2a8] sm:$0xff]
        %v2413 = vld [vmem:[%s715 + $0x2b0] sm:$0xff]
        %v2414 = vld [vmem:[%s715 + $0x2b8] sm:$0xff]
        %v2415 = vld [vmem:[%s715 + $0x2c0] sm:$0xff]
        %v2416 = vld [vmem:[%s715 + $0x2c8] sm:$0xff]
        %v2417 = vld [vmem:[%s715 + $0x2d0] sm:$0xff]
        %v2418 = vld [vmem:[%s715 + $0x2d8] sm:$0xff]
        %v2419 = vld [vmem:[%s715 + $0x2e0] sm:$0xff]
        %v2420 = vld [vmem:[%s715 + $0x2e8] sm:$0xff]
        %v2421 = vld [vmem:[%s715 + $0x2f0] sm:$0xff]
        %v2422 = vld [vmem:[%s715 + $0x2f8] sm:$0xff]
        %v2423 = vld [vmem:[%s715 + $0x300] sm:$0xff]
        %v2424 = vld [vmem:[%s715 + $0x308] sm:$0xff]
        %v2425 = vld [vmem:[%s715 + $0x310] sm:$0xff]
        %v2426 = vld [vmem:[%s715 + $0x318] sm:$0xff]
        %v2427 = vld [vmem:[%s715 + $0x320] sm:$0xff]
        %v2428 = vld [vmem:[%s715 + $0x328] sm:$0xff]
        %v2429 = vld [vmem:[%s715 + $0x330] sm:$0xff]
        %v2430 = vld [vmem:[%s715 + $0x338] sm:$0xff]
        %v2431 = vld [vmem:[%s715 + $0x340] sm:$0xff]
        %v2432 = vld [vmem:[%s715 + $0x348] sm:$0xff]
        %v2433 = vld [vmem:[%s715 + $0x350] sm:$0xff]
        %v2434 = vld [vmem:[%s715 + $0x358] sm:$0xff]
        %v2435 = vld [vmem:[%s715 + $0x360] sm:$0xff]
        %v2436 = vld [vmem:[%s715 + $0x368] sm:$0xff]
        %v2437 = vld [vmem:[%s715 + $0x370] sm:$0xff]
        %v2438 = vld [vmem:[%s715 + $0x378] sm:$0xff]
        %v2439 = vld [vmem:[%s715 + $0x380] sm:$0xff]
        %v2440 = vld [vmem:[%s715 + $0x388] sm:$0xff]
        %v2441 = vld [vmem:[%s715 + $0x390] sm:$0xff]
        %v2442 = vld [vmem:[%s715 + $0x398] sm:$0xff]
        %v2443 = vld [vmem:[%s715 + $0x3a0] sm:$0xff]
        %v2444 = vld [vmem:[%s715 + $0x3a8] sm:$0xff]
        %v2445 = vld [vmem:[%s715 + $0x3b0] sm:$0xff]
        %v2446 = vld [vmem:[%s715 + $0x3b8] sm:$0xff]
        %v2447 = vld [vmem:[%s715 + $0x3c0] sm:$0xff]
        %v2448 = vld [vmem:[%s715 + $0x3c8] sm:$0xff]
        %v2449 = vld [vmem:[%s715 + $0x3d0] sm:$0xff]
        %v2450 = vld [vmem:[%s715 + $0x3d8] sm:$0xff]
        %v2451 = vld [vmem:[%s715 + $0x3e0] sm:$0xff]
        %v2452 = vld [vmem:[%s715 + $0x3e8] sm:$0xff]
        %v2453 = vld [vmem:[%s715 + $0x3f0] sm:$0xff]
        %v2454 = vld [vmem:[%s715 + $0x3f8] sm:$0xff]
        %v2455 = vunpack.c.l.s8.bf16 %v2327
        %v2456 = vunpack.c.l.s8.bf16 %v2328
        %v2457 = vunpack.c.l.s8.bf16 %v2329
        %v2458 = vunpack.c.l.s8.bf16 %v2330
        %v2459 = vunpack.c.h.s8.bf16 %v2327
        %v2460 = vunpack.c.h.s8.bf16 %v2328
        %v2461 = vunpack.c.h.s8.bf16 %v2329
        %v2462 = vunpack.c.h.s8.bf16 %v2330
        %v2463 = vunpack.c.l.s8.bf16 %v2331
        %v2464 = vunpack.c.l.s8.bf16 %v2332
        %v2465 = vunpack.c.l.s8.bf16 %v2333
        %v2466 = vunpack.c.l.s8.bf16 %v2334
        %v2467 = vunpack.c.h.s8.bf16 %v2331
        %v2468 = vunpack.c.h.s8.bf16 %v2332
        %v2469 = vunpack.c.h.s8.bf16 %v2333
        %v2470 = vunpack.c.h.s8.bf16 %v2334
        %v2471 = vunpack.c.l.s8.bf16 %v2335
        %v2472 = vunpack.c.l.s8.bf16 %v2336
        %v2473 = vunpack.c.l.s8.bf16 %v2337
        %v2474 = vunpack.c.l.s8.bf16 %v2338
        %v2475 = vunpack.c.h.s8.bf16 %v2335
        %v2476 = vunpack.c.h.s8.bf16 %v2336
        %v2477 = vunpack.c.h.s8.bf16 %v2337
        %v2478 = vunpack.c.h.s8.bf16 %v2338
        %v2479 = vunpack.c.l.s8.bf16 %v2339
        %v2480 = vunpack.c.l.s8.bf16 %v2340
        %v2481 = vunpack.c.l.s8.bf16 %v2341
        %v2482 = vunpack.c.l.s8.bf16 %v2342
        %v2483 = vunpack.c.h.s8.bf16 %v2339
        %v2484 = vunpack.c.h.s8.bf16 %v2340
        %v2485 = vunpack.c.h.s8.bf16 %v2341
        %v2486 = vunpack.c.h.s8.bf16 %v2342
        %v2487 = vunpack.c.l.s8.bf16 %v2343
        %v2488 = vunpack.c.l.s8.bf16 %v2344
        %v2489 = vunpack.c.l.s8.bf16 %v2345
        %v2490 = vunpack.c.l.s8.bf16 %v2346
        %v2491 = vunpack.c.h.s8.bf16 %v2343
        %v2492 = vunpack.c.h.s8.bf16 %v2344
        %v2493 = vunpack.c.h.s8.bf16 %v2345
        %v2494 = vunpack.c.h.s8.bf16 %v2346
        %v2495 = vunpack.c.l.s8.bf16 %v2347
        %v2496 = vunpack.c.l.s8.bf16 %v2348
        %v2497 = vunpack.c.l.s8.bf16 %v2349
        %v2498 = vunpack.c.l.s8.bf16 %v2350
        %v2499 = vunpack.c.h.s8.bf16 %v2347
        %v2500 = vunpack.c.h.s8.bf16 %v2348
        %v2501 = vunpack.c.h.s8.bf16 %v2349
        %v2502 = vunpack.c.h.s8.bf16 %v2350
        %v2503 = vunpack.c.l.s8.bf16 %v2351
        %v2504 = vunpack.c.l.s8.bf16 %v2352
        %v2505 = vunpack.c.l.s8.bf16 %v2353
        %v2506 = vunpack.c.l.s8.bf16 %v2354
        %v2507 = vunpack.c.h.s8.bf16 %v2351
        %v2508 = vunpack.c.h.s8.bf16 %v2352
        %v2509 = vunpack.c.h.s8.bf16 %v2353
        %v2510 = vunpack.c.h.s8.bf16 %v2354
        %v2511 = vunpack.c.l.s8.bf16 %v2355
        %v2512 = vunpack.c.l.s8.bf16 %v2356
        %v2513 = vunpack.c.l.s8.bf16 %v2357
        %v2514 = vunpack.c.l.s8.bf16 %v2358
        %v2515 = vunpack.c.h.s8.bf16 %v2355
        %v2516 = vunpack.c.h.s8.bf16 %v2356
        %v2517 = vunpack.c.h.s8.bf16 %v2357
        %v2518 = vunpack.c.h.s8.bf16 %v2358
        %v2519 = vunpack.c.l.s8.bf16 %v2359
        %v2520 = vunpack.c.l.s8.bf16 %v2360
        %v2521 = vunpack.c.l.s8.bf16 %v2361
        %v2522 = vunpack.c.l.s8.bf16 %v2362
        %v2523 = vunpack.c.h.s8.bf16 %v2359
        %v2524 = vunpack.c.h.s8.bf16 %v2360
        %v2525 = vunpack.c.h.s8.bf16 %v2361
        %v2526 = vunpack.c.h.s8.bf16 %v2362
        %v2527 = vunpack.c.l.s8.bf16 %v2363
        %v2528 = vunpack.c.l.s8.bf16 %v2364
        %v2529 = vunpack.c.l.s8.bf16 %v2365
        %v2530 = vunpack.c.l.s8.bf16 %v2366
        %v2531 = vunpack.c.h.s8.bf16 %v2363
        %v2532 = vunpack.c.h.s8.bf16 %v2364
        %v2533 = vunpack.c.h.s8.bf16 %v2365
        %v2534 = vunpack.c.h.s8.bf16 %v2366
        %v2535 = vunpack.c.l.s8.bf16 %v2367
        %v2536 = vunpack.c.l.s8.bf16 %v2368
        %v2537 = vunpack.c.l.s8.bf16 %v2369
        %v2538 = vunpack.c.l.s8.bf16 %v2370
        %v2539 = vunpack.c.h.s8.bf16 %v2367
        %v2540 = vunpack.c.h.s8.bf16 %v2368
        %v2541 = vunpack.c.h.s8.bf16 %v2369
        %v2542 = vunpack.c.h.s8.bf16 %v2370
        %v2543 = vunpack.c.l.s8.bf16 %v2371
        %v2544 = vunpack.c.l.s8.bf16 %v2372
        %v2545 = vunpack.c.l.s8.bf16 %v2373
        %v2546 = vunpack.c.l.s8.bf16 %v2374
        %v2547 = vunpack.c.h.s8.bf16 %v2371
        %v2548 = vunpack.c.h.s8.bf16 %v2372
        %v2549 = vunpack.c.h.s8.bf16 %v2373
        %v2550 = vunpack.c.h.s8.bf16 %v2374
        %v2551 = vunpack.c.l.s8.bf16 %v2375
        %v2552 = vunpack.c.l.s8.bf16 %v2376
        %v2553 = vunpack.c.l.s8.bf16 %v2377
        %v2554 = vunpack.c.l.s8.bf16 %v2378
        %v2555 = vunpack.c.h.s8.bf16 %v2375
        %v2556 = vunpack.c.h.s8.bf16 %v2376
        %v2557 = vunpack.c.h.s8.bf16 %v2377
        %v2558 = vunpack.c.h.s8.bf16 %v2378
        %v2559 = vunpack.c.l.s8.bf16 %v2379
        %v2560 = vunpack.c.l.s8.bf16 %v2380
        %v2561 = vunpack.c.l.s8.bf16 %v2381
        %v2562 = vunpack.c.l.s8.bf16 %v2382
        %v2563 = vunpack.c.h.s8.bf16 %v2379
        %v2564 = vunpack.c.h.s8.bf16 %v2380
        %v2565 = vunpack.c.h.s8.bf16 %v2381
        %v2566 = vunpack.c.h.s8.bf16 %v2382
        %v2567 = vunpack.c.l.s8.bf16 %v2383
        %v2568 = vunpack.c.l.s8.bf16 %v2384
        %v2569 = vunpack.c.l.s8.bf16 %v2385
        %v2570 = vunpack.c.l.s8.bf16 %v2386
        %v2571 = vunpack.c.h.s8.bf16 %v2383
        %v2572 = vunpack.c.h.s8.bf16 %v2384
        %v2573 = vunpack.c.h.s8.bf16 %v2385
        %v2574 = vunpack.c.h.s8.bf16 %v2386
        %v2575 = vunpack.c.l.s8.bf16 %v2387
        %v2576 = vunpack.c.l.s8.bf16 %v2388
        %v2577 = vunpack.c.l.s8.bf16 %v2389
        %v2578 = vunpack.c.l.s8.bf16 %v2390
        %v2579 = vunpack.c.h.s8.bf16 %v2387
        %v2580 = vunpack.c.h.s8.bf16 %v2388
        %v2581 = vunpack.c.h.s8.bf16 %v2389
        %v2582 = vunpack.c.h.s8.bf16 %v2390
        %v2583 = vunpack.c.l.s8.bf16 %v2391
        %v2584 = vunpack.c.l.s8.bf16 %v2392
        %v2585 = vunpack.c.l.s8.bf16 %v2393
        %v2586 = vunpack.c.l.s8.bf16 %v2394
        %v2587 = vunpack.c.h.s8.bf16 %v2391
        %v2588 = vunpack.c.h.s8.bf16 %v2392
        %v2589 = vunpack.c.h.s8.bf16 %v2393
        %v2590 = vunpack.c.h.s8.bf16 %v2394
        %v2591 = vunpack.c.l.s8.bf16 %v2395
        %v2592 = vunpack.c.l.s8.bf16 %v2396
        %v2593 = vunpack.c.l.s8.bf16 %v2397
        %v2594 = vunpack.c.l.s8.bf16 %v2398
        %v2595 = vunpack.c.h.s8.bf16 %v2395
        %v2596 = vunpack.c.h.s8.bf16 %v2396
        %v2597 = vunpack.c.h.s8.bf16 %v2397
        %v2598 = vunpack.c.h.s8.bf16 %v2398
        %v2599 = vunpack.c.l.s8.bf16 %v2399
        %v2600 = vunpack.c.l.s8.bf16 %v2400
        %v2601 = vunpack.c.l.s8.bf16 %v2401
        %v2602 = vunpack.c.l.s8.bf16 %v2402
        %v2603 = vunpack.c.h.s8.bf16 %v2399
        %v2604 = vunpack.c.h.s8.bf16 %v2400
        %v2605 = vunpack.c.h.s8.bf16 %v2401
        %v2606 = vunpack.c.h.s8.bf16 %v2402
        %v2607 = vunpack.c.l.s8.bf16 %v2403
        %v2608 = vunpack.c.l.s8.bf16 %v2404
        %v2609 = vunpack.c.l.s8.bf16 %v2405
        %v2610 = vunpack.c.l.s8.bf16 %v2406
        %v2611 = vunpack.c.h.s8.bf16 %v2403
        %v2612 = vunpack.c.h.s8.bf16 %v2404
        %v2613 = vunpack.c.h.s8.bf16 %v2405
        %v2614 = vunpack.c.h.s8.bf16 %v2406
        %v2615 = vunpack.c.l.s8.bf16 %v2407
        %v2616 = vunpack.c.l.s8.bf16 %v2408
        %v2617 = vunpack.c.l.s8.bf16 %v2409
        %v2618 = vunpack.c.l.s8.bf16 %v2410
        %v2619 = vunpack.c.h.s8.bf16 %v2407
        %v2620 = vunpack.c.h.s8.bf16 %v2408
        %v2621 = vunpack.c.h.s8.bf16 %v2409
        %v2622 = vunpack.c.h.s8.bf16 %v2410
        %v2623 = vunpack.c.l.s8.bf16 %v2411
        %v2624 = vunpack.c.l.s8.bf16 %v2412
        %v2625 = vunpack.c.l.s8.bf16 %v2413
        %v2626 = vunpack.c.l.s8.bf16 %v2414
        %v2627 = vunpack.c.h.s8.bf16 %v2411
        %v2628 = vunpack.c.h.s8.bf16 %v2412
        %v2629 = vunpack.c.h.s8.bf16 %v2413
        %v2630 = vunpack.c.h.s8.bf16 %v2414
        %v2631 = vunpack.c.l.s8.bf16 %v2415
        %v2632 = vunpack.c.l.s8.bf16 %v2416
        %v2633 = vunpack.c.l.s8.bf16 %v2417
        %v2634 = vunpack.c.l.s8.bf16 %v2418
        %v2635 = vunpack.c.h.s8.bf16 %v2415
        %v2636 = vunpack.c.h.s8.bf16 %v2416
        %v2637 = vunpack.c.h.s8.bf16 %v2417
        %v2638 = vunpack.c.h.s8.bf16 %v2418
        %v2639 = vunpack.c.l.s8.bf16 %v2419
        %v2640 = vunpack.c.l.s8.bf16 %v2420
        %v2641 = vunpack.c.l.s8.bf16 %v2421
        %v2642 = vunpack.c.l.s8.bf16 %v2422
        %v2643 = vunpack.c.h.s8.bf16 %v2419
        %v2644 = vunpack.c.h.s8.bf16 %v2420
        %v2645 = vunpack.c.h.s8.bf16 %v2421
        %v2646 = vunpack.c.h.s8.bf16 %v2422
        %v2647 = vunpack.c.l.s8.bf16 %v2423
        %v2648 = vunpack.c.l.s8.bf16 %v2424
        %v2649 = vunpack.c.l.s8.bf16 %v2425
        %v2650 = vunpack.c.l.s8.bf16 %v2426
        %v2651 = vunpack.c.h.s8.bf16 %v2423
        %v2652 = vunpack.c.h.s8.bf16 %v2424
        %v2653 = vunpack.c.h.s8.bf16 %v2425
        %v2654 = vunpack.c.h.s8.bf16 %v2426
        %v2655 = vunpack.c.l.s8.bf16 %v2427
        %v2656 = vunpack.c.l.s8.bf16 %v2428
        %v2657 = vunpack.c.l.s8.bf16 %v2429
        %v2658 = vunpack.c.l.s8.bf16 %v2430
        %v2659 = vunpack.c.h.s8.bf16 %v2427
        %v2660 = vunpack.c.h.s8.bf16 %v2428
        %v2661 = vunpack.c.h.s8.bf16 %v2429
        %v2662 = vunpack.c.h.s8.bf16 %v2430
        %v2663 = vunpack.c.l.s8.bf16 %v2431
        %v2664 = vunpack.c.l.s8.bf16 %v2432
        %v2665 = vunpack.c.l.s8.bf16 %v2433
        %v2666 = vunpack.c.l.s8.bf16 %v2434
        %v2667 = vunpack.c.h.s8.bf16 %v2431
        %v2668 = vunpack.c.h.s8.bf16 %v2432
        %v2669 = vunpack.c.h.s8.bf16 %v2433
        %v2670 = vunpack.c.h.s8.bf16 %v2434
        %v2671 = vunpack.c.l.s8.bf16 %v2435
        %v2672 = vunpack.c.l.s8.bf16 %v2436
        %v2673 = vunpack.c.l.s8.bf16 %v2437
        %v2674 = vunpack.c.l.s8.bf16 %v2438
        %v2675 = vunpack.c.h.s8.bf16 %v2435
        %v2676 = vunpack.c.h.s8.bf16 %v2436
        %v2677 = vunpack.c.h.s8.bf16 %v2437
        %v2678 = vunpack.c.h.s8.bf16 %v2438
        %v2679 = vunpack.c.l.s8.bf16 %v2439
        %v2680 = vunpack.c.l.s8.bf16 %v2440
        %v2681 = vunpack.c.l.s8.bf16 %v2441
        %v2682 = vunpack.c.l.s8.bf16 %v2442
        %v2683 = vunpack.c.h.s8.bf16 %v2439
        %v2684 = vunpack.c.h.s8.bf16 %v2440
        %v2685 = vunpack.c.h.s8.bf16 %v2441
        %v2686 = vunpack.c.h.s8.bf16 %v2442
        %v2687 = vunpack.c.l.s8.bf16 %v2443
        %v2688 = vunpack.c.l.s8.bf16 %v2444
        %v2689 = vunpack.c.l.s8.bf16 %v2445
        %v2690 = vunpack.c.l.s8.bf16 %v2446
        %v2691 = vunpack.c.h.s8.bf16 %v2443
        %v2692 = vunpack.c.h.s8.bf16 %v2444
        %v2693 = vunpack.c.h.s8.bf16 %v2445
        %v2694 = vunpack.c.h.s8.bf16 %v2446
        %v2695 = vunpack.c.l.s8.bf16 %v2447
        %v2696 = vunpack.c.l.s8.bf16 %v2448
        %v2697 = vunpack.c.l.s8.bf16 %v2449
        %v2698 = vunpack.c.l.s8.bf16 %v2450
        %v2699 = vunpack.c.h.s8.bf16 %v2447
        %v2700 = vunpack.c.h.s8.bf16 %v2448
        %v2701 = vunpack.c.h.s8.bf16 %v2449
        %v2702 = vunpack.c.h.s8.bf16 %v2450
        %v2703 = vunpack.c.l.s8.bf16 %v2451
        %v2704 = vunpack.c.l.s8.bf16 %v2452
        %v2705 = vunpack.c.l.s8.bf16 %v2453
        %v2706 = vunpack.c.l.s8.bf16 %v2454
        %v2707 = vunpack.c.h.s8.bf16 %v2451
        %v2708 = vunpack.c.h.s8.bf16 %v2452
        %v2709 = vunpack.c.h.s8.bf16 %v2453
        %v2710 = vunpack.c.h.s8.bf16 %v2454
        %2711 = vmatprep.subr.bf16.mxu0 %v2456
        %2712 = vmatpush1.bf16.msra.mxu0 %v2455
        %2713 = vmatprep.subr.bf16.mxu0 %v2460
        %2714 = vmatpush1.bf16.msra.mxu0 %v2459
        %2715 = vmatprep.subr.bf16.mxu0 %v2464
        %2716 = vmatpush1.bf16.msra.mxu0 %v2463
        %2717 = vmatprep.subr.bf16.mxu0 %v2468
        %2718 = vmatpush1.bf16.msra.mxu0 %v2467
        %2719 = vmatprep.subr.bf16.mxu0 %v2472
        %2720 = vmatpush1.bf16.msra.mxu0 %v2471
        %2721 = vmatprep.subr.bf16.mxu0 %v2476
        %2722 = vmatpush1.bf16.msra.mxu0 %v2475
        %2723 = vmatprep.subr.bf16.mxu0 %v2480
        %2724 = vmatpush1.bf16.msra.mxu0 %v2479
        %2725 = vmatprep.subr.bf16.mxu0 %v2484
        %2726 = vmatpush1.bf16.msra.mxu0 %v2483
        %2727 = vmatprep.subr.bf16.mxu0 %v2488
        %2728 = vmatpush1.bf16.msra.mxu0 %v2487
        %2729 = vmatprep.subr.bf16.mxu0 %v2492
        %2730 = vmatpush1.bf16.msra.mxu0 %v2491
        %2731 = vmatprep.subr.bf16.mxu0 %v2496
        %2732 = vmatpush1.bf16.msra.mxu0 %v2495
        %2733 = vmatprep.subr.bf16.mxu0 %v2500
        %2734 = vmatpush1.bf16.msra.mxu0 %v2499
        %2735 = vmatprep.subr.bf16.mxu0 %v2504
        %2736 = vmatpush1.bf16.msra.mxu0 %v2503
        %2737 = vmatprep.subr.bf16.mxu0 %v2508
        %2738 = vmatpush1.bf16.msra.mxu0 %v2507
        %2739 = vmatprep.subr.bf16.mxu0 %v2512
        %2740 = vmatpush1.bf16.msra.mxu0 %v2511
        %2741 = vmatprep.subr.bf16.mxu0 %v2516
        %2742 = vmatpush1.bf16.msra.mxu0 %v2515
        %2743 = vmatprep.mubr.bf16.mxu0 %v2320
        %2744 = vmatmul.mubr.bf16.gmra.mrb[0].mxu0 %v2319
        %v2745 = vpop.f32.mrb[0].mxu0
        %v2746 = vadd.f32 0.0, %v2745
        %v2747 = vpop.f32.mrb[0].mxu0
        %v2748 = vadd.f32 0.0, %v2747
        %v2749 = vpop.f32.mrb[0].mxu0
        %v2750 = vadd.f32 0.0, %v2749
        %v2751 = vpop.f32.mrb[0].mxu0
        %v2752 = vadd.f32 0.0, %v2751
        %2753 = vdwg.mxu0
        %2754 = vmatprep.subr.bf16.mxu0 %v2520
        %2755 = vmatpush1.bf16.msra.mxu0 %v2519
        %2756 = vmatprep.subr.bf16.mxu0 %v2524
        %2757 = vmatpush1.bf16.msra.mxu0 %v2523
        %2758 = vmatprep.subr.bf16.mxu0 %v2528
        %2759 = vmatpush1.bf16.msra.mxu0 %v2527
        %2760 = vmatprep.subr.bf16.mxu0 %v2532
        %2761 = vmatpush1.bf16.msra.mxu0 %v2531
        %2762 = vmatprep.subr.bf16.mxu0 %v2536
        %2763 = vmatpush1.bf16.msra.mxu0 %v2535
        %2764 = vmatprep.subr.bf16.mxu0 %v2540
        %2765 = vmatpush1.bf16.msra.mxu0 %v2539
        %2766 = vmatprep.subr.bf16.mxu0 %v2544
        %2767 = vmatpush1.bf16.msra.mxu0 %v2543
        %2768 = vmatprep.subr.bf16.mxu0 %v2548
        %2769 = vmatpush1.bf16.msra.mxu0 %v2547
        %2770 = vmatprep.subr.bf16.mxu0 %v2552
        %2771 = vmatpush1.bf16.msra.mxu0 %v2551
        %2772 = vmatprep.subr.bf16.mxu0 %v2556
        %2773 = vmatpush1.bf16.msra.mxu0 %v2555
        %2774 = vmatprep.subr.bf16.mxu0 %v2560
        %2775 = vmatpush1.bf16.msra.mxu0 %v2559
        %2776 = vmatprep.subr.bf16.mxu0 %v2564
        %2777 = vmatpush1.bf16.msra.mxu0 %v2563
        %2778 = vmatprep.subr.bf16.mxu0 %v2568
        %2779 = vmatpush1.bf16.msra.mxu0 %v2567
        %2780 = vmatprep.subr.bf16.mxu0 %v2572
        %2781 = vmatpush1.bf16.msra.mxu0 %v2571
        %2782 = vmatprep.subr.bf16.mxu0 %v2576
        %2783 = vmatpush1.bf16.msra.mxu0 %v2575
        %2784 = vmatprep.subr.bf16.mxu0 %v2580
        %2785 = vmatpush1.bf16.msra.mxu0 %v2579
        %2786 = vmatprep.mubr.bf16.mxu0 %v2322
        %2787 = vmatmul.mubr.bf16.gmra.mrb[0].mxu0 %v2321
        %v2788 = vpop.f32.mrb[0].mxu0
        %v2789 = vadd.f32 %v2746, %v2788
        %v2790 = vpop.f32.mrb[0].mxu0
        %v2791 = vadd.f32 %v2748, %v2790
        %v2792 = vpop.f32.mrb[0].mxu0
        %v2793 = vadd.f32 %v2750, %v2792
        %v2794 = vpop.f32.mrb[0].mxu0
        %v2795 = vadd.f32 %v2752, %v2794
        %2796 = vdwg.mxu0
        %2797 = vmatprep.subr.bf16.mxu0 %v2584
        %2798 = vmatpush1.bf16.msra.mxu0 %v2583
        %2799 = vmatprep.subr.bf16.mxu0 %v2588
        %2800 = vmatpush1.bf16.msra.mxu0 %v2587
        %2801 = vmatprep.subr.bf16.mxu0 %v2592
        %2802 = vmatpush1.bf16.msra.mxu0 %v2591
        %2803 = vmatprep.subr.bf16.mxu0 %v2596
        %2804 = vmatpush1.bf16.msra.mxu0 %v2595
        %2805 = vmatprep.subr.bf16.mxu0 %v2600
        %2806 = vmatpush1.bf16.msra.mxu0 %v2599
        %2807 = vmatprep.subr.bf16.mxu0 %v2604
        %2808 = vmatpush1.bf16.msra.mxu0 %v2603
        %2809 = vmatprep.subr.bf16.mxu0 %v2608
        %2810 = vmatpush1.bf16.msra.mxu0 %v2607
        %2811 = vmatprep.subr.bf16.mxu0 %v2612
        %2812 = vmatpush1.bf16.msra.mxu0 %v2611
        %2813 = vmatprep.subr.bf16.mxu0 %v2616
        %2814 = vmatpush1.bf16.msra.mxu0 %v2615
        %2815 = vmatprep.subr.bf16.mxu0 %v2620
        %2816 = vmatpush1.bf16.msra.mxu0 %v2619
        %2817 = vmatprep.subr.bf16.mxu0 %v2624
        %2818 = vmatpush1.bf16.msra.mxu0 %v2623
        %2819 = vmatprep.subr.bf16.mxu0 %v2628
        %2820 = vmatpush1.bf16.msra.mxu0 %v2627
        %2821 = vmatprep.subr.bf16.mxu0 %v2632
        %2822 = vmatpush1.bf16.msra.mxu0 %v2631
        %2823 = vmatprep.subr.bf16.mxu0 %v2636
        %2824 = vmatpush1.bf16.msra.mxu0 %v2635
        %2825 = vmatprep.subr.bf16.mxu0 %v2640
        %2826 = vmatpush1.bf16.msra.mxu0 %v2639
        %2827 = vmatprep.subr.bf16.mxu0 %v2644
        %2828 = vmatpush1.bf16.msra.mxu0 %v2643
        %2829 = vmatprep.mubr.bf16.mxu0 %v2324
        %2830 = vmatmul.mubr.bf16.gmra.mrb[0].mxu0 %v2323
        %v2831 = vpop.f32.mrb[0].mxu0
        %v2832 = vadd.f32 %v2789, %v2831
        %v2833 = vpop.f32.mrb[0].mxu0
        %v2834 = vadd.f32 %v2791, %v2833
        %v2835 = vpop.f32.mrb[0].mxu0
        %v2836 = vadd.f32 %v2793, %v2835
        %v2837 = vpop.f32.mrb[0].mxu0
        %v2838 = vadd.f32 %v2795, %v2837
        %2839 = vdwg.mxu0
        %2840 = vmatprep.subr.bf16.mxu0 %v2648
        %2841 = vmatpush1.bf16.msra.mxu0 %v2647
        %2842 = vmatprep.subr.bf16.mxu0 %v2652
        %2843 = vmatpush1.bf16.msra.mxu0 %v2651
        %2844 = vmatprep.subr.bf16.mxu0 %v2656
        %2845 = vmatpush1.bf16.msra.mxu0 %v2655
        %2846 = vmatprep.subr.bf16.mxu0 %v2660
        %2847 = vmatpush1.bf16.msra.mxu0 %v2659
        %2848 = vmatprep.subr.bf16.mxu0 %v2664
        %2849 = vmatpush1.bf16.msra.mxu0 %v2663
        %2850 = vmatprep.subr.bf16.mxu0 %v2668
        %2851 = vmatpush1.bf16.msra.mxu0 %v2667
        %2852 = vmatprep.subr.bf16.mxu0 %v2672
        %2853 = vmatpush1.bf16.msra.mxu0 %v2671
        %2854 = vmatprep.subr.bf16.mxu0 %v2676
        %2855 = vmatpush1.bf16.msra.mxu0 %v2675
        %2856 = vmatprep.subr.bf16.mxu0 %v2680
        %2857 = vmatpush1.bf16.msra.mxu0 %v2679
        %2858 = vmatprep.subr.bf16.mxu0 %v2684
        %2859 = vmatpush1.bf16.msra.mxu0 %v2683
        %2860 = vmatprep.subr.bf16.mxu0 %v2688
        %2861 = vmatpush1.bf16.msra.mxu0 %v2687
        %2862 = vmatprep.subr.bf16.mxu0 %v2692
        %2863 = vmatpush1.bf16.msra.mxu0 %v2691
        %2864 = vmatprep.subr.bf16.mxu0 %v2696
        %2865 = vmatpush1.bf16.msra.mxu0 %v2695
        %2866 = vmatprep.subr.bf16.mxu0 %v2700
        %2867 = vmatpush1.bf16.msra.mxu0 %v2699
        %2868 = vmatprep.subr.bf16.mxu0 %v2704
        %2869 = vmatpush1.bf16.msra.mxu0 %v2703
        %2870 = vmatprep.subr.bf16.mxu0 %v2708
        %2871 = vmatpush1.bf16.msra.mxu0 %v2707
        %2872 = vmatprep.mubr.bf16.mxu0 %v2326
        %2873 = vmatmul.mubr.bf16.gmra.mrb[0].mxu0 %v2325
        %v2874 = vpop.f32.mrb[0].mxu0
        %v2875 = vadd.f32 %v2832, %v2874
        %v2876 = vpop.f32.mrb[0].mxu0
        %v2877 = vadd.f32 %v2834, %v2876
        %v2878 = vpop.f32.mrb[0].mxu0
        %v2879 = vadd.f32 %v2836, %v2878
        %v2880 = vpop.f32.mrb[0].mxu0
        %v2881 = vadd.f32 %v2838, %v2880
        %2882 = vdwg.mxu0
        %2883 = vmatprep.subr.bf16.mxu0 %v2458
        %2884 = vmatpush1.bf16.msra.mxu0 %v2457
        %2885 = vmatprep.subr.bf16.mxu0 %v2462
        %2886 = vmatpush1.bf16.msra.mxu0 %v2461
        %2887 = vmatprep.subr.bf16.mxu0 %v2466
        %2888 = vmatpush1.bf16.msra.mxu0 %v2465
        %2889 = vmatprep.subr.bf16.mxu0 %v2470
        %2890 = vmatpush1.bf16.msra.mxu0 %v2469
        %2891 = vmatprep.subr.bf16.mxu0 %v2474
        %2892 = vmatpush1.bf16.msra.mxu0 %v2473
        %2893 = vmatprep.subr.bf16.mxu0 %v2478
        %2894 = vmatpush1.bf16.msra.mxu0 %v2477
        %2895 = vmatprep.subr.bf16.mxu0 %v2482
        %2896 = vmatpush1.bf16.msra.mxu0 %v2481
        %2897 = vmatprep.subr.bf16.mxu0 %v2486
        %2898 = vmatpush1.bf16.msra.mxu0 %v2485
        %2899 = vmatprep.subr.bf16.mxu0 %v2490
        %2900 = vmatpush1.bf16.msra.mxu0 %v2489
        %2901 = vmatprep.subr.bf16.mxu0 %v2494
        %2902 = vmatpush1.bf16.msra.mxu0 %v2493
        %2903 = vmatprep.subr.bf16.mxu0 %v2498
        %2904 = vmatpush1.bf16.msra.mxu0 %v2497
        %2905 = vmatprep.subr.bf16.mxu0 %v2502
        %2906 = vmatpush1.bf16.msra.mxu0 %v2501
        %2907 = vmatprep.subr.bf16.mxu0 %v2506
        %2908 = vmatpush1.bf16.msra.mxu0 %v2505
        %2909 = vmatprep.subr.bf16.mxu0 %v2510
        %2910 = vmatpush1.bf16.msra.mxu0 %v2509
        %2911 = vmatprep.subr.bf16.mxu0 %v2514
        %2912 = vmatpush1.bf16.msra.mxu0 %v2513
        %2913 = vmatprep.subr.bf16.mxu0 %v2518
        %2914 = vmatpush1.bf16.msra.mxu0 %v2517
        %2915 = vmatprep.mubr.bf16.mxu0 %v2320
        %2916 = vmatmul.mubr.bf16.gmra.mrb[0].mxu0 %v2319
        %v2917 = vpop.f32.mrb[0].mxu0
        %v2918 = vadd.f32 0.0, %v2917
        %v2919 = vpop.f32.mrb[0].mxu0
        %v2920 = vadd.f32 0.0, %v2919
        %v2921 = vpop.f32.mrb[0].mxu0
        %v2922 = vadd.f32 0.0, %v2921
        %v2923 = vpop.f32.mrb[0].mxu0
        %v2924 = vadd.f32 0.0, %v2923
        %2925 = vdwg.mxu0
        %2926 = vmatprep.subr.bf16.mxu0 %v2522
        %2927 = vmatpush1.bf16.msra.mxu0 %v2521
        %2928 = vmatprep.subr.bf16.mxu0 %v2526
        %2929 = vmatpush1.bf16.msra.mxu0 %v2525
        %2930 = vmatprep.subr.bf16.mxu0 %v2530
        %2931 = vmatpush1.bf16.msra.mxu0 %v2529
        %2932 = vmatprep.subr.bf16.mxu0 %v2534
        %2933 = vmatpush1.bf16.msra.mxu0 %v2533
        %2934 = vmatprep.subr.bf16.mxu0 %v2538
        %2935 = vmatpush1.bf16.msra.mxu0 %v2537
        %2936 = vmatprep.subr.bf16.mxu0 %v2542
        %2937 = vmatpush1.bf16.msra.mxu0 %v2541
        %2938 = vmatprep.subr.bf16.mxu0 %v2546
        %2939 = vmatpush1.bf16.msra.mxu0 %v2545
        %2940 = vmatprep.subr.bf16.mxu0 %v2550
        %2941 = vmatpush1.bf16.msra.mxu0 %v2549
        %2942 = vmatprep.subr.bf16.mxu0 %v2554
        %2943 = vmatpush1.bf16.msra.mxu0 %v2553
        %2944 = vmatprep.subr.bf16.mxu0 %v2558
        %2945 = vmatpush1.bf16.msra.mxu0 %v2557
        %2946 = vmatprep.subr.bf16.mxu0 %v2562
        %2947 = vmatpush1.bf16.msra.mxu0 %v2561
        %2948 = vmatprep.subr.bf16.mxu0 %v2566
        %2949 = vmatpush1.bf16.msra.mxu0 %v2565
        %2950 = vmatprep.subr.bf16.mxu0 %v2570
        %2951 = vmatpush1.bf16.msra.mxu0 %v2569
        %2952 = vmatprep.subr.bf16.mxu0 %v2574
        %2953 = vmatpush1.bf16.msra.mxu0 %v2573
        %2954 = vmatprep.subr.bf16.mxu0 %v2578
        %2955 = vmatpush1.bf16.msra.mxu0 %v2577
        %2956 = vmatprep.subr.bf16.mxu0 %v2582
        %2957 = vmatpush1.bf16.msra.mxu0 %v2581
        %2958 = vmatprep.mubr.bf16.mxu0 %v2322
        %2959 = vmatmul.mubr.bf16.gmra.mrb[0].mxu0 %v2321
        %v2960 = vpop.f32.mrb[0].mxu0
        %v2961 = vadd.f32 %v2918, %v2960
        %v2962 = vpop.f32.mrb[0].mxu0
        %v2963 = vadd.f32 %v2920, %v2962
        %v2964 = vpop.f32.mrb[0].mxu0
        %v2965 = vadd.f32 %v2922, %v2964
        %v2966 = vpop.f32.mrb[0].mxu0
        %v2967 = vadd.f32 %v2924, %v2966
        %2968 = vdwg.mxu0
        %2969 = vmatprep.subr.bf16.mxu0 %v2586
        %2970 = vmatpush1.bf16.msra.mxu0 %v2585
        %2971 = vmatprep.subr.bf16.mxu0 %v2590
        %2972 = vmatpush1.bf16.msra.mxu0 %v2589
        %2973 = vmatprep.subr.bf16.mxu0 %v2594
        %2974 = vmatpush1.bf16.msra.mxu0 %v2593
        %2975 = vmatprep.subr.bf16.mxu0 %v2598
        %2976 = vmatpush1.bf16.msra.mxu0 %v2597
        %2977 = vmatprep.subr.bf16.mxu0 %v2602
        %2978 = vmatpush1.bf16.msra.mxu0 %v2601
        %2979 = vmatprep.subr.bf16.mxu0 %v2606
        %2980 = vmatpush1.bf16.msra.mxu0 %v2605
        %2981 = vmatprep.subr.bf16.mxu0 %v2610
        %2982 = vmatpush1.bf16.msra.mxu0 %v2609
        %2983 = vmatprep.subr.bf16.mxu0 %v2614
        %2984 = vmatpush1.bf16.msra.mxu0 %v2613
        %2985 = vmatprep.subr.bf16.mxu0 %v2618
        %2986 = vmatpush1.bf16.msra.mxu0 %v2617
        %2987 = vmatprep.subr.bf16.mxu0 %v2622
        %2988 = vmatpush1.bf16.msra.mxu0 %v2621
        %2989 = vmatprep.subr.bf16.mxu0 %v2626
        %2990 = vmatpush1.bf16.msra.mxu0 %v2625
        %2991 = vmatprep.subr.bf16.mxu0 %v2630
        %2992 = vmatpush1.bf16.msra.mxu0 %v2629
        %2993 = vmatprep.subr.bf16.mxu0 %v2634
        %2994 = vmatpush1.bf16.msra.mxu0 %v2633
        %2995 = vmatprep.subr.bf16.mxu0 %v2638
        %2996 = vmatpush1.bf16.msra.mxu0 %v2637
        %2997 = vmatprep.subr.bf16.mxu0 %v2642
        %2998 = vmatpush1.bf16.msra.mxu0 %v2641
        %2999 = vmatprep.subr.bf16.mxu0 %v2646
        %3000 = vmatpush1.bf16.msra.mxu0 %v2645
        %3001 = vmatprep.mubr.bf16.mxu0 %v2324
        %3002 = vmatmul.mubr.bf16.gmra.mrb[0].mxu0 %v2323
        %v3003 = vpop.f32.mrb[0].mxu0
        %v3004 = vadd.f32 %v2961, %v3003
        %v3005 = vpop.f32.mrb[0].mxu0
        %v3006 = vadd.f32 %v2963, %v3005
        %v3007 = vpop.f32.mrb[0].mxu0
        %v3008 = vadd.f32 %v2965, %v3007
        %v3009 = vpop.f32.mrb[0].mxu0
        %v3010 = vadd.f32 %v2967, %v3009
        %3011 = vdwg.mxu0
        %3012 = vmatprep.subr.bf16.mxu0 %v2650
        %3013 = vmatpush1.bf16.msra.mxu0 %v2649
        %3014 = vmatprep.subr.bf16.mxu0 %v2654
        %3015 = vmatpush1.bf16.msra.mxu0 %v2653
        %3016 = vmatprep.subr.bf16.mxu0 %v2658
        %3017 = vmatpush1.bf16.msra.mxu0 %v2657
        %3018 = vmatprep.subr.bf16.mxu0 %v2662
        %3019 = vmatpush1.bf16.msra.mxu0 %v2661
        %3020 = vmatprep.subr.bf16.mxu0 %v2666
        %3021 = vmatpush1.bf16.msra.mxu0 %v2665
        %3022 = vmatprep.subr.bf16.mxu0 %v2670
        %3023 = vmatpush1.bf16.msra.mxu0 %v2669
        %3024 = vmatprep.subr.bf16.mxu0 %v2674
        %3025 = vmatpush1.bf16.msra.mxu0 %v2673
        %3026 = vmatprep.subr.bf16.mxu0 %v2678
        %3027 = vmatpush1.bf16.msra.mxu0 %v2677
        %3028 = vmatprep.subr.bf16.mxu0 %v2682
        %3029 = vmatpush1.bf16.msra.mxu0 %v2681
        %3030 = vmatprep.subr.bf16.mxu0 %v2686
        %3031 = vmatpush1.bf16.msra.mxu0 %v2685
        %3032 = vmatprep.subr.bf16.mxu0 %v2690
        %3033 = vmatpush1.bf16.msra.mxu0 %v2689
        %3034 = vmatprep.subr.bf16.mxu0 %v2694
        %3035 = vmatpush1.bf16.msra.mxu0 %v2693
        %3036 = vmatprep.subr.bf16.mxu0 %v2698
        %3037 = vmatpush1.bf16.msra.mxu0 %v2697
        %3038 = vmatprep.subr.bf16.mxu0 %v2702
        %3039 = vmatpush1.bf16.msra.mxu0 %v2701
        %3040 = vmatprep.subr.bf16.mxu0 %v2706
        %3041 = vmatpush1.bf16.msra.mxu0 %v2705
        %3042 = vmatprep.subr.bf16.mxu0 %v2710
        %3043 = vmatpush1.bf16.msra.mxu0 %v2709
        %3044 = vmatprep.mubr.bf16.mxu0 %v2326
        %3045 = vmatmul.mubr.bf16.gmra.mrb[0].mxu0 %v2325
        %v3046 = vpop.f32.mrb[0].mxu0
        %v3047 = vadd.f32 %v3004, %v3046
        %v3048 = vpop.f32.mrb[0].mxu0
        %v3049 = vadd.f32 %v3006, %v3048
        %v3050 = vpop.f32.mrb[0].mxu0
        %v3051 = vadd.f32 %v3008, %v3050
        %v3052 = vpop.f32.mrb[0].mxu0
        %v3053 = vadd.f32 %v3010, %v3052
        %3054 = vdwg.mxu0
        %v3055 = vld [vmem:[%s834] sm:$0xf]
        %v3057 = vlaneseq
        %v3058 = vshrl.u32 %v3057, 7
        %v3059 = vsub.s32 0, %v3058
        %v3060 = vrot.slane %v3055, %v3059
        %v3061 = vlaneseq
        %v3062 = vshrl.u32 %v3061, 7
        %v3063 = vsub.s32 1, %v3062
        %v3064 = vrot.slane %v3055, %v3063
        %v3065 = vlaneseq
        %v3066 = vshrl.u32 %v3065, 7
        %v3067 = vsub.s32 2, %v3066
        %v3068 = vrot.slane %v3055, %v3067
        %v3069 = vlaneseq
        %v3070 = vshrl.u32 %v3069, 7
        %v3071 = vsub.s32 3, %v3070
        %v3072 = vrot.slane %v3055, %v3071
        %v3077 = vmul.f32 %v2875, %v3060
        %v3078 = vmul.f32 %v2877, %v3064
        %v3079 = vmul.f32 %v3047, %v3068
        %v3080 = vmul.f32 %v3049, %v3072
        %v3081 = vmul.f32 %v2879, %v3060
        %v3082 = vmul.f32 %v2881, %v3064
        %v3083 = vmul.f32 %v3051, %v3068
        %v3084 = vmul.f32 %v3053, %v3072
        %v3085 = vld [vmem:[%s838] sm:$0xf]
        %v3087 = vlaneseq
        %v3088 = vshrl.u32 %v3087, 7
        %v3089 = vsub.s32 0, %v3088
        %v3090 = vrot.slane %v3085, %v3089
        %v3091 = vlaneseq
        %v3092 = vshrl.u32 %v3091, 7
        %v3093 = vsub.s32 1, %v3092
        %v3094 = vrot.slane %v3085, %v3093
        %v3095 = vlaneseq
        %v3096 = vshrl.u32 %v3095, 7
        %v3097 = vsub.s32 2, %v3096
        %v3098 = vrot.slane %v3085, %v3097
        %v3099 = vlaneseq
        %v3100 = vshrl.u32 %v3099, 7
        %v3101 = vsub.s32 3, %v3100
        %v3102 = vrot.slane %v3085, %v3101
        %v3107 = vadd.f32 %v3077, %v3090
        %v3108 = vadd.f32 %v3078, %v3094
        %v3109 = vadd.f32 %v3079, %v3098
        %v3110 = vadd.f32 %v3080, %v3102
        %v3111 = vadd.f32 %v3081, %v3090
        %v3112 = vadd.f32 %v3082, %v3094
        %v3113 = vadd.f32 %v3083, %v3098
        %v3114 = vadd.f32 %v3084, %v3102
        %v3115 = vmax.f32 %v3107, 0.0
        %v3116 = vmax.f32 %v3108, 0.0
        %v3117 = vmax.f32 %v3109, 0.0
        %v3118 = vmax.f32 %v3110, 0.0
        %v3119 = vmax.f32 %v3111, 0.0
        %v3120 = vmax.f32 %v3112, 0.0
        %v3121 = vmax.f32 %v3113, 0.0
        %v3122 = vmax.f32 %v3114, 0.0
        %v3123 = vpack.c.bf16 %v3119, %v3115
        %v3124 = vpack.c.bf16 %v3120, %v3116
        %v3125 = vpack.c.bf16 %v3121, %v3117
        %v3126 = vpack.c.bf16 %v3122, %v3118
        %v3127 = vld [vmem:[%s724] sm:$0xf]
        %v3128 = vld [vmem:[%s724 + $0x4] sm:$0xf]
        %v3129 = vld [vmem:[%s724 + $0x8] sm:$0xf]
        %v3130 = vld [vmem:[%s724 + $0xc] sm:$0xf]
        %v3131 = vld [vmem:[%s724 + $0x10] sm:$0xf]
        %v3132 = vld [vmem:[%s724 + $0x14] sm:$0xf]
        %v3133 = vld [vmem:[%s724 + $0x18] sm:$0xf]
        %v3134 = vld [vmem:[%s724 + $0x1c] sm:$0xf]
        %v3135 = vld [vmem:[%s724 + $0x20] sm:$0xf]
        %v3136 = vld [vmem:[%s724 + $0x24] sm:$0xf]
        %v3137 = vld [vmem:[%s724 + $0x28] sm:$0xf]
        %v3138 = vld [vmem:[%s724 + $0x2c] sm:$0xf]
        %v3139 = vld [vmem:[%s724 + $0x30] sm:$0xf]
        %v3140 = vld [vmem:[%s724 + $0x34] sm:$0xf]
        %v3141 = vld [vmem:[%s724 + $0x38] sm:$0xf]
        %v3142 = vld [vmem:[%s724 + $0x3c] sm:$0xf]
        %v3143 = vld [vmem:[%s724 + $0x40] sm:$0xf]
        %v3144 = vld [vmem:[%s724 + $0x44] sm:$0xf]
        %v3145 = vld [vmem:[%s724 + $0x48] sm:$0xf]
        %v3146 = vld [vmem:[%s724 + $0x4c] sm:$0xf]
        %v3147 = vld [vmem:[%s724 + $0x50] sm:$0xf]
        %v3148 = vld [vmem:[%s724 + $0x54] sm:$0xf]
        %v3149 = vld [vmem:[%s724 + $0x58] sm:$0xf]
        %v3150 = vld [vmem:[%s724 + $0x5c] sm:$0xf]
        %v3151 = vld [vmem:[%s724 + $0x60] sm:$0xf]
        %v3152 = vld [vmem:[%s724 + $0x64] sm:$0xf]
        %v3153 = vld [vmem:[%s724 + $0x68] sm:$0xf]
        %v3154 = vld [vmem:[%s724 + $0x6c] sm:$0xf]
        %v3155 = vld [vmem:[%s724 + $0x70] sm:$0xf]
        %v3156 = vld [vmem:[%s724 + $0x74] sm:$0xf]
        %v3157 = vld [vmem:[%s724 + $0x78] sm:$0xf]
        %v3158 = vld [vmem:[%s724 + $0x7c] sm:$0xf]
        %v3159 = vld [vmem:[%s724 + $0x80] sm:$0xf]
        %v3160 = vld [vmem:[%s724 + $0x84] sm:$0xf]
        %v3161 = vld [vmem:[%s724 + $0x88] sm:$0xf]
        %v3162 = vld [vmem:[%s724 + $0x8c] sm:$0xf]
        %v3163 = vld [vmem:[%s724 + $0x90] sm:$0xf]
        %v3164 = vld [vmem:[%s724 + $0x94] sm:$0xf]
        %v3165 = vld [vmem:[%s724 + $0x98] sm:$0xf]
        %v3166 = vld [vmem:[%s724 + $0x9c] sm:$0xf]
        %v3167 = vld [vmem:[%s724 + $0xa0] sm:$0xf]
        %v3168 = vld [vmem:[%s724 + $0xa4] sm:$0xf]
        %v3169 = vld [vmem:[%s724 + $0xa8] sm:$0xf]
        %v3170 = vld [vmem:[%s724 + $0xac] sm:$0xf]
        %v3171 = vld [vmem:[%s724 + $0xb0] sm:$0xf]
        %v3172 = vld [vmem:[%s724 + $0xb4] sm:$0xf]
        %v3173 = vld [vmem:[%s724 + $0xb8] sm:$0xf]
        %v3174 = vld [vmem:[%s724 + $0xbc] sm:$0xf]
        %v3175 = vld [vmem:[%s724 + $0xc0] sm:$0xf]
        %v3176 = vld [vmem:[%s724 + $0xc4] sm:$0xf]
        %v3177 = vld [vmem:[%s724 + $0xc8] sm:$0xf]
        %v3178 = vld [vmem:[%s724 + $0xcc] sm:$0xf]
        %v3179 = vld [vmem:[%s724 + $0xd0] sm:$0xf]
        %v3180 = vld [vmem:[%s724 + $0xd4] sm:$0xf]
        %v3181 = vld [vmem:[%s724 + $0xd8] sm:$0xf]
        %v3182 = vld [vmem:[%s724 + $0xdc] sm:$0xf]
        %v3183 = vld [vmem:[%s724 + $0xe0] sm:$0xf]
        %v3184 = vld [vmem:[%s724 + $0xe4] sm:$0xf]
        %v3185 = vld [vmem:[%s724 + $0xe8] sm:$0xf]
        %v3186 = vld [vmem:[%s724 + $0xec] sm:$0xf]
        %v3187 = vld [vmem:[%s724 + $0xf0] sm:$0xf]
        %v3188 = vld [vmem:[%s724 + $0xf4] sm:$0xf]
        %v3189 = vld [vmem:[%s724 + $0xf8] sm:$0xf]
        %v3190 = vld [vmem:[%s724 + $0xfc] sm:$0xf]
        %v3191 = vld [vmem:[%s841] sm:$0x1]
        %v3193 = vlaneseq
        %v3194 = vshrl.u32 %v3193, 7
        %v3195 = vsub.s32 0, %v3194
        %v3196 = vrot.slane %v3191, %v3195
        %v3262 = vunpack.c.l.b16 %v3127
        %v3263 = vunpack.c.l.b16 %v3128
        %v3264 = vunpack.c.l.b16 %v3129
        %v3265 = vunpack.c.l.b16 %v3130
        %v3266 = vunpack.c.l.b16 %v3131
        %v3267 = vunpack.c.l.b16 %v3132
        %v3268 = vunpack.c.l.b16 %v3133
        %v3269 = vunpack.c.l.b16 %v3134
        %v3270 = vunpack.c.l.b16 %v3135
        %v3271 = vunpack.c.l.b16 %v3136
        %v3272 = vunpack.c.l.b16 %v3137
        %v3273 = vunpack.c.l.b16 %v3138
        %v3274 = vunpack.c.l.b16 %v3139
        %v3275 = vunpack.c.l.b16 %v3140
        %v3276 = vunpack.c.l.b16 %v3141
        %v3277 = vunpack.c.l.b16 %v3142
        %v3278 = vunpack.c.l.b16 %v3143
        %v3279 = vunpack.c.l.b16 %v3144
        %v3280 = vunpack.c.l.b16 %v3145
        %v3281 = vunpack.c.l.b16 %v3146
        %v3282 = vunpack.c.l.b16 %v3147
        %v3283 = vunpack.c.l.b16 %v3148
        %v3284 = vunpack.c.l.b16 %v3149
        %v3285 = vunpack.c.l.b16 %v3150
        %v3286 = vunpack.c.l.b16 %v3151
        %v3287 = vunpack.c.l.b16 %v3152
        %v3288 = vunpack.c.l.b16 %v3153
        %v3289 = vunpack.c.l.b16 %v3154
        %v3290 = vunpack.c.l.b16 %v3155
        %v3291 = vunpack.c.l.b16 %v3156
        %v3292 = vunpack.c.l.b16 %v3157
        %v3293 = vunpack.c.l.b16 %v3158
        %v3294 = vunpack.c.l.b16 %v3159
        %v3295 = vunpack.c.l.b16 %v3160
        %v3296 = vunpack.c.l.b16 %v3161
        %v3297 = vunpack.c.l.b16 %v3162
        %v3298 = vunpack.c.l.b16 %v3163
        %v3299 = vunpack.c.l.b16 %v3164
        %v3300 = vunpack.c.l.b16 %v3165
        %v3301 = vunpack.c.l.b16 %v3166
        %v3302 = vunpack.c.l.b16 %v3167
        %v3303 = vunpack.c.l.b16 %v3168
        %v3304 = vunpack.c.l.b16 %v3169
        %v3305 = vunpack.c.l.b16 %v3170
        %v3306 = vunpack.c.l.b16 %v3171
        %v3307 = vunpack.c.l.b16 %v3172
        %v3308 = vunpack.c.l.b16 %v3173
        %v3309 = vunpack.c.l.b16 %v3174
        %v3310 = vunpack.c.l.b16 %v3175
        %v3311 = vunpack.c.l.b16 %v3176
        %v3312 = vunpack.c.l.b16 %v3177
        %v3313 = vunpack.c.l.b16 %v3178
        %v3314 = vunpack.c.l.b16 %v3179
        %v3315 = vunpack.c.l.b16 %v3180
        %v3316 = vunpack.c.l.b16 %v3181
        %v3317 = vunpack.c.l.b16 %v3182
        %v3318 = vunpack.c.l.b16 %v3183
        %v3319 = vunpack.c.l.b16 %v3184
        %v3320 = vunpack.c.l.b16 %v3185
        %v3321 = vunpack.c.l.b16 %v3186
        %v3322 = vunpack.c.l.b16 %v3187
        %v3323 = vunpack.c.l.b16 %v3188
        %v3324 = vunpack.c.l.b16 %v3189
        %v3325 = vunpack.c.l.b16 %v3190
        %v3326 = vpack.c.b16 %v3263, %v3262
        %v3327 = vpack.c.b16 %v3265, %v3264
        %v3328 = vpack.c.b16 %v3267, %v3266
        %v3329 = vpack.c.b16 %v3269, %v3268
        %v3330 = vpack.c.b16 %v3271, %v3270
        %v3331 = vpack.c.b16 %v3273, %v3272
        %v3332 = vpack.c.b16 %v3275, %v3274
        %v3333 = vpack.c.b16 %v3277, %v3276
        %v3334 = vpack.c.b16 %v3279, %v3278
        %v3335 = vpack.c.b16 %v3281, %v3280
        %v3336 = vpack.c.b16 %v3283, %v3282
        %v3337 = vpack.c.b16 %v3285, %v3284
        %v3338 = vpack.c.b16 %v3287, %v3286
        %v3339 = vpack.c.b16 %v3289, %v3288
        %v3340 = vpack.c.b16 %v3291, %v3290
        %v3341 = vpack.c.b16 %v3293, %v3292
        %v3342 = vpack.c.b16 %v3295, %v3294
        %v3343 = vpack.c.b16 %v3297, %v3296
        %v3344 = vpack.c.b16 %v3299, %v3298
        %v3345 = vpack.c.b16 %v3301, %v3300
        %v3346 = vpack.c.b16 %v3303, %v3302
        %v3347 = vpack.c.b16 %v3305, %v3304
        %v3348 = vpack.c.b16 %v3307, %v3306
        %v3349 = vpack.c.b16 %v3309, %v3308
        %v3350 = vpack.c.b16 %v3311, %v3310
        %v3351 = vpack.c.b16 %v3313, %v3312
        %v3352 = vpack.c.b16 %v3315, %v3314
        %v3353 = vpack.c.b16 %v3317, %v3316
        %v3354 = vpack.c.b16 %v3319, %v3318
        %v3355 = vpack.c.b16 %v3321, %v3320
        %v3356 = vpack.c.b16 %v3323, %v3322
        %v3357 = vpack.c.b16 %v3325, %v3324
        %3390 = vmatprep.subr.bf16.mxu0 0
        %3391 = vmatpush1.bf16.msra.mxu0 %v3326
        %3392 = vmatprep.subr.bf16.mxu0 0
        %3393 = vmatpush1.bf16.msra.mxu0 %v3327
        %3394 = vmatprep.subr.bf16.mxu0 0
        %3395 = vmatpush1.bf16.msra.mxu0 %v3328
        %3396 = vmatprep.subr.bf16.mxu0 0
        %3397 = vmatpush1.bf16.msra.mxu0 %v3329
        %3398 = vmatprep.subr.bf16.mxu0 0
        %3399 = vmatpush1.bf16.msra.mxu0 %v3330
        %3400 = vmatprep.subr.bf16.mxu0 0
        %3401 = vmatpush1.bf16.msra.mxu0 %v3331
        %3402 = vmatprep.subr.bf16.mxu0 0
        %3403 = vmatpush1.bf16.msra.mxu0 %v3332
        %3404 = vmatprep.subr.bf16.mxu0 0
        %3405 = vmatpush1.bf16.msra.mxu0 %v3333
        %3406 = vmatprep.subr.bf16.mxu0 0
        %3407 = vmatpush1.bf16.msra.mxu0 %v3334
        %3408 = vmatprep.subr.bf16.mxu0 0
        %3409 = vmatpush1.bf16.msra.mxu0 %v3335
        %3410 = vmatprep.subr.bf16.mxu0 0
        %3411 = vmatpush1.bf16.msra.mxu0 %v3336
        %3412 = vmatprep.subr.bf16.mxu0 0
        %3413 = vmatpush1.bf16.msra.mxu0 %v3337
        %3414 = vmatprep.subr.bf16.mxu0 0
        %3415 = vmatpush1.bf16.msra.mxu0 %v3338
        %3416 = vmatprep.subr.bf16.mxu0 0
        %3417 = vmatpush1.bf16.msra.mxu0 %v3339
        %3418 = vmatprep.subr.bf16.mxu0 0
        %3419 = vmatpush1.bf16.msra.mxu0 %v3340
        %3420 = vmatprep.subr.bf16.mxu0 0
        %3421 = vmatpush1.bf16.msra.mxu0 %v3341
        %3422 = vmatprep.mubr.bf16.mxu0 %v3124
        %3423 = vmatmul.mubr.bf16.gmra.mrb[0].mxu0 %v3123
        %v3424 = vpop.f32.mrb[0].mxu0
        %v3425 = vadd.f32 %v3196, %v3424
        %v3426 = vpop.f32.mrb[0].mxu0
        %v3427 = vpop.f32.mrb[0].mxu0
        %v3428 = vadd.f32 %v3196, %v3427
        %v3429 = vpop.f32.mrb[0].mxu0
        %3430 = vdwg.mxu0
        %3431 = vmatprep.subr.bf16.mxu0 0
        %3432 = vmatpush1.bf16.msra.mxu0 %v3342
        %3433 = vmatprep.subr.bf16.mxu0 0
        %3434 = vmatpush1.bf16.msra.mxu0 %v3343
        %3435 = vmatprep.subr.bf16.mxu0 0
        %3436 = vmatpush1.bf16.msra.mxu0 %v3344
        %3437 = vmatprep.subr.bf16.mxu0 0
        %3438 = vmatpush1.bf16.msra.mxu0 %v3345
        %3439 = vmatprep.subr.bf16.mxu0 0
        %3440 = vmatpush1.bf16.msra.mxu0 %v3346
        %3441 = vmatprep.subr.bf16.mxu0 0
        %3442 = vmatpush1.bf16.msra.mxu0 %v3347
        %3443 = vmatprep.subr.bf16.mxu0 0
        %3444 = vmatpush1.bf16.msra.mxu0 %v3348
        %3445 = vmatprep.subr.bf16.mxu0 0
        %3446 = vmatpush1.bf16.msra.mxu0 %v3349
        %3447 = vmatprep.subr.bf16.mxu0 0
        %3448 = vmatpush1.bf16.msra.mxu0 %v3350
        %3449 = vmatprep.subr.bf16.mxu0 0
        %3450 = vmatpush1.bf16.msra.mxu0 %v3351
        %3451 = vmatprep.subr.bf16.mxu0 0
        %3452 = vmatpush1.bf16.msra.mxu0 %v3352
        %3453 = vmatprep.subr.bf16.mxu0 0
        %3454 = vmatpush1.bf16.msra.mxu0 %v3353
        %3455 = vmatprep.subr.bf16.mxu0 0
        %3456 = vmatpush1.bf16.msra.mxu0 %v3354
        %3457 = vmatprep.subr.bf16.mxu0 0
        %3458 = vmatpush1.bf16.msra.mxu0 %v3355
        %3459 = vmatprep.subr.bf16.mxu0 0
        %3460 = vmatpush1.bf16.msra.mxu0 %v3356
        %3461 = vmatprep.subr.bf16.mxu0 0
        %3462 = vmatpush1.bf16.msra.mxu0 %v3357
        %3463 = vmatprep.mubr.bf16.mxu0 %v3126
        %3464 = vmatmul.mubr.bf16.gmra.mrb[0].mxu0 %v3125
        %v3465 = vpop.f32.mrb[0].mxu0
        %v3466 = vadd.f32 %v3425, %v3465
        %v3467 = vpop.f32.mrb[0].mxu0
        %v3468 = vpop.f32.mrb[0].mxu0
        %v3469 = vadd.f32 %v3428, %v3468
        %v3470 = vpop.f32.mrb[0].mxu0
        %3471 = vdwg.mxu0
        %3472 = vst [vmem:[%s846] sm:$0xff] %v3466
        %3473 = vst [vmem:[%s846 + $0x8] sm:$0xff] %v3469
        %p3474 = scmp.lt.s32.totalorder %s38, 1
        %s3475 = scalar_select %p3474, %s38, 1
        %s3476 = smul.addr %s3475, 2
        %s3477 = smul.addr %s3476, 8
        %s3478 = scalar_lea.vmem %s14, %s3477
        // Predicated region
        $region113: #{a2c_forward.1} parent=75 // pred_check
          %p3479 = pneg %p415
        $region114: #{a2c_forward.1} parent=75 // pred_check_branch
          %3481 = sbr.rel (%p3479) target = $region116
        $region115: #{a2c_forward.1} parent=75 // pred_region
          _
        $region116: #{a2c_forward.1} parent=75 // pred_fallthru
          _
      $region76: #{a2c_forward.1} parent=5 // pred_fallthru
        _
      %p3482 = scmp.le.s32.totalorder 2, %s33
      // Predicated region
      $region117: #{a2c_forward.1} parent=5 // pred_check
        %p3483 = pneg %p3482
      $region118: #{a2c_forward.1} parent=5 // pred_check_branch
        %3485 = sbr.rel (%p3483) target = $region120
      $region119: #{a2c_forward.1} parent=5 // pred_region
        %s3486 = ssub.s32 %s33, 2
        // Predicated region
        $region121: #{a2c_forward.1} parent=119 // pred_check
          %p3487 = pneg %p421
        $region122: #{a2c_forward.1} parent=119 // pred_check_branch
          %3489 = sbr.rel (%p3487) target = $region124
        $region123: #{a2c_forward.1} parent=119 // pred_region
          %p3490 = scmp.lt.s32.totalorder %s39, 1
          %s3491 = scalar_select %p3490, %s39, 1
          %s3492 = smul.addr %s3491, 2
          %s3493 = smul.addr %s3492, 8
          %s3494 = scalar_lea.vmem %s14, %s3493
        $region124: #{a2c_forward.1} parent=119 // pred_fallthru
          _
      $region120: #{a2c_forward.1} parent=5 // pred_fallthru
        _
    $region6: #{a2c_forward.1} parent=1 // loop_footer
      %s37 = sadd.s32 1, %s33
    $region7: #{a2c_forward.1} parent=1 // loop_footer_branch
      %32 = sbr.rel target = $region3
    $region8: #{a2c_forward.1} parent=1 // loop_exit
      _
    %3495 = vsyncpa [#allocation3], 1
    %s3496 = scalar_lea.sflag [#allocation3], 1
    %3497 = vsyncpa %s3496, 1
    %3498 = vsyncpa [#allocation5], 1
    %s3499 = scalar_lea.sflag [#allocation5], 1
    %3500 = vsyncpa %s3499, 1
    %3501 = vsyncpa [#allocation8], 1
    %s3502 = scalar_lea.sflag [#allocation8], 1
    %3503 = vsyncpa %s3502, 1
    %3504 = vsyncpa [#allocation11], 1
    %s3505 = scalar_lea.sflag [#allocation11], 1
    %3506 = vsyncpa %s3505, 1
    %3507 = vsyncpa [#allocation14], 1
    %s3508 = scalar_lea.sflag [#allocation14], 1
    %3509 = vsyncpa %s3508, 1

</llo_original>
